<compile_context>
chip_gen: v6e
topology: v6e:2x2x1
jax: 0.10.0
libtpu: 0.0.40
codegen_flags: <defaults>
</compile_context>

<pallas_src>
import functools
import math

import jax
import jax.numpy as jnp
import numpy as np
from jax.experimental import pallas as pl
from jax.experimental.pallas import tpu as pltpu


# ------------------------------ fused kernel --------------------------------

def _decoder_layer_kernel(
    nhead, cdt, approx_recip,
    # per-step activation tiles (batch-major): (Nb, L, E) / (Nb, S, E)
    tgt_ref, qpos_ref, mem_ref, pos_ref,
    # self-attention weights (q columns pre-scaled by 1/sqrt(Dh))
    sa_win_ref, sa_bin_ref, sa_wout_ref, sa_bout_ref,
    # cross-attention weights
    ca_win_ref, ca_bin_ref, ca_wout_ref, ca_bout_ref,
    # feed-forward weights
    w1_ref, b1_ref, w2_ref, b2_ref,
    # layer-norm params, (1, E) each
    g1_ref, be1_ref, g2_ref, be2_ref, g3_ref, be3_ref,
    # output (Nb, L, E)
    o_ref,
    # scratch: (Nb*L, E) f32 head-merge accumulator
    merged_ref,
):
    Nb, L, E = tgt_ref.shape
    S = mem_ref.shape[1]
    H = nhead
    Dh = E // H
    E2 = 2 * E

    # Flatten (Nb, T, E) -> (Nb*T, E). Layout preserving: the wrapper only
    # picks Nb > 1 when L and S are multiples of 8 (sublane tile).
    tgt = tgt_ref[...].reshape(Nb * L, E)
    qpos = qpos_ref[...].reshape(Nb * L, E)
    mem = mem_ref[...].reshape(Nb * S, E)
    pos = pos_ref[...].reshape(Nb * S, E)

    def proj(x, w, b):
        # MXU operands in `cdt` (bf16 in production mode), f32 accumulation;
        # bias add and all element-wise math stay f32.
        return jnp.dot(x.astype(cdt), w.astype(cdt),
                       preferred_element_type=jnp.float32) + b

    def layer_norm(x, g_ref, b_ref):
        mean = jnp.mean(x, axis=-1, keepdims=True)
        var = jnp.mean(jnp.square(x - mean), axis=-1, keepdims=True)
        return (x - mean) * jax.lax.rsqrt(var + 1e-5) * g_ref[...] + b_ref[...]

    def split_heads(x_flat, T):
        # (Nb*T, E) -> (Nb*H, T, Dh), batch index = b*H + h.
        # Mosaic does not lower the (0,2,1,3) transpose, so the split uses
        # static lane slices stacked along a new leading dim; everything
        # downstream is head-batched compute.
        x3 = x_flat.reshape(Nb, T, E)
        heads = [x3[:, :, h * Dh:(h + 1) * Dh] for h in range(H)]
        return jnp.stack(heads, axis=1).reshape(Nb * H, T, Dh)

    def attention(q_flat, k_flat, v_flat, w_out, b_out, Tk):
        # q is already scaled: 1/sqrt(Dh) folded into Wq/bq by the wrapper.
        qh = split_heads(q_flat, L).astype(cdt)      # (B, L, Dh)
        kh = split_heads(k_flat, Tk).astype(cdt)     # (B, Tk, Dh)
        vh = split_heads(v_flat, Tk).astype(cdt)     # (B, Tk, Dh)
        # One batched QK^T / softmax / PV over all (batch, head) pairs.
        s = jnp.einsum("bqd,bkd->bqk", qh, kh,
                       preferred_element_type=jnp.float32)        # (B, L, Tk)
        s = s - jnp.max(s, axis=-1, keepdims=True)
        p = jnp.exp(s)
        p = p * pl.reciprocal(jnp.sum(p, axis=-1, keepdims=True),
                              approx=approx_recip)
        o = jnp.einsum("bqk,bkd->bqd", p.astype(cdt), vh,
                       preferred_element_type=jnp.float32)        # (B, L, Dh)
        # Head merge: place each (L, Dh) head at its static lane offset in the
        # VMEM accumulator, then ONE E-deep (Nb*L, E) @ (E, E) out-projection.
        for b in range(Nb):
            for h in range(H):
                merged_ref[b * L:(b + 1) * L, h * Dh:(h + 1) * Dh] = o[b * H + h]
        return jnp.dot(merged_ref[...].astype(cdt), w_out.astype(cdt),
                       preferred_element_type=jnp.float32) + b_out

    # ------------------------------ self-attention ---------------------------
    sa_w = sa_win_ref[...]                     # (E, 3E)
    sa_b = sa_bin_ref[...]                     # (1, 3E)
    qk_in = tgt + qpos                         # q and k share this source
    qk = proj(qk_in, sa_w[:, :E2], sa_b[:, :E2])           # (Nb*L, 2E)
    v = proj(tgt, sa_w[:, E2:], sa_b[:, E2:])               # (Nb*L, E)
    sa_out = attention(qk[:, :E], qk[:, E:], v,
                       sa_wout_ref[...], sa_bout_ref[...], L)
    x = layer_norm(tgt + sa_out, g1_ref, be1_ref)

    # ------------------------------ cross-attention --------------------------
    ca_w = ca_win_ref[...]
    ca_b = ca_bin_ref[...]
    q = proj(x + qpos, ca_w[:, :E], ca_b[:, :E])
    k = proj(mem + pos, ca_w[:, E:E2], ca_b[:, E:E2])
    v = proj(mem, ca_w[:, E2:], ca_b[:, E2:])
    ca_out = attention(q, k, v, ca_wout_ref[...], ca_bout_ref[...], S)
    x = layer_norm(x + ca_out, g2_ref, be2_ref)

    # ------------------------------ feed-forward ------------------------------
    h1 = jnp.maximum(proj(x, w1_ref[...], b1_ref[...]), 0.0)   # relu
    ff = proj(h1, w2_ref[...], b2_ref[...])
    x = layer_norm(x + ff, g3_ref, be3_ref)

    o_ref[...] = x.reshape(Nb, L, E)


# ------------------------------ wrappers --------------------------------------

def _pick_nb(n, l, s):
    """Largest batch-block <= 8 that divides N, keeps >= 2 grid steps (second
    TensorCore on v7x stays busy) and keeps the in-kernel flatten
    layout-preserving (L, S multiples of 8)."""
    if l % 8 or s % 8:
        return 1
    best = 1
    for cand in range(2, min(n, 8) + 1):
        if n % cand == 0 and n // cand >= 2:
            best = cand
    return best


def transformer_decoder_layer_batch_major(tgt, memory, pos, query_pos, params,
                                          nhead, nb=None, precise=True):
    """forward_post, all masks None, dropout in eval mode (identity).

    Batch-major layout: tgt/query_pos (N, L, E), memory/pos (N, S, E).
    precise=True : f32 MXU operands + exact softmax reciprocal (reference).
    precise=False: bf16 MXU operands (f32 accumulation, f32 element-wise) +
                   EUP approx reciprocal -- production path for v6e/v7x.
    """
    N, L, E = tgt.shape
    S = memory.shape[1]
    assert E % nhead == 0
    if nb is None:
        nb = _pick_nb(N, L, S)
    assert N % nb == 0
    if nb > 1:
        assert L % 8 == 0 and S % 8 == 0

    cdt = jnp.float32 if precise else jnp.bfloat16
    scale = 1.0 / math.sqrt(E // nhead)

    def fold_scale(w_in, b_in):
        # Fold the 1/sqrt(Dh) query scale into Wq/bq (zero runtime cost).
        w_in = jnp.concatenate([w_in[:, :E] * scale, w_in[:, E:]], axis=1)
        b_in = jnp.concatenate([b_in[:E] * scale, b_in[E:]], axis=0)
        return w_in, b_in

    sa, ca = params["self_attn"], params["cross_attn"]
    sa_w_in, sa_b_in = fold_scale(sa["w_in"], sa["b_in"])
    ca_w_in, ca_b_in = fold_scale(ca["w_in"], ca["b_in"])

    wdt = cdt                              # weight matrices travel in MXU dtype
    row = lambda v: v.reshape(1, -1).astype(jnp.float32)

    act_inputs = [tgt, query_pos, memory, pos]
    act_specs = [
        pl.BlockSpec((nb, L, E), lambda g: (g, 0, 0)),
        pl.BlockSpec((nb, L, E), lambda g: (g, 0, 0)),
        pl.BlockSpec((nb, S, E), lambda g: (g, 0, 0)),
        pl.BlockSpec((nb, S, E), lambda g: (g, 0, 0)),
    ]

    weight_inputs = [
        sa_w_in.astype(wdt), row(sa_b_in), sa["w_out"].astype(wdt), row(sa["b_out"]),
        ca_w_in.astype(wdt), row(ca_b_in), ca["w_out"].astype(wdt), row(ca["b_out"]),
        params["w1"].astype(wdt), row(params["b1"]),
        params["w2"].astype(wdt), row(params["b2"]),
        row(params["norm1_g"]), row(params["norm1_b"]),
        row(params["norm2_g"]), row(params["norm2_b"]),
        row(params["norm3_g"]), row(params["norm3_b"]),
    ]
    weight_specs = [pl.BlockSpec(tuple(w.shape), lambda g: (0, 0))
                    for w in weight_inputs]

    kernel = functools.partial(_decoder_layer_kernel, nhead, cdt, not precise)

    out = pl.pallas_call(
        kernel,
        out_shape=jax.ShapeDtypeStruct((N, L, E), jnp.float32),
        grid=(N // nb,),
        in_specs=act_specs + weight_specs,
        out_specs=pl.BlockSpec((nb, L, E), lambda g: (g, 0, 0)),
        scratch_shapes=[pltpu.VMEM((nb * L, E), jnp.float32)],
        compiler_params=pltpu.CompilerParams(
            dimension_semantics=("parallel",),
            vmem_limit_bytes=32 * 1024 * 1024,
            # Let XLA fuse producers (e.g. the seq->batch-major transposes of
            # the 4 activation inputs) into this call's operand DMAs instead
            # of a standalone HBM round-trip.
            allow_input_fusion=[True] * len(act_inputs) + [False] * len(weight_inputs),
        ),
    )(*act_inputs, *weight_inputs)
    return out


def transformer_decoder_layer(tgt, memory, pos, query_pos, params, nhead,
                              nb=None, precise=True):
    """Module-native layout: tgt/query_pos (L, N, E), memory/pos (S, N, E)."""
    out = transformer_decoder_layer_batch_major(
        jnp.transpose(tgt, (1, 0, 2)),
        jnp.transpose(memory, (1, 0, 2)),
        jnp.transpose(pos, (1, 0, 2)),
        jnp.transpose(query_pos, (1, 0, 2)),
        params, nhead, nb=nb, precise=precise)
    return jnp.transpose(out, (1, 0, 2))


# ------------------------------ pure-JAX reference ---------------------------

def _ref_mha(query, key, value, p, nhead):
    Lq, N, E = query.shape
    Lk = key.shape[0]
    Dh = E // nhead
    scale = 1.0 / math.sqrt(Dh)
    w_in, b_in = p["w_in"], p["b_in"]
    q = query.reshape(Lq * N, E) @ w_in[:, :E] + b_in[:E]
    k = key.reshape(Lk * N, E) @ w_in[:, E:2 * E] + b_in[E:2 * E]
    v = value.reshape(Lk * N, E) @ w_in[:, 2 * E:] + b_in[2 * E:]
    q = (q * scale).reshape(Lq, N * nhead, Dh).transpose(1, 0, 2)
    k = k.reshape(Lk, N * nhead, Dh).transpose(1, 0, 2)
    v = v.reshape(Lk, N * nhead, Dh).transpose(1, 0, 2)
    s = jnp.einsum("bqd,bkd->bqk", q, k)
    a = jax.nn.softmax(s, axis=-1)
    o = jnp.einsum("bqk,bkd->bqd", a, v)
    o = o.transpose(1, 0, 2).reshape(Lq * N, E) @ p["w_out"] + p["b_out"]
    return o.reshape(Lq, N, E)


def _ref_ln(x, g, b):
    m = jnp.mean(x, axis=-1, keepdims=True)
    v = jnp.mean((x - m) ** 2, axis=-1, keepdims=True)
    return (x - m) * jax.lax.rsqrt(v + 1e-5) * g + b


def _ref_layer(tgt, memory, pos, query_pos, params, nhead):
    q = tgt + query_pos
    sa = _ref_mha(q, q, tgt, params["self_attn"], nhead)
    tgt = _ref_ln(tgt + sa, params["norm1_g"], params["norm1_b"])
    ca = _ref_mha(tgt + query_pos, memory + pos, memory,
                  params["cross_attn"], nhead)
    tgt = _ref_ln(tgt + ca, params["norm2_g"], params["norm2_b"])
    ff = jnp.maximum(tgt @ params["w1"] + params["b1"], 0.0) @ params["w2"] + params["b2"]
    tgt = _ref_ln(tgt + ff, params["norm3_g"], params["norm3_b"])
    return tgt


# ---------------------------------- main --------------------------------------

def make_params(key, d_model, nhead, dim_feedforward):
    ks = jax.random.split(key, 12)
    scl = 0.05
    w = lambda k, shape: jax.random.normal(k, shape, jnp.float32) * scl

    def attn_params(k1, k2, k3, k4):
        return {
            "w_in": w(k1, (d_model, 3 * d_model)),   # concatenated Wq|Wk|Wv
            "b_in": w(k2, (3 * d_model,)),
            "w_out": w(k3, (d_model, d_model)),
            "b_out": w(k4, (d_model,)),
        }

    return {
        "self_attn": attn_params(ks[0], ks[1], ks[2], ks[3]),
        "cross_attn": attn_params(ks[4], ks[5], ks[6], ks[7]),
        "w1": w(ks[8], (d_model, dim_feedforward)),
        "b1": w(ks[9], (dim_feedforward,)),
        "w2": w(ks[10], (dim_feedforward, d_model)),
        "b2": w(ks[11], (d_model,)),
        "norm1_g": jnp.ones((d_model,), jnp.float32),
        "norm1_b": jnp.full((d_model,), 0.01, jnp.float32),
        "norm2_g": jnp.ones((d_model,), jnp.float32),
        "norm2_b": jnp.full((d_model,), -0.02, jnp.float32),
        "norm3_g": jnp.ones((d_model,), jnp.float32),
        "norm3_b": jnp.full((d_model,), 0.03, jnp.float32),
    }


if __name__ == "__main__":
    d_model, nhead, dim_feedforward = 32, 4, 64
    L, S, N = 8, 16, 4     # tgt seq, memory seq, batch  ->  Nb=2, grid=(2,)

    root = jax.random.PRNGKey(0)
    k_tgt, k_mem, k_pos, k_qpos, k_par = jax.random.split(root, 5)

    tgt = jax.random.normal(k_tgt, (L, N, d_model), jnp.float32)
    memory = jax.random.normal(k_mem, (S, N, d_model), jnp.float32)
    pos = jax.random.normal(k_pos, (S, N, d_model), jnp.float32)
    query_pos = jax.random.normal(k_qpos, (L, N, d_model), jnp.float32)

    params = make_params(k_par, d_model, nhead, dim_feedforward)

    # Precise (f32 MXU, exact reciprocal) path: tight reference check.
    fwd = jax.jit(functools.partial(transformer_decoder_layer,
                                    nhead=nhead, precise=True))
    out = jax.block_until_ready(fwd(tgt, memory, pos, query_pos, params))

    ref = _ref_layer(tgt, memory, pos, query_pos, params, nhead)
    assert out.shape == (L, N, d_model)
    np.testing.assert_allclose(np.asarray(out), np.asarray(ref),
                               rtol=1e-4, atol=1e-4)

    # Production path (bf16 MXU operands + approx reciprocal, as recommended
    # for v6e/v7x): exercise it and sanity-check against the f32 reference.
    fwd_fast = jax.jit(functools.partial(transformer_decoder_layer,
                                         nhead=nhead, precise=False))
    out_fast = jax.block_until_ready(fwd_fast(tgt, memory, pos, query_pos, params))
    assert np.all(np.isfinite(np.asarray(out_fast)))
    np.testing.assert_allclose(np.asarray(out_fast), np.asarray(ref),
                               rtol=1e-1, atol=1e-1)

    print("KERNEL_OK")
</pallas_src>

<mosaic_0001>
module attributes {stable_mosaic.version = 11 : i64} {
  func.func @_decoder_layer_kernel(%arg0: i32, %arg1: memref<2x8x32xf32, #tpu.memory_space<vmem>>, %arg2: memref<2x8x32xf32, #tpu.memory_space<vmem>>, %arg3: memref<2x16x32xf32, #tpu.memory_space<vmem>>, %arg4: memref<2x16x32xf32, #tpu.memory_space<vmem>>, %arg5: memref<32x96xf32, #tpu.memory_space<vmem>>, %arg6: memref<1x96xf32, #tpu.memory_space<vmem>>, %arg7: memref<32x32xf32, #tpu.memory_space<vmem>>, %arg8: memref<1x32xf32, #tpu.memory_space<vmem>>, %arg9: memref<32x96xf32, #tpu.memory_space<vmem>>, %arg10: memref<1x96xf32, #tpu.memory_space<vmem>>, %arg11: memref<32x32xf32, #tpu.memory_space<vmem>>, %arg12: memref<1x32xf32, #tpu.memory_space<vmem>>, %arg13: memref<32x64xf32, #tpu.memory_space<vmem>>, %arg14: memref<1x64xf32, #tpu.memory_space<vmem>>, %arg15: memref<64x32xf32, #tpu.memory_space<vmem>>, %arg16: memref<1x32xf32, #tpu.memory_space<vmem>>, %arg17: memref<1x32xf32, #tpu.memory_space<vmem>>, %arg18: memref<1x32xf32, #tpu.memory_space<vmem>>, %arg19: memref<1x32xf32, #tpu.memory_space<vmem>>, %arg20: memref<1x32xf32, #tpu.memory_space<vmem>>, %arg21: memref<1x32xf32, #tpu.memory_space<vmem>>, %arg22: memref<1x32xf32, #tpu.memory_space<vmem>>, %arg23: memref<2x8x32xf32, #tpu.memory_space<vmem>>, %arg24: memref<16x32xf32, #tpu.memory_space<vmem>>) attributes {dimension_semantics = [#tpu.dimension_semantics<parallel>], iteration_bounds = array<i64: 2>, scalar_prefetch = 0 : i64, scratch_operands = 1 : i64, tpu.core_type = #tpu.core_type<tc>, window_params = [{transform_indices = @transform_0, window_bounds = array<i64: 2, 8, 32>}, {transform_indices = @transform_1, window_bounds = array<i64: 2, 8, 32>}, {transform_indices = @transform_2, window_bounds = array<i64: 2, 16, 32>}, {transform_indices = @transform_3, window_bounds = array<i64: 2, 16, 32>}, {pipeline_mode = #tpu.pipeline_mode<synchronous>, transform_indices = @transform_4, window_bounds = array<i64: 32, 96>}, {pipeline_mode = #tpu.pipeline_mode<synchronous>, transform_indices = @transform_5, window_bounds = array<i64: 1, 96>}, {pipeline_mode = #tpu.pipeline_mode<synchronous>, transform_indices = @transform_6, window_bounds = array<i64: 32, 32>}, {pipeline_mode = #tpu.pipeline_mode<synchronous>, transform_indices = @transform_7, window_bounds = array<i64: 1, 32>}, {pipeline_mode = #tpu.pipeline_mode<synchronous>, transform_indices = @transform_8, window_bounds = array<i64: 32, 96>}, {pipeline_mode = #tpu.pipeline_mode<synchronous>, transform_indices = @transform_9, window_bounds = array<i64: 1, 96>}, {pipeline_mode = #tpu.pipeline_mode<synchronous>, transform_indices = @transform_10, window_bounds = array<i64: 32, 32>}, {pipeline_mode = #tpu.pipeline_mode<synchronous>, transform_indices = @transform_11, window_bounds = array<i64: 1, 32>}, {pipeline_mode = #tpu.pipeline_mode<synchronous>, transform_indices = @transform_12, window_bounds = array<i64: 32, 64>}, {pipeline_mode = #tpu.pipeline_mode<synchronous>, transform_indices = @transform_13, window_bounds = array<i64: 1, 64>}, {pipeline_mode = #tpu.pipeline_mode<synchronous>, transform_indices = @transform_14, window_bounds = array<i64: 64, 32>}, {pipeline_mode = #tpu.pipeline_mode<synchronous>, transform_indices = @transform_15, window_bounds = array<i64: 1, 32>}, {pipeline_mode = #tpu.pipeline_mode<synchronous>, transform_indices = @transform_16, window_bounds = array<i64: 1, 32>}, {pipeline_mode = #tpu.pipeline_mode<synchronous>, transform_indices = @transform_17, window_bounds = array<i64: 1, 32>}, {pipeline_mode = #tpu.pipeline_mode<synchronous>, transform_indices = @transform_18, window_bounds = array<i64: 1, 32>}, {pipeline_mode = #tpu.pipeline_mode<synchronous>, transform_indices = @transform_19, window_bounds = array<i64: 1, 32>}, {pipeline_mode = #tpu.pipeline_mode<synchronous>, transform_indices = @transform_20, window_bounds = array<i64: 1, 32>}, {pipeline_mode = #tpu.pipeline_mode<synchronous>, transform_indices = @transform_21, window_bounds = array<i64: 1, 32>}, {transform_indices = @transform_22, window_bounds = array<i64: 2, 8, 32>}]} {
    %c0 = arith.constant 0 : index
    %c0_0 = arith.constant 0 : index
    %c0_1 = arith.constant 0 : index
    %0 = vector.load %arg1[%c0, %c0_0, %c0_1] : memref<2x8x32xf32, #tpu.memory_space<vmem>>, vector<2x8x32xf32>
    %1 = vector.shape_cast %0 : vector<2x8x32xf32> to vector<16x32xf32>
    %c0_2 = arith.constant 0 : index
    %c0_3 = arith.constant 0 : index
    %c0_4 = arith.constant 0 : index
    %2 = vector.load %arg2[%c0_2, %c0_3, %c0_4] : memref<2x8x32xf32, #tpu.memory_space<vmem>>, vector<2x8x32xf32>
    %3 = vector.shape_cast %2 : vector<2x8x32xf32> to vector<16x32xf32>
    %c0_5 = arith.constant 0 : index
    %c0_6 = arith.constant 0 : index
    %c0_7 = arith.constant 0 : index
    %4 = vector.load %arg3[%c0_5, %c0_6, %c0_7] : memref<2x16x32xf32, #tpu.memory_space<vmem>>, vector<2x16x32xf32>
    %5 = vector.shape_cast %4 : vector<2x16x32xf32> to vector<32x32xf32>
    %c0_8 = arith.constant 0 : index
    %c0_9 = arith.constant 0 : index
    %c0_10 = arith.constant 0 : index
    %6 = vector.load %arg4[%c0_8, %c0_9, %c0_10] : memref<2x16x32xf32, #tpu.memory_space<vmem>>, vector<2x16x32xf32>
    %7 = vector.shape_cast %6 : vector<2x16x32xf32> to vector<32x32xf32>
    %c0_11 = arith.constant 0 : index
    %c0_12 = arith.constant 0 : index
    %8 = vector.load %arg5[%c0_11, %c0_12] : memref<32x96xf32, #tpu.memory_space<vmem>>, vector<32x96xf32>
    %c0_13 = arith.constant 0 : index
    %c0_14 = arith.constant 0 : index
    %9 = vector.load %arg6[%c0_13, %c0_14] : memref<1x96xf32, #tpu.memory_space<vmem>>, vector<1x96xf32>
    %10 = arith.addf %1, %3 : vector<16x32xf32>
    %11 = vector.extract_strided_slice %8 {offsets = [0, 0], sizes = [32, 64], strides = [1, 1]} : vector<32x96xf32> to vector<32x64xf32>
    %12 = vector.extract_strided_slice %9 {offsets = [0, 0], sizes = [1, 64], strides = [1, 1]} : vector<1x96xf32> to vector<1x64xf32>
    %cst = arith.constant dense<0.000000e+00> : vector<16x64xf32>
    %13 = tpu.matmul %10, %11, %cst {dimension_numbers = #tpu.dot_dimension_numbers<[1], [0], [0], [1], [0, 0, 1, 1], [], []>} : vector<16x32xf32>, vector<32x64xf32>, vector<16x64xf32> -> vector<16x64xf32>
    %14 = vector.broadcast %12 : vector<1x64xf32> to vector<16x64xf32>
    %15 = arith.addf %13, %14 : vector<16x64xf32>
    %16 = vector.extract_strided_slice %8 {offsets = [0, 64], sizes = [32, 32], strides = [1, 1]} : vector<32x96xf32> to vector<32x32xf32>
    %17 = vector.extract_strided_slice %9 {offsets = [0, 64], sizes = [1, 32], strides = [1, 1]} : vector<1x96xf32> to vector<1x32xf32>
    %cst_15 = arith.constant dense<0.000000e+00> : vector<16x32xf32>
    %18 = tpu.matmul %1, %16, %cst_15 {dimension_numbers = #tpu.dot_dimension_numbers<[1], [0], [0], [1], [0, 0, 1, 1], [], []>} : vector<16x32xf32>, vector<32x32xf32>, vector<16x32xf32> -> vector<16x32xf32>
    %19 = vector.broadcast %17 : vector<1x32xf32> to vector<16x32xf32>
    %20 = arith.addf %18, %19 : vector<16x32xf32>
    %21 = vector.extract_strided_slice %15 {offsets = [0, 0], sizes = [16, 32], strides = [1, 1]} : vector<16x64xf32> to vector<16x32xf32>
    %22 = vector.extract_strided_slice %15 {offsets = [0, 32], sizes = [16, 32], strides = [1, 1]} : vector<16x64xf32> to vector<16x32xf32>
    %c0_16 = arith.constant 0 : index
    %c0_17 = arith.constant 0 : index
    %23 = vector.load %arg7[%c0_16, %c0_17] : memref<32x32xf32, #tpu.memory_space<vmem>>, vector<32x32xf32>
    %c0_18 = arith.constant 0 : index
    %c0_19 = arith.constant 0 : index
    %24 = vector.load %arg8[%c0_18, %c0_19] : memref<1x32xf32, #tpu.memory_space<vmem>>, vector<1x32xf32>
    %25 = vector.shape_cast %21 : vector<16x32xf32> to vector<2x8x32xf32>
    %26 = vector.extract_strided_slice %25 {offsets = [0, 0, 0], sizes = [2, 8, 8], strides = [1, 1, 1]} : vector<2x8x32xf32> to vector<2x8x8xf32>
    %27 = vector.extract_strided_slice %25 {offsets = [0, 0, 8], sizes = [2, 8, 8], strides = [1, 1, 1]} : vector<2x8x32xf32> to vector<2x8x8xf32>
    %28 = vector.extract_strided_slice %25 {offsets = [0, 0, 16], sizes = [2, 8, 8], strides = [1, 1, 1]} : vector<2x8x32xf32> to vector<2x8x8xf32>
    %29 = vector.extract_strided_slice %25 {offsets = [0, 0, 24], sizes = [2, 8, 8], strides = [1, 1, 1]} : vector<2x8x32xf32> to vector<2x8x8xf32>
    %30 = vector.shape_cast %26 : vector<2x8x8xf32> to vector<2x1x8x8xf32>
    %31 = vector.shape_cast %27 : vector<2x8x8xf32> to vector<2x1x8x8xf32>
    %32 = vector.shape_cast %28 : vector<2x8x8xf32> to vector<2x1x8x8xf32>
    %33 = vector.shape_cast %29 : vector<2x8x8xf32> to vector<2x1x8x8xf32>
    %34 = tpu.concatenate %30, %31, %32, %33 in 1 : vector<2x1x8x8xf32>, vector<2x1x8x8xf32>, vector<2x1x8x8xf32>, vector<2x1x8x8xf32> -> vector<2x4x8x8xf32>
    %35 = vector.shape_cast %34 : vector<2x4x8x8xf32> to vector<8x8x8xf32>
    %36 = vector.shape_cast %22 : vector<16x32xf32> to vector<2x8x32xf32>
    %37 = vector.extract_strided_slice %36 {offsets = [0, 0, 0], sizes = [2, 8, 8], strides = [1, 1, 1]} : vector<2x8x32xf32> to vector<2x8x8xf32>
    %38 = vector.extract_strided_slice %36 {offsets = [0, 0, 8], sizes = [2, 8, 8], strides = [1, 1, 1]} : vector<2x8x32xf32> to vector<2x8x8xf32>
    %39 = vector.extract_strided_slice %36 {offsets = [0, 0, 16], sizes = [2, 8, 8], strides = [1, 1, 1]} : vector<2x8x32xf32> to vector<2x8x8xf32>
    %40 = vector.extract_strided_slice %36 {offsets = [0, 0, 24], sizes = [2, 8, 8], strides = [1, 1, 1]} : vector<2x8x32xf32> to vector<2x8x8xf32>
    %41 = vector.shape_cast %37 : vector<2x8x8xf32> to vector<2x1x8x8xf32>
    %42 = vector.shape_cast %38 : vector<2x8x8xf32> to vector<2x1x8x8xf32>
    %43 = vector.shape_cast %39 : vector<2x8x8xf32> to vector<2x1x8x8xf32>
    %44 = vector.shape_cast %40 : vector<2x8x8xf32> to vector<2x1x8x8xf32>
    %45 = tpu.concatenate %41, %42, %43, %44 in 1 : vector<2x1x8x8xf32>, vector<2x1x8x8xf32>, vector<2x1x8x8xf32>, vector<2x1x8x8xf32> -> vector<2x4x8x8xf32>
    %46 = vector.shape_cast %45 : vector<2x4x8x8xf32> to vector<8x8x8xf32>
    %47 = vector.shape_cast %20 : vector<16x32xf32> to vector<2x8x32xf32>
    %48 = vector.extract_strided_slice %47 {offsets = [0, 0, 0], sizes = [2, 8, 8], strides = [1, 1, 1]} : vector<2x8x32xf32> to vector<2x8x8xf32>
    %49 = vector.extract_strided_slice %47 {offsets = [0, 0, 8], sizes = [2, 8, 8], strides = [1, 1, 1]} : vector<2x8x32xf32> to vector<2x8x8xf32>
    %50 = vector.extract_strided_slice %47 {offsets = [0, 0, 16], sizes = [2, 8, 8], strides = [1, 1, 1]} : vector<2x8x32xf32> to vector<2x8x8xf32>
    %51 = vector.extract_strided_slice %47 {offsets = [0, 0, 24], sizes = [2, 8, 8], strides = [1, 1, 1]} : vector<2x8x32xf32> to vector<2x8x8xf32>
    %52 = vector.shape_cast %48 : vector<2x8x8xf32> to vector<2x1x8x8xf32>
    %53 = vector.shape_cast %49 : vector<2x8x8xf32> to vector<2x1x8x8xf32>
    %54 = vector.shape_cast %50 : vector<2x8x8xf32> to vector<2x1x8x8xf32>
    %55 = vector.shape_cast %51 : vector<2x8x8xf32> to vector<2x1x8x8xf32>
    %56 = tpu.concatenate %52, %53, %54, %55 in 1 : vector<2x1x8x8xf32>, vector<2x1x8x8xf32>, vector<2x1x8x8xf32>, vector<2x1x8x8xf32> -> vector<2x4x8x8xf32>
    %57 = vector.shape_cast %56 : vector<2x4x8x8xf32> to vector<8x8x8xf32>
    "tpu.trace_start"() <{level = 10 : i32, message = "bqd,bkd->bqk"}> : () -> ()
    %cst_20 = arith.constant dense<0.000000e+00> : vector<8x8x8xf32>
    %58 = tpu.matmul %35, %46, %cst_20 {dimension_numbers = #tpu.dot_dimension_numbers<[2], [2], [1], [1], [0, 0, 0, 1, 1, 1], [0], [0]>} : vector<8x8x8xf32>, vector<8x8x8xf32>, vector<8x8x8xf32> -> vector<8x8x8xf32>
    "tpu.trace_stop"() : () -> ()
    %cst_21 = arith.constant dense<0xFF800000> : vector<8x8xf32>
    %59 = vector.multi_reduction <maximumf>, %58, %cst_21 [2] : vector<8x8x8xf32> to vector<8x8xf32>
    %60 = vector.shape_cast %59 : vector<8x8xf32> to vector<8x8x1xf32>
    %61 = vector.broadcast %60 : vector<8x8x1xf32> to vector<8x8x8xf32>
    %62 = arith.subf %58, %61 : vector<8x8x8xf32>
    %63 = math.exp %62 : vector<8x8x8xf32>
    %cst_22 = arith.constant dense<0.000000e+00> : vector<8x8xf32>
    %64 = vector.multi_reduction <add>, %63, %cst_22 [2] : vector<8x8x8xf32> to vector<8x8xf32>
    %65 = vector.shape_cast %64 : vector<8x8xf32> to vector<8x8x1xf32>
    %66 = tpu.reciprocal %65 : vector<8x8x1xf32> -> vector<8x8x1xf32>
    %67 = vector.broadcast %66 : vector<8x8x1xf32> to vector<8x8x8xf32>
    %68 = arith.mulf %63, %67 : vector<8x8x8xf32>
    "tpu.trace_start"() <{level = 10 : i32, message = "bqk,bkd->bqd"}> : () -> ()
    %cst_23 = arith.constant dense<0.000000e+00> : vector<8x8x8xf32>
    %69 = tpu.matmul %68, %57, %cst_23 {dimension_numbers = #tpu.dot_dimension_numbers<[2], [1], [1], [2], [0, 0, 0, 1, 1, 2], [0], [0]>} : vector<8x8x8xf32>, vector<8x8x8xf32>, vector<8x8x8xf32> -> vector<8x8x8xf32>
    "tpu.trace_stop"() : () -> ()
    %70 = vector.extract_strided_slice %69 {offsets = [0, 0, 0], sizes = [1, 8, 8], strides = [1, 1, 1]} : vector<8x8x8xf32> to vector<1x8x8xf32>
    %71 = vector.shape_cast %70 : vector<1x8x8xf32> to vector<8x8xf32>
    %c0_24 = arith.constant 0 : index
    %c0_25 = arith.constant 0 : index
    %72 = vector.load %arg24[%c0_24, %c0_25] : memref<16x32xf32, #tpu.memory_space<vmem>>, vector<8x8xf32>
    tpu.vector_store %arg24[%c0_24, %c0_25], %71 {strides = array<i32>} : memref<16x32xf32, #tpu.memory_space<vmem>>, vector<8x8xf32>,
    %73 = vector.extract_strided_slice %69 {offsets = [1, 0, 0], sizes = [1, 8, 8], strides = [1, 1, 1]} : vector<8x8x8xf32> to vector<1x8x8xf32>
    %74 = vector.shape_cast %73 : vector<1x8x8xf32> to vector<8x8xf32>
    %c0_26 = arith.constant 0 : index
    %c8 = arith.constant 8 : index
    %75 = vector.load %arg24[%c0_26, %c8] : memref<16x32xf32, #tpu.memory_space<vmem>>, vector<8x8xf32>
    tpu.vector_store %arg24[%c0_26, %c8], %74 {strides = array<i32>} : memref<16x32xf32, #tpu.memory_space<vmem>>, vector<8x8xf32>,
    %76 = vector.extract_strided_slice %69 {offsets = [2, 0, 0], sizes = [1, 8, 8], strides = [1, 1, 1]} : vector<8x8x8xf32> to vector<1x8x8xf32>
    %77 = vector.shape_cast %76 : vector<1x8x8xf32> to vector<8x8xf32>
    %c0_27 = arith.constant 0 : index
    %c16 = arith.constant 16 : index
    %78 = vector.load %arg24[%c0_27, %c16] : memref<16x32xf32, #tpu.memory_space<vmem>>, vector<8x8xf32>
    tpu.vector_store %arg24[%c0_27, %c16], %77 {strides = array<i32>} : memref<16x32xf32, #tpu.memory_space<vmem>>, vector<8x8xf32>,
    %79 = vector.extract_strided_slice %69 {offsets = [3, 0, 0], sizes = [1, 8, 8], strides = [1, 1, 1]} : vector<8x8x8xf32> to vector<1x8x8xf32>
    %80 = vector.shape_cast %79 : vector<1x8x8xf32> to vector<8x8xf32>
    %c0_28 = arith.constant 0 : index
    %c24 = arith.constant 24 : index
    %81 = vector.load %arg24[%c0_28, %c24] : memref<16x32xf32, #tpu.memory_space<vmem>>, vector<8x8xf32>
    tpu.vector_store %arg24[%c0_28, %c24], %80 {strides = array<i32>} : memref<16x32xf32, #tpu.memory_space<vmem>>, vector<8x8xf32>,
    %82 = vector.extract_strided_slice %69 {offsets = [4, 0, 0], sizes = [1, 8, 8], strides = [1, 1, 1]} : vector<8x8x8xf32> to vector<1x8x8xf32>
    %83 = vector.shape_cast %82 : vector<1x8x8xf32> to vector<8x8xf32>
    %c8_29 = arith.constant 8 : index
    %c0_30 = arith.constant 0 : index
    %84 = vector.load %arg24[%c8_29, %c0_30] : memref<16x32xf32, #tpu.memory_space<vmem>>, vector<8x8xf32>
    tpu.vector_store %arg24[%c8_29, %c0_30], %83 {strides = array<i32>} : memref<16x32xf32, #tpu.memory_space<vmem>>, vector<8x8xf32>,
    %85 = vector.extract_strided_slice %69 {offsets = [5, 0, 0], sizes = [1, 8, 8], strides = [1, 1, 1]} : vector<8x8x8xf32> to vector<1x8x8xf32>
    %86 = vector.shape_cast %85 : vector<1x8x8xf32> to vector<8x8xf32>
    %c8_31 = arith.constant 8 : index
    %c8_32 = arith.constant 8 : index
    %87 = vector.load %arg24[%c8_31, %c8_32] : memref<16x32xf32, #tpu.memory_space<vmem>>, vector<8x8xf32>
    tpu.vector_store %arg24[%c8_31, %c8_32], %86 {strides = array<i32>} : memref<16x32xf32, #tpu.memory_space<vmem>>, vector<8x8xf32>,
    %88 = vector.extract_strided_slice %69 {offsets = [6, 0, 0], sizes = [1, 8, 8], strides = [1, 1, 1]} : vector<8x8x8xf32> to vector<1x8x8xf32>
    %89 = vector.shape_cast %88 : vector<1x8x8xf32> to vector<8x8xf32>
    %c8_33 = arith.constant 8 : index
    %c16_34 = arith.constant 16 : index
    %90 = vector.load %arg24[%c8_33, %c16_34] : memref<16x32xf32, #tpu.memory_space<vmem>>, vector<8x8xf32>
    tpu.vector_store %arg24[%c8_33, %c16_34], %89 {strides = array<i32>} : memref<16x32xf32, #tpu.memory_space<vmem>>, vector<8x8xf32>,
    %91 = vector.extract_strided_slice %69 {offsets = [7, 0, 0], sizes = [1, 8, 8], strides = [1, 1, 1]} : vector<8x8x8xf32> to vector<1x8x8xf32>
    %92 = vector.shape_cast %91 : vector<1x8x8xf32> to vector<8x8xf32>
    %c8_35 = arith.constant 8 : index
    %c24_36 = arith.constant 24 : index
    %93 = vector.load %arg24[%c8_35, %c24_36] : memref<16x32xf32, #tpu.memory_space<vmem>>, vector<8x8xf32>
    tpu.vector_store %arg24[%c8_35, %c24_36], %92 {strides = array<i32>} : memref<16x32xf32, #tpu.memory_space<vmem>>, vector<8x8xf32>,
    %c0_37 = arith.constant 0 : index
    %c0_38 = arith.constant 0 : index
    %94 = vector.load %arg24[%c0_37, %c0_38] : memref<16x32xf32, #tpu.memory_space<vmem>>, vector<16x32xf32>
    %cst_39 = arith.constant dense<0.000000e+00> : vector<16x32xf32>
    %95 = tpu.matmul %94, %23, %cst_39 {dimension_numbers = #tpu.dot_dimension_numbers<[1], [0], [0], [1], [0, 0, 1, 1], [], []>} : vector<16x32xf32>, vector<32x32xf32>, vector<16x32xf32> -> vector<16x32xf32>
    %96 = vector.broadcast %24 : vector<1x32xf32> to vector<16x32xf32>
    %97 = arith.addf %95, %96 : vector<16x32xf32>
    %98 = arith.addf %1, %97 : vector<16x32xf32>
    %cst_40 = arith.constant dense<0.000000e+00> : vector<16xf32>
    %99 = vector.multi_reduction <add>, %98, %cst_40 [1] : vector<16x32xf32> to vector<16xf32>
    %100 = vector.shape_cast %99 : vector<16xf32> to vector<16x1xf32>
    %cst_41 = arith.constant 3.200000e+01 : f32
    %101 = vector.broadcast %cst_41 : f32 to vector<16x1xf32>
    %102 = arith.divf %100, %101 : vector<16x1xf32>
    %103 = vector.broadcast %102 : vector<16x1xf32> to vector<16x32xf32>
    %104 = arith.subf %98, %103 : vector<16x32xf32>
    %105 = arith.mulf %104, %104 : vector<16x32xf32>
    %cst_42 = arith.constant dense<0.000000e+00> : vector<16xf32>
    %106 = vector.multi_reduction <add>, %105, %cst_42 [1] : vector<16x32xf32> to vector<16xf32>
    %107 = vector.shape_cast %106 : vector<16xf32> to vector<16x1xf32>
    %cst_43 = arith.constant 3.200000e+01 : f32
    %108 = vector.broadcast %cst_43 : f32 to vector<16x1xf32>
    %109 = arith.divf %107, %108 : vector<16x1xf32>
    %110 = vector.broadcast %102 : vector<16x1xf32> to vector<16x32xf32>
    %111 = arith.subf %98, %110 : vector<16x32xf32>
    %cst_44 = arith.constant 9.99999974E-6 : f32
    %112 = vector.broadcast %cst_44 : f32 to vector<16x1xf32>
    %113 = arith.addf %109, %112 : vector<16x1xf32>
    %114 = math.rsqrt %113 : vector<16x1xf32>
    %115 = vector.broadcast %114 : vector<16x1xf32> to vector<16x32xf32>
    %116 = arith.mulf %111, %115 : vector<16x32xf32>
    %c0_45 = arith.constant 0 : index
    %c0_46 = arith.constant 0 : index
    %117 = vector.load %arg17[%c0_45, %c0_46] : memref<1x32xf32, #tpu.memory_space<vmem>>, vector<1x32xf32>
    %118 = vector.broadcast %117 : vector<1x32xf32> to vector<16x32xf32>
    %119 = arith.mulf %116, %118 : vector<16x32xf32>
    %c0_47 = arith.constant 0 : index
    %c0_48 = arith.constant 0 : index
    %120 = vector.load %arg18[%c0_47, %c0_48] : memref<1x32xf32, #tpu.memory_space<vmem>>, vector<1x32xf32>
    %121 = vector.broadcast %120 : vector<1x32xf32> to vector<16x32xf32>
    %122 = arith.addf %119, %121 : vector<16x32xf32>
    %c0_49 = arith.constant 0 : index
    %c0_50 = arith.constant 0 : index
    %123 = vector.load %arg9[%c0_49, %c0_50] : memref<32x96xf32, #tpu.memory_space<vmem>>, vector<32x96xf32>
    %c0_51 = arith.constant 0 : index
    %c0_52 = arith.constant 0 : index
    %124 = vector.load %arg10[%c0_51, %c0_52] : memref<1x96xf32, #tpu.memory_space<vmem>>, vector<1x96xf32>
    %125 = arith.addf %122, %3 : vector<16x32xf32>
    %126 = vector.extract_strided_slice %123 {offsets = [0, 0], sizes = [32, 32], strides = [1, 1]} : vector<32x96xf32> to vector<32x32xf32>
    %127 = vector.extract_strided_slice %124 {offsets = [0, 0], sizes = [1, 32], strides = [1, 1]} : vector<1x96xf32> to vector<1x32xf32>
    %cst_53 = arith.constant dense<0.000000e+00> : vector<16x32xf32>
    %128 = tpu.matmul %125, %126, %cst_53 {dimension_numbers = #tpu.dot_dimension_numbers<[1], [0], [0], [1], [0, 0, 1, 1], [], []>} : vector<16x32xf32>, vector<32x32xf32>, vector<16x32xf32> -> vector<16x32xf32>
    %129 = vector.broadcast %127 : vector<1x32xf32> to vector<16x32xf32>
    %130 = arith.addf %128, %129 : vector<16x32xf32>
    %131 = arith.addf %5, %7 : vector<32x32xf32>
    %132 = vector.extract_strided_slice %123 {offsets = [0, 32], sizes = [32, 32], strides = [1, 1]} : vector<32x96xf32> to vector<32x32xf32>
    %133 = vector.extract_strided_slice %124 {offsets = [0, 32], sizes = [1, 32], strides = [1, 1]} : vector<1x96xf32> to vector<1x32xf32>
    %cst_54 = arith.constant dense<0.000000e+00> : vector<32x32xf32>
    %134 = tpu.matmul %131, %132, %cst_54 {dimension_numbers = #tpu.dot_dimension_numbers<[1], [0], [0], [1], [0, 0, 1, 1], [], []>} : vector<32x32xf32>, vector<32x32xf32>, vector<32x32xf32> -> vector<32x32xf32>
    %135 = vector.broadcast %133 : vector<1x32xf32> to vector<32x32xf32>
    %136 = arith.addf %134, %135 : vector<32x32xf32>
    %137 = vector.extract_strided_slice %123 {offsets = [0, 64], sizes = [32, 32], strides = [1, 1]} : vector<32x96xf32> to vector<32x32xf32>
    %138 = vector.extract_strided_slice %124 {offsets = [0, 64], sizes = [1, 32], strides = [1, 1]} : vector<1x96xf32> to vector<1x32xf32>
    %cst_55 = arith.constant dense<0.000000e+00> : vector<32x32xf32>
    %139 = tpu.matmul %5, %137, %cst_55 {dimension_numbers = #tpu.dot_dimension_numbers<[1], [0], [0], [1], [0, 0, 1, 1], [], []>} : vector<32x32xf32>, vector<32x32xf32>, vector<32x32xf32> -> vector<32x32xf32>
    %140 = vector.broadcast %138 : vector<1x32xf32> to vector<32x32xf32>
    %141 = arith.addf %139, %140 : vector<32x32xf32>
    %c0_56 = arith.constant 0 : index
    %c0_57 = arith.constant 0 : index
    %142 = vector.load %arg11[%c0_56, %c0_57] : memref<32x32xf32, #tpu.memory_space<vmem>>, vector<32x32xf32>
    %c0_58 = arith.constant 0 : index
    %c0_59 = arith.constant 0 : index
    %143 = vector.load %arg12[%c0_58, %c0_59] : memref<1x32xf32, #tpu.memory_space<vmem>>, vector<1x32xf32>
    %144 = vector.shape_cast %130 : vector<16x32xf32> to vector<2x8x32xf32>
    %145 = vector.extract_strided_slice %144 {offsets = [0, 0, 0], sizes = [2, 8, 8], strides = [1, 1, 1]} : vector<2x8x32xf32> to vector<2x8x8xf32>
    %146 = vector.extract_strided_slice %144 {offsets = [0, 0, 8], sizes = [2, 8, 8], strides = [1, 1, 1]} : vector<2x8x32xf32> to vector<2x8x8xf32>
    %147 = vector.extract_strided_slice %144 {offsets = [0, 0, 16], sizes = [2, 8, 8], strides = [1, 1, 1]} : vector<2x8x32xf32> to vector<2x8x8xf32>
    %148 = vector.extract_strided_slice %144 {offsets = [0, 0, 24], sizes = [2, 8, 8], strides = [1, 1, 1]} : vector<2x8x32xf32> to vector<2x8x8xf32>
    %149 = vector.shape_cast %145 : vector<2x8x8xf32> to vector<2x1x8x8xf32>
    %150 = vector.shape_cast %146 : vector<2x8x8xf32> to vector<2x1x8x8xf32>
    %151 = vector.shape_cast %147 : vector<2x8x8xf32> to vector<2x1x8x8xf32>
    %152 = vector.shape_cast %148 : vector<2x8x8xf32> to vector<2x1x8x8xf32>
    %153 = tpu.concatenate %149, %150, %151, %152 in 1 : vector<2x1x8x8xf32>, vector<2x1x8x8xf32>, vector<2x1x8x8xf32>, vector<2x1x8x8xf32> -> vector<2x4x8x8xf32>
    %154 = vector.shape_cast %153 : vector<2x4x8x8xf32> to vector<8x8x8xf32>
    %155 = vector.shape_cast %136 : vector<32x32xf32> to vector<2x16x32xf32>
    %156 = vector.extract_strided_slice %155 {offsets = [0, 0, 0], sizes = [2, 16, 8], strides = [1, 1, 1]} : vector<2x16x32xf32> to vector<2x16x8xf32>
    %157 = vector.extract_strided_slice %155 {offsets = [0, 0, 8], sizes = [2, 16, 8], strides = [1, 1, 1]} : vector<2x16x32xf32> to vector<2x16x8xf32>
    %158 = vector.extract_strided_slice %155 {offsets = [0, 0, 16], sizes = [2, 16, 8], strides = [1, 1, 1]} : vector<2x16x32xf32> to vector<2x16x8xf32>
    %159 = vector.extract_strided_slice %155 {offsets = [0, 0, 24], sizes = [2, 16, 8], strides = [1, 1, 1]} : vector<2x16x32xf32> to vector<2x16x8xf32>
    %160 = vector.shape_cast %156 : vector<2x16x8xf32> to vector<2x1x16x8xf32>
    %161 = vector.shape_cast %157 : vector<2x16x8xf32> to vector<2x1x16x8xf32>
    %162 = vector.shape_cast %158 : vector<2x16x8xf32> to vector<2x1x16x8xf32>
    %163 = vector.shape_cast %159 : vector<2x16x8xf32> to vector<2x1x16x8xf32>
    %164 = tpu.concatenate %160, %161, %162, %163 in 1 : vector<2x1x16x8xf32>, vector<2x1x16x8xf32>, vector<2x1x16x8xf32>, vector<2x1x16x8xf32> -> vector<2x4x16x8xf32>
    %165 = vector.shape_cast %164 : vector<2x4x16x8xf32> to vector<8x16x8xf32>
    %166 = vector.shape_cast %141 : vector<32x32xf32> to vector<2x16x32xf32>
    %167 = vector.extract_strided_slice %166 {offsets = [0, 0, 0], sizes = [2, 16, 8], strides = [1, 1, 1]} : vector<2x16x32xf32> to vector<2x16x8xf32>
    %168 = vector.extract_strided_slice %166 {offsets = [0, 0, 8], sizes = [2, 16, 8], strides = [1, 1, 1]} : vector<2x16x32xf32> to vector<2x16x8xf32>
    %169 = vector.extract_strided_slice %166 {offsets = [0, 0, 16], sizes = [2, 16, 8], strides = [1, 1, 1]} : vector<2x16x32xf32> to vector<2x16x8xf32>
    %170 = vector.extract_strided_slice %166 {offsets = [0, 0, 24], sizes = [2, 16, 8], strides = [1, 1, 1]} : vector<2x16x32xf32> to vector<2x16x8xf32>
    %171 = vector.shape_cast %167 : vector<2x16x8xf32> to vector<2x1x16x8xf32>
    %172 = vector.shape_cast %168 : vector<2x16x8xf32> to vector<2x1x16x8xf32>
    %173 = vector.shape_cast %169 : vector<2x16x8xf32> to vector<2x1x16x8xf32>
    %174 = vector.shape_cast %170 : vector<2x16x8xf32> to vector<2x1x16x8xf32>
    %175 = tpu.concatenate %171, %172, %173, %174 in 1 : vector<2x1x16x8xf32>, vector<2x1x16x8xf32>, vector<2x1x16x8xf32>, vector<2x1x16x8xf32> -> vector<2x4x16x8xf32>
    %176 = vector.shape_cast %175 : vector<2x4x16x8xf32> to vector<8x16x8xf32>
    "tpu.trace_start"() <{level = 10 : i32, message = "bqd,bkd->bqk"}> : () -> ()
    %cst_60 = arith.constant dense<0.000000e+00> : vector<8x8x16xf32>
    %177 = tpu.matmul %154, %165, %cst_60 {dimension_numbers = #tpu.dot_dimension_numbers<[2], [2], [1], [1], [0, 0, 0, 1, 1, 1], [0], [0]>} : vector<8x8x8xf32>, vector<8x16x8xf32>, vector<8x8x16xf32> -> vector<8x8x16xf32>
    "tpu.trace_stop"() : () -> ()
    %cst_61 = arith.constant dense<0xFF800000> : vector<8x8xf32>
    %178 = vector.multi_reduction <maximumf>, %177, %cst_61 [2] : vector<8x8x16xf32> to vector<8x8xf32>
    %179 = vector.shape_cast %178 : vector<8x8xf32> to vector<8x8x1xf32>
    %180 = vector.broadcast %179 : vector<8x8x1xf32> to vector<8x8x16xf32>
    %181 = arith.subf %177, %180 : vector<8x8x16xf32>
    %182 = math.exp %181 : vector<8x8x16xf32>
    %cst_62 = arith.constant dense<0.000000e+00> : vector<8x8xf32>
    %183 = vector.multi_reduction <add>, %182, %cst_62 [2] : vector<8x8x16xf32> to vector<8x8xf32>
    %184 = vector.shape_cast %183 : vector<8x8xf32> to vector<8x8x1xf32>
    %185 = tpu.reciprocal %184 : vector<8x8x1xf32> -> vector<8x8x1xf32>
    %186 = vector.broadcast %185 : vector<8x8x1xf32> to vector<8x8x16xf32>
    %187 = arith.mulf %182, %186 : vector<8x8x16xf32>
    "tpu.trace_start"() <{level = 10 : i32, message = "bqk,bkd->bqd"}> : () -> ()
    %cst_63 = arith.constant dense<0.000000e+00> : vector<8x8x8xf32>
    %188 = tpu.matmul %187, %176, %cst_63 {dimension_numbers = #tpu.dot_dimension_numbers<[2], [1], [1], [2], [0, 0, 0, 1, 1, 2], [0], [0]>} : vector<8x8x16xf32>, vector<8x16x8xf32>, vector<8x8x8xf32> -> vector<8x8x8xf32>
    "tpu.trace_stop"() : () -> ()
    %189 = vector.extract_strided_slice %188 {offsets = [0, 0, 0], sizes = [1, 8, 8], strides = [1, 1, 1]} : vector<8x8x8xf32> to vector<1x8x8xf32>
    %190 = vector.shape_cast %189 : vector<1x8x8xf32> to vector<8x8xf32>
    %c0_64 = arith.constant 0 : index
    %c0_65 = arith.constant 0 : index
    %191 = vector.load %arg24[%c0_64, %c0_65] : memref<16x32xf32, #tpu.memory_space<vmem>>, vector<8x8xf32>
    tpu.vector_store %arg24[%c0_64, %c0_65], %190 {strides = array<i32>} : memref<16x32xf32, #tpu.memory_space<vmem>>, vector<8x8xf32>,
    %192 = vector.extract_strided_slice %188 {offsets = [1, 0, 0], sizes = [1, 8, 8], strides = [1, 1, 1]} : vector<8x8x8xf32> to vector<1x8x8xf32>
    %193 = vector.shape_cast %192 : vector<1x8x8xf32> to vector<8x8xf32>
    %c0_66 = arith.constant 0 : index
    %c8_67 = arith.constant 8 : index
    %194 = vector.load %arg24[%c0_66, %c8_67] : memref<16x32xf32, #tpu.memory_space<vmem>>, vector<8x8xf32>
    tpu.vector_store %arg24[%c0_66, %c8_67], %193 {strides = array<i32>} : memref<16x32xf32, #tpu.memory_space<vmem>>, vector<8x8xf32>,
    %195 = vector.extract_strided_slice %188 {offsets = [2, 0, 0], sizes = [1, 8, 8], strides = [1, 1, 1]} : vector<8x8x8xf32> to vector<1x8x8xf32>
    %196 = vector.shape_cast %195 : vector<1x8x8xf32> to vector<8x8xf32>
    %c0_68 = arith.constant 0 : index
    %c16_69 = arith.constant 16 : index
    %197 = vector.load %arg24[%c0_68, %c16_69] : memref<16x32xf32, #tpu.memory_space<vmem>>, vector<8x8xf32>
    tpu.vector_store %arg24[%c0_68, %c16_69], %196 {strides = array<i32>} : memref<16x32xf32, #tpu.memory_space<vmem>>, vector<8x8xf32>,
    %198 = vector.extract_strided_slice %188 {offsets = [3, 0, 0], sizes = [1, 8, 8], strides = [1, 1, 1]} : vector<8x8x8xf32> to vector<1x8x8xf32>
    %199 = vector.shape_cast %198 : vector<1x8x8xf32> to vector<8x8xf32>
    %c0_70 = arith.constant 0 : index
    %c24_71 = arith.constant 24 : index
    %200 = vector.load %arg24[%c0_70, %c24_71] : memref<16x32xf32, #tpu.memory_space<vmem>>, vector<8x8xf32>
    tpu.vector_store %arg24[%c0_70, %c24_71], %199 {strides = array<i32>} : memref<16x32xf32, #tpu.memory_space<vmem>>, vector<8x8xf32>,
    %201 = vector.extract_strided_slice %188 {offsets = [4, 0, 0], sizes = [1, 8, 8], strides = [1, 1, 1]} : vector<8x8x8xf32> to vector<1x8x8xf32>
    %202 = vector.shape_cast %201 : vector<1x8x8xf32> to vector<8x8xf32>
    %c8_72 = arith.constant 8 : index
    %c0_73 = arith.constant 0 : index
    %203 = vector.load %arg24[%c8_72, %c0_73] : memref<16x32xf32, #tpu.memory_space<vmem>>, vector<8x8xf32>
    tpu.vector_store %arg24[%c8_72, %c0_73], %202 {strides = array<i32>} : memref<16x32xf32, #tpu.memory_space<vmem>>, vector<8x8xf32>,
    %204 = vector.extract_strided_slice %188 {offsets = [5, 0, 0], sizes = [1, 8, 8], strides = [1, 1, 1]} : vector<8x8x8xf32> to vector<1x8x8xf32>
    %205 = vector.shape_cast %204 : vector<1x8x8xf32> to vector<8x8xf32>
    %c8_74 = arith.constant 8 : index
    %c8_75 = arith.constant 8 : index
    %206 = vector.load %arg24[%c8_74, %c8_75] : memref<16x32xf32, #tpu.memory_space<vmem>>, vector<8x8xf32>
    tpu.vector_store %arg24[%c8_74, %c8_75], %205 {strides = array<i32>} : memref<16x32xf32, #tpu.memory_space<vmem>>, vector<8x8xf32>,
    %207 = vector.extract_strided_slice %188 {offsets = [6, 0, 0], sizes = [1, 8, 8], strides = [1, 1, 1]} : vector<8x8x8xf32> to vector<1x8x8xf32>
    %208 = vector.shape_cast %207 : vector<1x8x8xf32> to vector<8x8xf32>
    %c8_76 = arith.constant 8 : index
    %c16_77 = arith.constant 16 : index
    %209 = vector.load %arg24[%c8_76, %c16_77] : memref<16x32xf32, #tpu.memory_space<vmem>>, vector<8x8xf32>
    tpu.vector_store %arg24[%c8_76, %c16_77], %208 {strides = array<i32>} : memref<16x32xf32, #tpu.memory_space<vmem>>, vector<8x8xf32>,
    %210 = vector.extract_strided_slice %188 {offsets = [7, 0, 0], sizes = [1, 8, 8], strides = [1, 1, 1]} : vector<8x8x8xf32> to vector<1x8x8xf32>
    %211 = vector.shape_cast %210 : vector<1x8x8xf32> to vector<8x8xf32>
    %c8_78 = arith.constant 8 : index
    %c24_79 = arith.constant 24 : index
    %212 = vector.load %arg24[%c8_78, %c24_79] : memref<16x32xf32, #tpu.memory_space<vmem>>, vector<8x8xf32>
    tpu.vector_store %arg24[%c8_78, %c24_79], %211 {strides = array<i32>} : memref<16x32xf32, #tpu.memory_space<vmem>>, vector<8x8xf32>,
    %c0_80 = arith.constant 0 : index
    %c0_81 = arith.constant 0 : index
    %213 = vector.load %arg24[%c0_80, %c0_81] : memref<16x32xf32, #tpu.memory_space<vmem>>, vector<16x32xf32>
    %cst_82 = arith.constant dense<0.000000e+00> : vector<16x32xf32>
    %214 = tpu.matmul %213, %142, %cst_82 {dimension_numbers = #tpu.dot_dimension_numbers<[1], [0], [0], [1], [0, 0, 1, 1], [], []>} : vector<16x32xf32>, vector<32x32xf32>, vector<16x32xf32> -> vector<16x32xf32>
    %215 = vector.broadcast %143 : vector<1x32xf32> to vector<16x32xf32>
    %216 = arith.addf %214, %215 : vector<16x32xf32>
    %217 = arith.addf %122, %216 : vector<16x32xf32>
    %cst_83 = arith.constant dense<0.000000e+00> : vector<16xf32>
    %218 = vector.multi_reduction <add>, %217, %cst_83 [1] : vector<16x32xf32> to vector<16xf32>
    %219 = vector.shape_cast %218 : vector<16xf32> to vector<16x1xf32>
    %cst_84 = arith.constant 3.200000e+01 : f32
    %220 = vector.broadcast %cst_84 : f32 to vector<16x1xf32>
    %221 = arith.divf %219, %220 : vector<16x1xf32>
    %222 = vector.broadcast %221 : vector<16x1xf32> to vector<16x32xf32>
    %223 = arith.subf %217, %222 : vector<16x32xf32>
    %224 = arith.mulf %223, %223 : vector<16x32xf32>
    %cst_85 = arith.constant dense<0.000000e+00> : vector<16xf32>
    %225 = vector.multi_reduction <add>, %224, %cst_85 [1] : vector<16x32xf32> to vector<16xf32>
    %226 = vector.shape_cast %225 : vector<16xf32> to vector<16x1xf32>
    %cst_86 = arith.constant 3.200000e+01 : f32
    %227 = vector.broadcast %cst_86 : f32 to vector<16x1xf32>
    %228 = arith.divf %226, %227 : vector<16x1xf32>
    %229 = vector.broadcast %221 : vector<16x1xf32> to vector<16x32xf32>
    %230 = arith.subf %217, %229 : vector<16x32xf32>
    %cst_87 = arith.constant 9.99999974E-6 : f32
    %231 = vector.broadcast %cst_87 : f32 to vector<16x1xf32>
    %232 = arith.addf %228, %231 : vector<16x1xf32>
    %233 = math.rsqrt %232 : vector<16x1xf32>
    %234 = vector.broadcast %233 : vector<16x1xf32> to vector<16x32xf32>
    %235 = arith.mulf %230, %234 : vector<16x32xf32>
    %c0_88 = arith.constant 0 : index
    %c0_89 = arith.constant 0 : index
    %236 = vector.load %arg19[%c0_88, %c0_89] : memref<1x32xf32, #tpu.memory_space<vmem>>, vector<1x32xf32>
    %237 = vector.broadcast %236 : vector<1x32xf32> to vector<16x32xf32>
    %238 = arith.mulf %235, %237 : vector<16x32xf32>
    %c0_90 = arith.constant 0 : index
    %c0_91 = arith.constant 0 : index
    %239 = vector.load %arg20[%c0_90, %c0_91] : memref<1x32xf32, #tpu.memory_space<vmem>>, vector<1x32xf32>
    %240 = vector.broadcast %239 : vector<1x32xf32> to vector<16x32xf32>
    %241 = arith.addf %238, %240 : vector<16x32xf32>
    %c0_92 = arith.constant 0 : index
    %c0_93 = arith.constant 0 : index
    %242 = vector.load %arg13[%c0_92, %c0_93] : memref<32x64xf32, #tpu.memory_space<vmem>>, vector<32x64xf32>
    %c0_94 = arith.constant 0 : index
    %c0_95 = arith.constant 0 : index
    %243 = vector.load %arg14[%c0_94, %c0_95] : memref<1x64xf32, #tpu.memory_space<vmem>>, vector<1x64xf32>
    %cst_96 = arith.constant dense<0.000000e+00> : vector<16x64xf32>
    %244 = tpu.matmul %241, %242, %cst_96 {dimension_numbers = #tpu.dot_dimension_numbers<[1], [0], [0], [1], [0, 0, 1, 1], [], []>} : vector<16x32xf32>, vector<32x64xf32>, vector<16x64xf32> -> vector<16x64xf32>
    %245 = vector.broadcast %243 : vector<1x64xf32> to vector<16x64xf32>
    %246 = arith.addf %244, %245 : vector<16x64xf32>
    %cst_97 = arith.constant 0.000000e+00 : f32
    %247 = vector.broadcast %cst_97 : f32 to vector<16x64xf32>
    %248 = arith.maximumf %246, %247 : vector<16x64xf32>
    %c0_98 = arith.constant 0 : index
    %c0_99 = arith.constant 0 : index
    %249 = vector.load %arg15[%c0_98, %c0_99] : memref<64x32xf32, #tpu.memory_space<vmem>>, vector<64x32xf32>
    %c0_100 = arith.constant 0 : index
    %c0_101 = arith.constant 0 : index
    %250 = vector.load %arg16[%c0_100, %c0_101] : memref<1x32xf32, #tpu.memory_space<vmem>>, vector<1x32xf32>
    %cst_102 = arith.constant dense<0.000000e+00> : vector<16x32xf32>
    %251 = tpu.matmul %248, %249, %cst_102 {dimension_numbers = #tpu.dot_dimension_numbers<[1], [0], [0], [1], [0, 0, 1, 1], [], []>} : vector<16x64xf32>, vector<64x32xf32>, vector<16x32xf32> -> vector<16x32xf32>
    %252 = vector.broadcast %250 : vector<1x32xf32> to vector<16x32xf32>
    %253 = arith.addf %251, %252 : vector<16x32xf32>
    %254 = arith.addf %241, %253 : vector<16x32xf32>
    %cst_103 = arith.constant dense<0.000000e+00> : vector<16xf32>
    %255 = vector.multi_reduction <add>, %254, %cst_103 [1] : vector<16x32xf32> to vector<16xf32>
    %256 = vector.shape_cast %255 : vector<16xf32> to vector<16x1xf32>
    %cst_104 = arith.constant 3.200000e+01 : f32
    %257 = vector.broadcast %cst_104 : f32 to vector<16x1xf32>
    %258 = arith.divf %256, %257 : vector<16x1xf32>
    %259 = vector.broadcast %258 : vector<16x1xf32> to vector<16x32xf32>
    %260 = arith.subf %254, %259 : vector<16x32xf32>
    %261 = arith.mulf %260, %260 : vector<16x32xf32>
    %cst_105 = arith.constant dense<0.000000e+00> : vector<16xf32>
    %262 = vector.multi_reduction <add>, %261, %cst_105 [1] : vector<16x32xf32> to vector<16xf32>
    %263 = vector.shape_cast %262 : vector<16xf32> to vector<16x1xf32>
    %cst_106 = arith.constant 3.200000e+01 : f32
    %264 = vector.broadcast %cst_106 : f32 to vector<16x1xf32>
    %265 = arith.divf %263, %264 : vector<16x1xf32>
    %266 = vector.broadcast %258 : vector<16x1xf32> to vector<16x32xf32>
    %267 = arith.subf %254, %266 : vector<16x32xf32>
    %cst_107 = arith.constant 9.99999974E-6 : f32
    %268 = vector.broadcast %cst_107 : f32 to vector<16x1xf32>
    %269 = arith.addf %265, %268 : vector<16x1xf32>
    %270 = math.rsqrt %269 : vector<16x1xf32>
    %271 = vector.broadcast %270 : vector<16x1xf32> to vector<16x32xf32>
    %272 = arith.mulf %267, %271 : vector<16x32xf32>
    %c0_108 = arith.constant 0 : index
    %c0_109 = arith.constant 0 : index
    %273 = vector.load %arg21[%c0_108, %c0_109] : memref<1x32xf32, #tpu.memory_space<vmem>>, vector<1x32xf32>
    %274 = vector.broadcast %273 : vector<1x32xf32> to vector<16x32xf32>
    %275 = arith.mulf %272, %274 : vector<16x32xf32>
    %c0_110 = arith.constant 0 : index
    %c0_111 = arith.constant 0 : index
    %276 = vector.load %arg22[%c0_110, %c0_111] : memref<1x32xf32, #tpu.memory_space<vmem>>, vector<1x32xf32>
    %277 = vector.broadcast %276 : vector<1x32xf32> to vector<16x32xf32>
    %278 = arith.addf %275, %277 : vector<16x32xf32>
    %279 = vector.shape_cast %278 : vector<16x32xf32> to vector<2x8x32xf32>
    %c0_112 = arith.constant 0 : index
    %c0_113 = arith.constant 0 : index
    %c0_114 = arith.constant 0 : index
    %280 = vector.load %arg23[%c0_112, %c0_113, %c0_114] : memref<2x8x32xf32, #tpu.memory_space<vmem>>, vector<2x8x32xf32>
    tpu.vector_store %arg23[%c0_112, %c0_113, %c0_114], %279 {strides = array<i32>} : memref<2x8x32xf32, #tpu.memory_space<vmem>>, vector<2x8x32xf32>,
    return
  }
  func.func @transform_0(%arg0: i32) -> (i32, i32, i32) {
    %c0_i32 = arith.constant 0 : i32
    %c0_i32_0 = arith.constant 0 : i32
    %c0_i32_1 = arith.constant 0 : i32
    return %arg0, %c0_i32, %c0_i32_0 : i32, i32, i32
  }
  func.func @transform_1(%arg0: i32) -> (i32, i32, i32) {
    %c0_i32 = arith.constant 0 : i32
    %c0_i32_0 = arith.constant 0 : i32
    %c0_i32_1 = arith.constant 0 : i32
    return %arg0, %c0_i32, %c0_i32_0 : i32, i32, i32
  }
  func.func @transform_2(%arg0: i32) -> (i32, i32, i32) {
    %c0_i32 = arith.constant 0 : i32
    %c0_i32_0 = arith.constant 0 : i32
    %c0_i32_1 = arith.constant 0 : i32
    return %arg0, %c0_i32, %c0_i32_0 : i32, i32, i32
  }
  func.func @transform_3(%arg0: i32) -> (i32, i32, i32) {
    %c0_i32 = arith.constant 0 : i32
    %c0_i32_0 = arith.constant 0 : i32
    %c0_i32_1 = arith.constant 0 : i32
    return %arg0, %c0_i32, %c0_i32_0 : i32, i32, i32
  }
  func.func @transform_4(%arg0: i32) -> (i32, i32) {
    %c0_i32 = arith.constant 0 : i32
    %c0_i32_0 = arith.constant 0 : i32
    %c0_i32_1 = arith.constant 0 : i32
    return %c0_i32, %c0_i32_0 : i32, i32
  }
  func.func @transform_5(%arg0: i32) -> (i32, i32) {
    %c0_i32 = arith.constant 0 : i32
    %c0_i32_0 = arith.constant 0 : i32
    %c0_i32_1 = arith.constant 0 : i32
    return %c0_i32, %c0_i32_0 : i32, i32
  }
  func.func @transform_6(%arg0: i32) -> (i32, i32) {
    %c0_i32 = arith.constant 0 : i32
    %c0_i32_0 = arith.constant 0 : i32
    %c0_i32_1 = arith.constant 0 : i32
    return %c0_i32, %c0_i32_0 : i32, i32
  }
  func.func @transform_7(%arg0: i32) -> (i32, i32) {
    %c0_i32 = arith.constant 0 : i32
    %c0_i32_0 = arith.constant 0 : i32
    %c0_i32_1 = arith.constant 0 : i32
    return %c0_i32, %c0_i32_0 : i32, i32
  }
  func.func @transform_8(%arg0: i32) -> (i32, i32) {
    %c0_i32 = arith.constant 0 : i32
    %c0_i32_0 = arith.constant 0 : i32
    %c0_i32_1 = arith.constant 0 : i32
    return %c0_i32, %c0_i32_0 : i32, i32
  }
  func.func @transform_9(%arg0: i32) -> (i32, i32) {
    %c0_i32 = arith.constant 0 : i32
    %c0_i32_0 = arith.constant 0 : i32
    %c0_i32_1 = arith.constant 0 : i32
    return %c0_i32, %c0_i32_0 : i32, i32
  }
  func.func @transform_10(%arg0: i32) -> (i32, i32) {
    %c0_i32 = arith.constant 0 : i32
    %c0_i32_0 = arith.constant 0 : i32
    %c0_i32_1 = arith.constant 0 : i32
    return %c0_i32, %c0_i32_0 : i32, i32
  }
  func.func @transform_11(%arg0: i32) -> (i32, i32) {
    %c0_i32 = arith.constant 0 : i32
    %c0_i32_0 = arith.constant 0 : i32
    %c0_i32_1 = arith.constant 0 : i32
    return %c0_i32, %c0_i32_0 : i32, i32
  }
  func.func @transform_12(%arg0: i32) -> (i32, i32) {
    %c0_i32 = arith.constant 0 : i32
    %c0_i32_0 = arith.constant 0 : i32
    %c0_i32_1 = arith.constant 0 : i32
    return %c0_i32, %c0_i32_0 : i32, i32
  }
  func.func @transform_13(%arg0: i32) -> (i32, i32) {
    %c0_i32 = arith.constant 0 : i32
    %c0_i32_0 = arith.constant 0 : i32
    %c0_i32_1 = arith.constant 0 : i32
    return %c0_i32, %c0_i32_0 : i32, i32
  }
  func.func @transform_14(%arg0: i32) -> (i32, i32) {
    %c0_i32 = arith.constant 0 : i32
    %c0_i32_0 = arith.constant 0 : i32
    %c0_i32_1 = arith.constant 0 : i32
    return %c0_i32, %c0_i32_0 : i32, i32
  }
  func.func @transform_15(%arg0: i32) -> (i32, i32) {
    %c0_i32 = arith.constant 0 : i32
    %c0_i32_0 = arith.constant 0 : i32
    %c0_i32_1 = arith.constant 0 : i32
    return %c0_i32, %c0_i32_0 : i32, i32
  }
  func.func @transform_16(%arg0: i32) -> (i32, i32) {
    %c0_i32 = arith.constant 0 : i32
    %c0_i32_0 = arith.constant 0 : i32
    %c0_i32_1 = arith.constant 0 : i32
    return %c0_i32, %c0_i32_0 : i32, i32
  }
  func.func @transform_17(%arg0: i32) -> (i32, i32) {
    %c0_i32 = arith.constant 0 : i32
    %c0_i32_0 = arith.constant 0 : i32
    %c0_i32_1 = arith.constant 0 : i32
    return %c0_i32, %c0_i32_0 : i32, i32
  }
  func.func @transform_18(%arg0: i32) -> (i32, i32) {
    %c0_i32 = arith.constant 0 : i32
    %c0_i32_0 = arith.constant 0 : i32
    %c0_i32_1 = arith.constant 0 : i32
    return %c0_i32, %c0_i32_0 : i32, i32
  }
  func.func @transform_19(%arg0: i32) -> (i32, i32) {
    %c0_i32 = arith.constant 0 : i32
    %c0_i32_0 = arith.constant 0 : i32
    %c0_i32_1 = arith.constant 0 : i32
    return %c0_i32, %c0_i32_0 : i32, i32
  }
  func.func @transform_20(%arg0: i32) -> (i32, i32) {
    %c0_i32 = arith.constant 0 : i32
    %c0_i32_0 = arith.constant 0 : i32
    %c0_i32_1 = arith.constant 0 : i32
    return %c0_i32, %c0_i32_0 : i32, i32
  }
  func.func @transform_21(%arg0: i32) -> (i32, i32) {
    %c0_i32 = arith.constant 0 : i32
    %c0_i32_0 = arith.constant 0 : i32
    %c0_i32_1 = arith.constant 0 : i32
    return %c0_i32, %c0_i32_0 : i32, i32
  }
  func.func @transform_22(%arg0: i32) -> (i32, i32, i32) {
    %c0_i32 = arith.constant 0 : i32
    %c0_i32_0 = arith.constant 0 : i32
    %c0_i32_1 = arith.constant 0 : i32
    return %arg0, %c0_i32, %c0_i32_0 : i32, i32, i32
  }
}

</mosaic_0001>

<llo_original>
// kernel: transformer_decoder_layer.2
$region0: #{transformer_decoder_layer.2}
  #allocation0 [shape = 'u32[]', space=smem, size = 0x4, offset = 0x4, fixed_abs, tag = 'smem constant byte address 0x4 - core index']
  #allocation1 [shape = 'u32[144,128]{1,0:T(1,128)}', space=vmem, size = 0x12000, scoped, tag = 'internal scratch']
  #allocation2 [shape = 'f32[16,32]{1,0:T(8,128)}', space=vmem, size = 0x2000, scoped, tag = 'scratch operand']
  %s0 = inlined_call_operand.vmem [shape: f32[32,96], index: 0, kind: input, shape index: {}]
  %s1 = inlined_call_operand.vmem [shape: f32[1,96], index: 1, kind: input, shape index: {}]
  %s2 = inlined_call_operand.vmem [shape: f32[32,32], index: 2, kind: input, shape index: {}]
  %s3 = inlined_call_operand.vmem [shape: f32[1,32], index: 3, kind: input, shape index: {}]
  %s4 = inlined_call_operand.vmem [shape: f32[32,96], index: 4, kind: input, shape index: {}]
  %s5 = inlined_call_operand.vmem [shape: f32[1,96], index: 5, kind: input, shape index: {}]
  %s6 = inlined_call_operand.vmem [shape: f32[32,32], index: 6, kind: input, shape index: {}]
  %s7 = inlined_call_operand.vmem [shape: f32[1,32], index: 7, kind: input, shape index: {}]
  %s8 = inlined_call_operand.vmem [shape: f32[32,64], index: 8, kind: input, shape index: {}]
  %s9 = inlined_call_operand.vmem [shape: f32[1,64], index: 9, kind: input, shape index: {}]
  %s10 = inlined_call_operand.vmem [shape: f32[64,32], index: 10, kind: input, shape index: {}]
  %s11 = inlined_call_operand.vmem [shape: f32[1,32], index: 11, kind: input, shape index: {}]
  %s12 = inlined_call_operand.vmem [shape: f32[1,32], index: 12, kind: input, shape index: {}]
  %s13 = inlined_call_operand.vmem [shape: f32[1,32], index: 13, kind: input, shape index: {}]
  %s14 = inlined_call_operand.vmem [shape: f32[1,32], index: 14, kind: input, shape index: {}]
  %s15 = inlined_call_operand.vmem [shape: f32[1,32], index: 15, kind: input, shape index: {}]
  %s16 = inlined_call_operand.vmem [shape: f32[1,32], index: 16, kind: input, shape index: {}]
  %s17 = inlined_call_operand.vmem [shape: f32[1,32], index: 17, kind: input, shape index: {}]
  %s18 = inlined_call_operand.vmem [shape: f32[16,4,32], index: 18, kind: input, shape index: {}]
  %s19 = inlined_call_operand.vmem [shape: f32[16,4,32], index: 19, kind: input, shape index: {}]
  %s20 = inlined_call_operand.vmem [shape: f32[8,4,32], index: 20, kind: input, shape index: {}]
  %s21 = inlined_call_operand.vmem [shape: f32[8,4,32], index: 21, kind: input, shape index: {}]
  %s22 = inlined_call_operand.vmem [shape: f32[4,8,32], index: 22, kind: output, shape index: {}]
  %s23 = sld [smem:[#allocation0]]
  $region121: #{transformer_decoder_layer.2} parent=0
    _
  %s25 = ssub.s32 1, %s23
  %s26 = scalar_select 0, %s25, %s23
  loop: start=0, step=1, limit=4
  $region2: #{transformer_decoder_layer.2} parent=0 // loop_pre_header
    _
  $region3: #{transformer_decoder_layer.2} parent=0 // loop_header
    %s28 = sphi 0, %s32
    %p29 = scmp.ge.s32.totalorder %s28, 4
    %s38 = sphi 0, %s40
    %s41 = sphi 0, %s38
    %s42 = sphi 0, %s41
    %s58 = sphi 0, %s42
    %s64 = sphi 0, %s66
    %s67 = sphi 0, %s64
    %s68 = sphi 0, %s67
    %s84 = sphi 0, %s68
    %s90 = sphi 0, %s92
    %s93 = sphi 0, %s90
    %s94 = sphi 0, %s93
    %s110 = sphi 0, %s94
    %s116 = sphi 0, %s118
    %s119 = sphi 0, %s116
    %s120 = sphi 0, %s119
    %s136 = sphi 0, %s120
    %s140 = sphi 0, %s140
    %s142 = sphi 0, %s140
    %s143 = sphi 0, %s142
    %s157 = sphi 0, %s143
    %s161 = sphi 0, %s161
    %s163 = sphi 0, %s161
    %s164 = sphi 0, %s163
    %s178 = sphi 0, %s164
    %s182 = sphi 0, %s182
    %s184 = sphi 0, %s182
    %s185 = sphi 0, %s184
    %s199 = sphi 0, %s185
    %s203 = sphi 0, %s203
    %s205 = sphi 0, %s203
    %s206 = sphi 0, %s205
    %s220 = sphi 0, %s206
    %s224 = sphi 0, %s224
    %s226 = sphi 0, %s224
    %s227 = sphi 0, %s226
    %s241 = sphi 0, %s227
    %s245 = sphi 0, %s245
    %s247 = sphi 0, %s245
    %s248 = sphi 0, %s247
    %s262 = sphi 0, %s248
    %s266 = sphi 0, %s266
    %s268 = sphi 0, %s266
    %s269 = sphi 0, %s268
    %s283 = sphi 0, %s269
    %s287 = sphi 0, %s287
    %s289 = sphi 0, %s287
    %s290 = sphi 0, %s289
    %s304 = sphi 0, %s290
    %s308 = sphi 0, %s308
    %s310 = sphi 0, %s308
    %s311 = sphi 0, %s310
    %s325 = sphi 0, %s311
    %s329 = sphi 0, %s329
    %s331 = sphi 0, %s329
    %s332 = sphi 0, %s331
    %s346 = sphi 0, %s332
    %s350 = sphi 0, %s350
    %s352 = sphi 0, %s350
    %s353 = sphi 0, %s352
    %s367 = sphi 0, %s353
    %s371 = sphi 0, %s371
    %s373 = sphi 0, %s371
    %s374 = sphi 0, %s373
    %s388 = sphi 0, %s374
    %s392 = sphi 0, %s392
    %s394 = sphi 0, %s392
    %s395 = sphi 0, %s394
    %s409 = sphi 0, %s395
    %s413 = sphi 0, %s413
    %s415 = sphi 0, %s413
    %s416 = sphi 0, %s415
    %s430 = sphi 0, %s416
    %s434 = sphi 0, %s434
    %s436 = sphi 0, %s434
    %s437 = sphi 0, %s436
    %s451 = sphi 0, %s437
    %s455 = sphi 0, %s455
    %s457 = sphi 0, %s455
    %s458 = sphi 0, %s457
    %s472 = sphi 0, %s458
    %s476 = sphi 0, %s476
    %s478 = sphi 0, %s476
    %s479 = sphi 0, %s478
    %s493 = sphi 0, %s479
    %s497 = sphi 0, %s497
    %s499 = sphi 0, %s497
    %s500 = sphi 0, %s499
    %s514 = sphi 0, %s500
    %s520 = sphi 0, %s522
    %s523 = sphi 0, %s520
    %s524 = sphi 0, %s523
    %s540 = sphi 0, %s524
  $region4: #{transformer_decoder_layer.2} parent=0 // loop_header_branch
    %31 = sbr.rel (%p29) target = $region8
  $region5: #{transformer_decoder_layer.2} parent=0 // loop_body
    %s33 = ssub.s32 %s28, 1
    %s34 = ssub.s32 %s28, 2
    %s35 = sadd.s32 %s28, 1
    %s36 = ssub.s32 %s28, %s35
    %p37 = scmp.eq.s32.totalorder %s36, 0
    %s39 = sadd.s32 %s38, 1
    %s40 = scalar_select %p37, %s38, %s39
    %p43 = pneg %p37
    %p44 = scmp.eq.s32.totalorder %s28, 1
    %p45 = por %p43, %p44
    %p46 = scmp.ne.s32.totalorder %s38, %s41
    %p47 = scmp.eq.s32.totalorder %s28, 0
    %p48 = por %p46, %p47
    %p49 = scmp.ne.s32.totalorder %s38, %s41
    %p50 = scmp.eq.s32.totalorder %s33, 1
    %p51 = por %p49, %p50
    %p52 = scmp.ne.s32.totalorder %s41, %s42
    %p53 = scmp.eq.s32.totalorder %s33, 0
    %p54 = por %p52, %p53
    %p55 = scmp.ne.s32.totalorder %s41, %s42
    %p56 = scmp.eq.s32.totalorder %s34, 1
    %p57 = por %p55, %p56
    %p59 = scmp.ne.s32.totalorder %s42, %s58
    %p60 = scmp.eq.s32.totalorder %s34, 0
    %p61 = por %p59, %p60
    %s62 = ssub.s32 %s28, %s35
    %p63 = scmp.eq.s32.totalorder %s62, 0
    %s65 = sadd.s32 %s64, 1
    %s66 = scalar_select %p63, %s64, %s65
    %p69 = pneg %p63
    %p70 = scmp.eq.s32.totalorder %s28, 1
    %p71 = por %p69, %p70
    %p72 = scmp.ne.s32.totalorder %s64, %s67
    %p73 = scmp.eq.s32.totalorder %s28, 0
    %p74 = por %p72, %p73
    %p75 = scmp.ne.s32.totalorder %s64, %s67
    %p76 = scmp.eq.s32.totalorder %s33, 1
    %p77 = por %p75, %p76
    %p78 = scmp.ne.s32.totalorder %s67, %s68
    %p79 = scmp.eq.s32.totalorder %s33, 0
    %p80 = por %p78, %p79
    %p81 = scmp.ne.s32.totalorder %s67, %s68
    %p82 = scmp.eq.s32.totalorder %s34, 1
    %p83 = por %p81, %p82
    %p85 = scmp.ne.s32.totalorder %s68, %s84
    %p86 = scmp.eq.s32.totalorder %s34, 0
    %p87 = por %p85, %p86
    %s88 = ssub.s32 %s28, %s35
    %p89 = scmp.eq.s32.totalorder %s88, 0
    %s91 = sadd.s32 %s90, 1
    %s92 = scalar_select %p89, %s90, %s91
    %p95 = pneg %p89
    %p96 = scmp.eq.s32.totalorder %s28, 1
    %p97 = por %p95, %p96
    %p98 = scmp.ne.s32.totalorder %s90, %s93
    %p99 = scmp.eq.s32.totalorder %s28, 0
    %p100 = por %p98, %p99
    %p101 = scmp.ne.s32.totalorder %s90, %s93
    %p102 = scmp.eq.s32.totalorder %s33, 1
    %p103 = por %p101, %p102
    %p104 = scmp.ne.s32.totalorder %s93, %s94
    %p105 = scmp.eq.s32.totalorder %s33, 0
    %p106 = por %p104, %p105
    %p107 = scmp.ne.s32.totalorder %s93, %s94
    %p108 = scmp.eq.s32.totalorder %s34, 1
    %p109 = por %p107, %p108
    %p111 = scmp.ne.s32.totalorder %s94, %s110
    %p112 = scmp.eq.s32.totalorder %s34, 0
    %p113 = por %p111, %p112
    %s114 = ssub.s32 %s28, %s35
    %p115 = scmp.eq.s32.totalorder %s114, 0
    %s117 = sadd.s32 %s116, 1
    %s118 = scalar_select %p115, %s116, %s117
    %p121 = pneg %p115
    %p122 = scmp.eq.s32.totalorder %s28, 1
    %p123 = por %p121, %p122
    %p124 = scmp.ne.s32.totalorder %s116, %s119
    %p125 = scmp.eq.s32.totalorder %s28, 0
    %p126 = por %p124, %p125
    %p127 = scmp.ne.s32.totalorder %s116, %s119
    %p128 = scmp.eq.s32.totalorder %s33, 1
    %p129 = por %p127, %p128
    %p130 = scmp.ne.s32.totalorder %s119, %s120
    %p131 = scmp.eq.s32.totalorder %s33, 0
    %p132 = por %p130, %p131
    %p133 = scmp.ne.s32.totalorder %s119, %s120
    %p134 = scmp.eq.s32.totalorder %s34, 1
    %p135 = por %p133, %p134
    %p137 = scmp.ne.s32.totalorder %s120, %s136
    %p138 = scmp.eq.s32.totalorder %s34, 0
    %p139 = por %p137, %p138
    %s141 = sadd.s32 %s140, 1
    %p144 = scmp.eq.s32.totalorder %s28, 1
    %p145 = scmp.ne.s32.totalorder %s140, %s142
    %p146 = scmp.eq.s32.totalorder %s28, 0
    %p147 = por %p145, %p146
    %p148 = scmp.ne.s32.totalorder %s140, %s142
    %p149 = scmp.eq.s32.totalorder %s33, 1
    %p150 = por %p148, %p149
    %p151 = scmp.ne.s32.totalorder %s142, %s143
    %p152 = scmp.eq.s32.totalorder %s33, 0
    %p153 = por %p151, %p152
    %p154 = scmp.ne.s32.totalorder %s142, %s143
    %p155 = scmp.eq.s32.totalorder %s34, 1
    %p156 = por %p154, %p155
    %p158 = scmp.ne.s32.totalorder %s143, %s157
    %p159 = scmp.eq.s32.totalorder %s34, 0
    %p160 = por %p158, %p159
    %s162 = sadd.s32 %s161, 1
    %p165 = scmp.eq.s32.totalorder %s28, 1
    %p166 = scmp.ne.s32.totalorder %s161, %s163
    %p167 = scmp.eq.s32.totalorder %s28, 0
    %p168 = por %p166, %p167
    %p169 = scmp.ne.s32.totalorder %s161, %s163
    %p170 = scmp.eq.s32.totalorder %s33, 1
    %p171 = por %p169, %p170
    %p172 = scmp.ne.s32.totalorder %s163, %s164
    %p173 = scmp.eq.s32.totalorder %s33, 0
    %p174 = por %p172, %p173
    %p175 = scmp.ne.s32.totalorder %s163, %s164
    %p176 = scmp.eq.s32.totalorder %s34, 1
    %p177 = por %p175, %p176
    %p179 = scmp.ne.s32.totalorder %s164, %s178
    %p180 = scmp.eq.s32.totalorder %s34, 0
    %p181 = por %p179, %p180
    %s183 = sadd.s32 %s182, 1
    %p186 = scmp.eq.s32.totalorder %s28, 1
    %p187 = scmp.ne.s32.totalorder %s182, %s184
    %p188 = scmp.eq.s32.totalorder %s28, 0
    %p189 = por %p187, %p188
    %p190 = scmp.ne.s32.totalorder %s182, %s184
    %p191 = scmp.eq.s32.totalorder %s33, 1
    %p192 = por %p190, %p191
    %p193 = scmp.ne.s32.totalorder %s184, %s185
    %p194 = scmp.eq.s32.totalorder %s33, 0
    %p195 = por %p193, %p194
    %p196 = scmp.ne.s32.totalorder %s184, %s185
    %p197 = scmp.eq.s32.totalorder %s34, 1
    %p198 = por %p196, %p197
    %p200 = scmp.ne.s32.totalorder %s185, %s199
    %p201 = scmp.eq.s32.totalorder %s34, 0
    %p202 = por %p200, %p201
    %s204 = sadd.s32 %s203, 1
    %p207 = scmp.eq.s32.totalorder %s28, 1
    %p208 = scmp.ne.s32.totalorder %s203, %s205
    %p209 = scmp.eq.s32.totalorder %s28, 0
    %p210 = por %p208, %p209
    %p211 = scmp.ne.s32.totalorder %s203, %s205
    %p212 = scmp.eq.s32.totalorder %s33, 1
    %p213 = por %p211, %p212
    %p214 = scmp.ne.s32.totalorder %s205, %s206
    %p215 = scmp.eq.s32.totalorder %s33, 0
    %p216 = por %p214, %p215
    %p217 = scmp.ne.s32.totalorder %s205, %s206
    %p218 = scmp.eq.s32.totalorder %s34, 1
    %p219 = por %p217, %p218
    %p221 = scmp.ne.s32.totalorder %s206, %s220
    %p222 = scmp.eq.s32.totalorder %s34, 0
    %p223 = por %p221, %p222
    %s225 = sadd.s32 %s224, 1
    %p228 = scmp.eq.s32.totalorder %s28, 1
    %p229 = scmp.ne.s32.totalorder %s224, %s226
    %p230 = scmp.eq.s32.totalorder %s28, 0
    %p231 = por %p229, %p230
    %p232 = scmp.ne.s32.totalorder %s224, %s226
    %p233 = scmp.eq.s32.totalorder %s33, 1
    %p234 = por %p232, %p233
    %p235 = scmp.ne.s32.totalorder %s226, %s227
    %p236 = scmp.eq.s32.totalorder %s33, 0
    %p237 = por %p235, %p236
    %p238 = scmp.ne.s32.totalorder %s226, %s227
    %p239 = scmp.eq.s32.totalorder %s34, 1
    %p240 = por %p238, %p239
    %p242 = scmp.ne.s32.totalorder %s227, %s241
    %p243 = scmp.eq.s32.totalorder %s34, 0
    %p244 = por %p242, %p243
    %s246 = sadd.s32 %s245, 1
    %p249 = scmp.eq.s32.totalorder %s28, 1
    %p250 = scmp.ne.s32.totalorder %s245, %s247
    %p251 = scmp.eq.s32.totalorder %s28, 0
    %p252 = por %p250, %p251
    %p253 = scmp.ne.s32.totalorder %s245, %s247
    %p254 = scmp.eq.s32.totalorder %s33, 1
    %p255 = por %p253, %p254
    %p256 = scmp.ne.s32.totalorder %s247, %s248
    %p257 = scmp.eq.s32.totalorder %s33, 0
    %p258 = por %p256, %p257
    %p259 = scmp.ne.s32.totalorder %s247, %s248
    %p260 = scmp.eq.s32.totalorder %s34, 1
    %p261 = por %p259, %p260
    %p263 = scmp.ne.s32.totalorder %s248, %s262
    %p264 = scmp.eq.s32.totalorder %s34, 0
    %p265 = por %p263, %p264
    %s267 = sadd.s32 %s266, 1
    %p270 = scmp.eq.s32.totalorder %s28, 1
    %p271 = scmp.ne.s32.totalorder %s266, %s268
    %p272 = scmp.eq.s32.totalorder %s28, 0
    %p273 = por %p271, %p272
    %p274 = scmp.ne.s32.totalorder %s266, %s268
    %p275 = scmp.eq.s32.totalorder %s33, 1
    %p276 = por %p274, %p275
    %p277 = scmp.ne.s32.totalorder %s268, %s269
    %p278 = scmp.eq.s32.totalorder %s33, 0
    %p279 = por %p277, %p278
    %p280 = scmp.ne.s32.totalorder %s268, %s269
    %p281 = scmp.eq.s32.totalorder %s34, 1
    %p282 = por %p280, %p281
    %p284 = scmp.ne.s32.totalorder %s269, %s283
    %p285 = scmp.eq.s32.totalorder %s34, 0
    %p286 = por %p284, %p285
    %s288 = sadd.s32 %s287, 1
    %p291 = scmp.eq.s32.totalorder %s28, 1
    %p292 = scmp.ne.s32.totalorder %s287, %s289
    %p293 = scmp.eq.s32.totalorder %s28, 0
    %p294 = por %p292, %p293
    %p295 = scmp.ne.s32.totalorder %s287, %s289
    %p296 = scmp.eq.s32.totalorder %s33, 1
    %p297 = por %p295, %p296
    %p298 = scmp.ne.s32.totalorder %s289, %s290
    %p299 = scmp.eq.s32.totalorder %s33, 0
    %p300 = por %p298, %p299
    %p301 = scmp.ne.s32.totalorder %s289, %s290
    %p302 = scmp.eq.s32.totalorder %s34, 1
    %p303 = por %p301, %p302
    %p305 = scmp.ne.s32.totalorder %s290, %s304
    %p306 = scmp.eq.s32.totalorder %s34, 0
    %p307 = por %p305, %p306
    %s309 = sadd.s32 %s308, 1
    %p312 = scmp.eq.s32.totalorder %s28, 1
    %p313 = scmp.ne.s32.totalorder %s308, %s310
    %p314 = scmp.eq.s32.totalorder %s28, 0
    %p315 = por %p313, %p314
    %p316 = scmp.ne.s32.totalorder %s308, %s310
    %p317 = scmp.eq.s32.totalorder %s33, 1
    %p318 = por %p316, %p317
    %p319 = scmp.ne.s32.totalorder %s310, %s311
    %p320 = scmp.eq.s32.totalorder %s33, 0
    %p321 = por %p319, %p320
    %p322 = scmp.ne.s32.totalorder %s310, %s311
    %p323 = scmp.eq.s32.totalorder %s34, 1
    %p324 = por %p322, %p323
    %p326 = scmp.ne.s32.totalorder %s311, %s325
    %p327 = scmp.eq.s32.totalorder %s34, 0
    %p328 = por %p326, %p327
    %s330 = sadd.s32 %s329, 1
    %p333 = scmp.eq.s32.totalorder %s28, 1
    %p334 = scmp.ne.s32.totalorder %s329, %s331
    %p335 = scmp.eq.s32.totalorder %s28, 0
    %p336 = por %p334, %p335
    %p337 = scmp.ne.s32.totalorder %s329, %s331
    %p338 = scmp.eq.s32.totalorder %s33, 1
    %p339 = por %p337, %p338
    %p340 = scmp.ne.s32.totalorder %s331, %s332
    %p341 = scmp.eq.s32.totalorder %s33, 0
    %p342 = por %p340, %p341
    %p343 = scmp.ne.s32.totalorder %s331, %s332
    %p344 = scmp.eq.s32.totalorder %s34, 1
    %p345 = por %p343, %p344
    %p347 = scmp.ne.s32.totalorder %s332, %s346
    %p348 = scmp.eq.s32.totalorder %s34, 0
    %p349 = por %p347, %p348
    %s351 = sadd.s32 %s350, 1
    %p354 = scmp.eq.s32.totalorder %s28, 1
    %p355 = scmp.ne.s32.totalorder %s350, %s352
    %p356 = scmp.eq.s32.totalorder %s28, 0
    %p357 = por %p355, %p356
    %p358 = scmp.ne.s32.totalorder %s350, %s352
    %p359 = scmp.eq.s32.totalorder %s33, 1
    %p360 = por %p358, %p359
    %p361 = scmp.ne.s32.totalorder %s352, %s353
    %p362 = scmp.eq.s32.totalorder %s33, 0
    %p363 = por %p361, %p362
    %p364 = scmp.ne.s32.totalorder %s352, %s353
    %p365 = scmp.eq.s32.totalorder %s34, 1
    %p366 = por %p364, %p365
    %p368 = scmp.ne.s32.totalorder %s353, %s367
    %p369 = scmp.eq.s32.totalorder %s34, 0
    %p370 = por %p368, %p369
    %s372 = sadd.s32 %s371, 1
    %p375 = scmp.eq.s32.totalorder %s28, 1
    %p376 = scmp.ne.s32.totalorder %s371, %s373
    %p377 = scmp.eq.s32.totalorder %s28, 0
    %p378 = por %p376, %p377
    %p379 = scmp.ne.s32.totalorder %s371, %s373
    %p380 = scmp.eq.s32.totalorder %s33, 1
    %p381 = por %p379, %p380
    %p382 = scmp.ne.s32.totalorder %s373, %s374
    %p383 = scmp.eq.s32.totalorder %s33, 0
    %p384 = por %p382, %p383
    %p385 = scmp.ne.s32.totalorder %s373, %s374
    %p386 = scmp.eq.s32.totalorder %s34, 1
    %p387 = por %p385, %p386
    %p389 = scmp.ne.s32.totalorder %s374, %s388
    %p390 = scmp.eq.s32.totalorder %s34, 0
    %p391 = por %p389, %p390
    %s393 = sadd.s32 %s392, 1
    %p396 = scmp.eq.s32.totalorder %s28, 1
    %p397 = scmp.ne.s32.totalorder %s392, %s394
    %p398 = scmp.eq.s32.totalorder %s28, 0
    %p399 = por %p397, %p398
    %p400 = scmp.ne.s32.totalorder %s392, %s394
    %p401 = scmp.eq.s32.totalorder %s33, 1
    %p402 = por %p400, %p401
    %p403 = scmp.ne.s32.totalorder %s394, %s395
    %p404 = scmp.eq.s32.totalorder %s33, 0
    %p405 = por %p403, %p404
    %p406 = scmp.ne.s32.totalorder %s394, %s395
    %p407 = scmp.eq.s32.totalorder %s34, 1
    %p408 = por %p406, %p407
    %p410 = scmp.ne.s32.totalorder %s395, %s409
    %p411 = scmp.eq.s32.totalorder %s34, 0
    %p412 = por %p410, %p411
    %s414 = sadd.s32 %s413, 1
    %p417 = scmp.eq.s32.totalorder %s28, 1
    %p418 = scmp.ne.s32.totalorder %s413, %s415
    %p419 = scmp.eq.s32.totalorder %s28, 0
    %p420 = por %p418, %p419
    %p421 = scmp.ne.s32.totalorder %s413, %s415
    %p422 = scmp.eq.s32.totalorder %s33, 1
    %p423 = por %p421, %p422
    %p424 = scmp.ne.s32.totalorder %s415, %s416
    %p425 = scmp.eq.s32.totalorder %s33, 0
    %p426 = por %p424, %p425
    %p427 = scmp.ne.s32.totalorder %s415, %s416
    %p428 = scmp.eq.s32.totalorder %s34, 1
    %p429 = por %p427, %p428
    %p431 = scmp.ne.s32.totalorder %s416, %s430
    %p432 = scmp.eq.s32.totalorder %s34, 0
    %p433 = por %p431, %p432
    %s435 = sadd.s32 %s434, 1
    %p438 = scmp.eq.s32.totalorder %s28, 1
    %p439 = scmp.ne.s32.totalorder %s434, %s436
    %p440 = scmp.eq.s32.totalorder %s28, 0
    %p441 = por %p439, %p440
    %p442 = scmp.ne.s32.totalorder %s434, %s436
    %p443 = scmp.eq.s32.totalorder %s33, 1
    %p444 = por %p442, %p443
    %p445 = scmp.ne.s32.totalorder %s436, %s437
    %p446 = scmp.eq.s32.totalorder %s33, 0
    %p447 = por %p445, %p446
    %p448 = scmp.ne.s32.totalorder %s436, %s437
    %p449 = scmp.eq.s32.totalorder %s34, 1
    %p450 = por %p448, %p449
    %p452 = scmp.ne.s32.totalorder %s437, %s451
    %p453 = scmp.eq.s32.totalorder %s34, 0
    %p454 = por %p452, %p453
    %s456 = sadd.s32 %s455, 1
    %p459 = scmp.eq.s32.totalorder %s28, 1
    %p460 = scmp.ne.s32.totalorder %s455, %s457
    %p461 = scmp.eq.s32.totalorder %s28, 0
    %p462 = por %p460, %p461
    %p463 = scmp.ne.s32.totalorder %s455, %s457
    %p464 = scmp.eq.s32.totalorder %s33, 1
    %p465 = por %p463, %p464
    %p466 = scmp.ne.s32.totalorder %s457, %s458
    %p467 = scmp.eq.s32.totalorder %s33, 0
    %p468 = por %p466, %p467
    %p469 = scmp.ne.s32.totalorder %s457, %s458
    %p470 = scmp.eq.s32.totalorder %s34, 1
    %p471 = por %p469, %p470
    %p473 = scmp.ne.s32.totalorder %s458, %s472
    %p474 = scmp.eq.s32.totalorder %s34, 0
    %p475 = por %p473, %p474
    %s477 = sadd.s32 %s476, 1
    %p480 = scmp.eq.s32.totalorder %s28, 1
    %p481 = scmp.ne.s32.totalorder %s476, %s478
    %p482 = scmp.eq.s32.totalorder %s28, 0
    %p483 = por %p481, %p482
    %p484 = scmp.ne.s32.totalorder %s476, %s478
    %p485 = scmp.eq.s32.totalorder %s33, 1
    %p486 = por %p484, %p485
    %p487 = scmp.ne.s32.totalorder %s478, %s479
    %p488 = scmp.eq.s32.totalorder %s33, 0
    %p489 = por %p487, %p488
    %p490 = scmp.ne.s32.totalorder %s478, %s479
    %p491 = scmp.eq.s32.totalorder %s34, 1
    %p492 = por %p490, %p491
    %p494 = scmp.ne.s32.totalorder %s479, %s493
    %p495 = scmp.eq.s32.totalorder %s34, 0
    %p496 = por %p494, %p495
    %s498 = sadd.s32 %s497, 1
    %p501 = scmp.eq.s32.totalorder %s28, 1
    %p502 = scmp.ne.s32.totalorder %s497, %s499
    %p503 = scmp.eq.s32.totalorder %s28, 0
    %p504 = por %p502, %p503
    %p505 = scmp.ne.s32.totalorder %s497, %s499
    %p506 = scmp.eq.s32.totalorder %s33, 1
    %p507 = por %p505, %p506
    %p508 = scmp.ne.s32.totalorder %s499, %s500
    %p509 = scmp.eq.s32.totalorder %s33, 0
    %p510 = por %p508, %p509
    %p511 = scmp.ne.s32.totalorder %s499, %s500
    %p512 = scmp.eq.s32.totalorder %s34, 1
    %p513 = por %p511, %p512
    %p515 = scmp.ne.s32.totalorder %s500, %s514
    %p516 = scmp.eq.s32.totalorder %s34, 0
    %p517 = por %p515, %p516
    %s518 = ssub.s32 %s28, %s35
    %p519 = scmp.eq.s32.totalorder %s518, 0
    %s521 = sadd.s32 %s520, 1
    %s522 = scalar_select %p519, %s520, %s521
    %p525 = pneg %p519
    %p526 = scmp.eq.s32.totalorder %s28, 1
    %p527 = por %p525, %p526
    %p528 = scmp.ne.s32.totalorder %s520, %s523
    %p529 = scmp.eq.s32.totalorder %s28, 0
    %p530 = por %p528, %p529
    %p531 = scmp.ne.s32.totalorder %s520, %s523
    %p532 = scmp.eq.s32.totalorder %s33, 1
    %p533 = por %p531, %p532
    %p534 = scmp.ne.s32.totalorder %s523, %s524
    %p535 = scmp.eq.s32.totalorder %s33, 0
    %p536 = por %p534, %p535
    %p537 = scmp.ne.s32.totalorder %s523, %s524
    %p538 = scmp.eq.s32.totalorder %s34, 1
    %p539 = por %p537, %p538
    %p541 = scmp.ne.s32.totalorder %s524, %s540
    %p542 = scmp.eq.s32.totalorder %s34, 0
    %p543 = por %p541, %p542
    %p544 = scmp.le.s32.totalorder 1, %s28
    %p545 = scmp.lt.s32.totalorder %s28, 3
    %p546 = pnand %p544, %p545
    %p547 = pneg %p546
    // Predicated region
    $region9: #{transformer_decoder_layer.2} parent=5 // pred_check
      _
    $region10: #{transformer_decoder_layer.2} parent=5 // pred_check_branch
      %549 = sbr.rel (%p546) target = $region12
    $region11: #{transformer_decoder_layer.2} parent=5 // pred_region
      %s550 = ssub.s32 %s28, 1
      // Predicated region
      $region13: #{transformer_decoder_layer.2} parent=11 // pred_check
        %p551 = pneg %p153
      $region14: #{transformer_decoder_layer.2} parent=11 // pred_check_branch
        %553 = sbr.rel (%p551) target = $region16
      $region15: #{transformer_decoder_layer.2} parent=11 // pred_region
        _
      $region16: #{transformer_decoder_layer.2} parent=11 // pred_fallthru
        _
      // Predicated region
      $region17: #{transformer_decoder_layer.2} parent=11 // pred_check
        %p554 = pneg %p174
      $region18: #{transformer_decoder_layer.2} parent=11 // pred_check_branch
        %556 = sbr.rel (%p554) target = $region20
      $region19: #{transformer_decoder_layer.2} parent=11 // pred_region
        _
      $region20: #{transformer_decoder_layer.2} parent=11 // pred_fallthru
        _
      // Predicated region
      $region21: #{transformer_decoder_layer.2} parent=11 // pred_check
        %p557 = pneg %p195
      $region22: #{transformer_decoder_layer.2} parent=11 // pred_check_branch
        %559 = sbr.rel (%p557) target = $region24
      $region23: #{transformer_decoder_layer.2} parent=11 // pred_region
        _
      $region24: #{transformer_decoder_layer.2} parent=11 // pred_fallthru
        _
      // Predicated region
      $region25: #{transformer_decoder_layer.2} parent=11 // pred_check
        %p560 = pneg %p216
      $region26: #{transformer_decoder_layer.2} parent=11 // pred_check_branch
        %562 = sbr.rel (%p560) target = $region28
      $region27: #{transformer_decoder_layer.2} parent=11 // pred_region
        _
      $region28: #{transformer_decoder_layer.2} parent=11 // pred_fallthru
        _
      // Predicated region
      $region29: #{transformer_decoder_layer.2} parent=11 // pred_check
        %p563 = pneg %p237
      $region30: #{transformer_decoder_layer.2} parent=11 // pred_check_branch
        %565 = sbr.rel (%p563) target = $region32
      $region31: #{transformer_decoder_layer.2} parent=11 // pred_region
        _
      $region32: #{transformer_decoder_layer.2} parent=11 // pred_fallthru
        _
      // Predicated region
      $region33: #{transformer_decoder_layer.2} parent=11 // pred_check
        %p566 = pneg %p258
      $region34: #{transformer_decoder_layer.2} parent=11 // pred_check_branch
        %568 = sbr.rel (%p566) target = $region36
      $region35: #{transformer_decoder_layer.2} parent=11 // pred_region
        _
      $region36: #{transformer_decoder_layer.2} parent=11 // pred_fallthru
        _
      // Predicated region
      $region37: #{transformer_decoder_layer.2} parent=11 // pred_check
        %p569 = pneg %p279
      $region38: #{transformer_decoder_layer.2} parent=11 // pred_check_branch
        %571 = sbr.rel (%p569) target = $region40
      $region39: #{transformer_decoder_layer.2} parent=11 // pred_region
        _
      $region40: #{transformer_decoder_layer.2} parent=11 // pred_fallthru
        _
      // Predicated region
      $region41: #{transformer_decoder_layer.2} parent=11 // pred_check
        %p572 = pneg %p300
      $region42: #{transformer_decoder_layer.2} parent=11 // pred_check_branch
        %574 = sbr.rel (%p572) target = $region44
      $region43: #{transformer_decoder_layer.2} parent=11 // pred_region
        _
      $region44: #{transformer_decoder_layer.2} parent=11 // pred_fallthru
        _
      // Predicated region
      $region45: #{transformer_decoder_layer.2} parent=11 // pred_check
        %p575 = pneg %p321
      $region46: #{transformer_decoder_layer.2} parent=11 // pred_check_branch
        %577 = sbr.rel (%p575) target = $region48
      $region47: #{transformer_decoder_layer.2} parent=11 // pred_region
        _
      $region48: #{transformer_decoder_layer.2} parent=11 // pred_fallthru
        _
      // Predicated region
      $region49: #{transformer_decoder_layer.2} parent=11 // pred_check
        %p578 = pneg %p342
      $region50: #{transformer_decoder_layer.2} parent=11 // pred_check_branch
        %580 = sbr.rel (%p578) target = $region52
      $region51: #{transformer_decoder_layer.2} parent=11 // pred_region
        _
      $region52: #{transformer_decoder_layer.2} parent=11 // pred_fallthru
        _
      // Predicated region
      $region53: #{transformer_decoder_layer.2} parent=11 // pred_check
        %p581 = pneg %p363
      $region54: #{transformer_decoder_layer.2} parent=11 // pred_check_branch
        %583 = sbr.rel (%p581) target = $region56
      $region55: #{transformer_decoder_layer.2} parent=11 // pred_region
        _
      $region56: #{transformer_decoder_layer.2} parent=11 // pred_fallthru
        _
      // Predicated region
      $region57: #{transformer_decoder_layer.2} parent=11 // pred_check
        %p584 = pneg %p384
      $region58: #{transformer_decoder_layer.2} parent=11 // pred_check_branch
        %586 = sbr.rel (%p584) target = $region60
      $region59: #{transformer_decoder_layer.2} parent=11 // pred_region
        _
      $region60: #{transformer_decoder_layer.2} parent=11 // pred_fallthru
        _
      // Predicated region
      $region61: #{transformer_decoder_layer.2} parent=11 // pred_check
        %p587 = pneg %p405
      $region62: #{transformer_decoder_layer.2} parent=11 // pred_check_branch
        %589 = sbr.rel (%p587) target = $region64
      $region63: #{transformer_decoder_layer.2} parent=11 // pred_region
        _
      $region64: #{transformer_decoder_layer.2} parent=11 // pred_fallthru
        _
      // Predicated region
      $region65: #{transformer_decoder_layer.2} parent=11 // pred_check
        %p590 = pneg %p426
      $region66: #{transformer_decoder_layer.2} parent=11 // pred_check_branch
        %592 = sbr.rel (%p590) target = $region68
      $region67: #{transformer_decoder_layer.2} parent=11 // pred_region
        _
      $region68: #{transformer_decoder_layer.2} parent=11 // pred_fallthru
        _
      // Predicated region
      $region69: #{transformer_decoder_layer.2} parent=11 // pred_check
        %p593 = pneg %p447
      $region70: #{transformer_decoder_layer.2} parent=11 // pred_check_branch
        %595 = sbr.rel (%p593) target = $region72
      $region71: #{transformer_decoder_layer.2} parent=11 // pred_region
        _
      $region72: #{transformer_decoder_layer.2} parent=11 // pred_fallthru
        _
      // Predicated region
      $region73: #{transformer_decoder_layer.2} parent=11 // pred_check
        %p596 = pneg %p468
      $region74: #{transformer_decoder_layer.2} parent=11 // pred_check_branch
        %598 = sbr.rel (%p596) target = $region76
      $region75: #{transformer_decoder_layer.2} parent=11 // pred_region
        _
      $region76: #{transformer_decoder_layer.2} parent=11 // pred_fallthru
        _
      // Predicated region
      $region77: #{transformer_decoder_layer.2} parent=11 // pred_check
        %p599 = pneg %p489
      $region78: #{transformer_decoder_layer.2} parent=11 // pred_check_branch
        %601 = sbr.rel (%p599) target = $region80
      $region79: #{transformer_decoder_layer.2} parent=11 // pred_region
        _
      $region80: #{transformer_decoder_layer.2} parent=11 // pred_fallthru
        _
      // Predicated region
      $region81: #{transformer_decoder_layer.2} parent=11 // pred_check
        %p602 = pneg %p510
      $region82: #{transformer_decoder_layer.2} parent=11 // pred_check_branch
        %604 = sbr.rel (%p602) target = $region84
      $region83: #{transformer_decoder_layer.2} parent=11 // pred_region
        _
      $region84: #{transformer_decoder_layer.2} parent=11 // pred_fallthru
        _
    $region12: #{transformer_decoder_layer.2} parent=5 // pred_fallthru
      _
    %p605 = scmp.lt.s32.totalorder %s28, 2
    // Predicated region
    $region85: #{transformer_decoder_layer.2} parent=5 // pred_check
      %p606 = pneg %p605
    $region86: #{transformer_decoder_layer.2} parent=5 // pred_check_branch
      %608 = sbr.rel (%p606) target = $region88
    $region87: #{transformer_decoder_layer.2} parent=5 // pred_region
      // Predicated region
      $region89: #{transformer_decoder_layer.2} parent=87 // pred_check
        %p609 = pneg %p48
      $region90: #{transformer_decoder_layer.2} parent=87 // pred_check_branch
        %611 = sbr.rel (%p609) target = $region92
      $region91: #{transformer_decoder_layer.2} parent=87 // pred_region
        %s612 = smul.u32 2, %s28
        %p613 = scmp.lt.s32.totalorder %s612, 3
        %s614 = scalar_select %p613, %s612, 3
        %s615 = smul.addr %s614, 8
        %s616 = scalar_lea.vmem %s21, %s615
        %s617 = smul.u32 2, %s28
      $region92: #{transformer_decoder_layer.2} parent=87 // pred_fallthru
        _
      // Predicated region
      $region93: #{transformer_decoder_layer.2} parent=87 // pred_check
        %p618 = pneg %p74
      $region94: #{transformer_decoder_layer.2} parent=87 // pred_check_branch
        %620 = sbr.rel (%p618) target = $region96
      $region95: #{transformer_decoder_layer.2} parent=87 // pred_region
        %s621 = smul.u32 2, %s28
        %p622 = scmp.lt.s32.totalorder %s621, 3
        %s623 = scalar_select %p622, %s621, 3
        %s624 = smul.addr %s623, 8
        %s625 = scalar_lea.vmem %s20, %s624
        %s626 = smul.u32 2, %s28
      $region96: #{transformer_decoder_layer.2} parent=87 // pred_fallthru
        _
      // Predicated region
      $region97: #{transformer_decoder_layer.2} parent=87 // pred_check
        %p627 = pneg %p100
      $region98: #{transformer_decoder_layer.2} parent=87 // pred_check_branch
        %629 = sbr.rel (%p627) target = $region100
      $region99: #{transformer_decoder_layer.2} parent=87 // pred_region
        %s630 = smul.u32 2, %s28
        %p631 = scmp.lt.s32.totalorder %s630, 3
        %s632 = scalar_select %p631, %s630, 3
        %s633 = smul.addr %s632, 2
        %s634 = smul.addr %s633, 8
        %s635 = scalar_lea.vmem %s19, %s634
        %s636 = smul.u32 2, %s28
      $region100: #{transformer_decoder_layer.2} parent=87 // pred_fallthru
        _
      // Predicated region
      $region101: #{transformer_decoder_layer.2} parent=87 // pred_check
        %p637 = pneg %p126
      $region102: #{transformer_decoder_layer.2} parent=87 // pred_check_branch
        %639 = sbr.rel (%p637) target = $region104
      $region103: #{transformer_decoder_layer.2} parent=87 // pred_region
        %s640 = smul.u32 2, %s28
        %p641 = scmp.lt.s32.totalorder %s640, 3
        %s642 = scalar_select %p641, %s640, 3
        %s643 = smul.addr %s642, 2
        %s644 = smul.addr %s643, 8
        %s645 = scalar_lea.vmem %s18, %s644
        %s646 = smul.u32 2, %s28
      $region104: #{transformer_decoder_layer.2} parent=87 // pred_fallthru
        _
    $region88: #{transformer_decoder_layer.2} parent=5 // pred_fallthru
      _
    %p647 = scmp.le.s32.totalorder 1, %s28
    %p648 = scmp.lt.s32.totalorder %s28, 3
    %p649 = pnand %p647, %p648
    %p650 = pneg %p649
    // Predicated region
    $region105: #{transformer_decoder_layer.2} parent=5 // pred_check
      _
    $region106: #{transformer_decoder_layer.2} parent=5 // pred_check_branch
      %652 = sbr.rel (%p649) target = $region108
    $region107: #{transformer_decoder_layer.2} parent=5 // pred_region
      #allocation3 [shape = 'u8[8192]{0}', space=vmem, size = 0x2000, dematerialized = true, scoped, tag = 'FusionAdapter Buffer %fusion.4 = f32[4,8,32]{2,1,0:T(8,128)} fusion(%param_21.4), kind=kLoop, calls=%fused_computation.6.clone, metadata={op_name="jit(transformer_decoder_layer)/transpose" stack_frame_id=7}']
      #allocation4 [shape = 'u8[8192]{0}', space=vmem, size = 0x2000, dematerialized = true, scoped, tag = 'FusionAdapter Buffer %fusion.3 = f32[4,8,32]{2,1,0:T(8,128)} fusion(%param_20.4), kind=kLoop, calls=%fused_computation.5.clone, metadata={op_name="jit(transformer_decoder_layer)/transpose" stack_frame_id=10}']
      #allocation5 [shape = 'u8[16384]{0}', space=vmem, size = 0x4000, dematerialized = true, scoped, tag = 'FusionAdapter Buffer %fusion.2 = f32[4,16,32]{2,1,0:T(8,128)} fusion(%param_19.4), kind=kLoop, calls=%fused_computation.2.clone, metadata={op_name="jit(transformer_decoder_layer)/transpose" stack_frame_id=8}']
      #allocation6 [shape = 'u8[16384]{0}', space=vmem, size = 0x4000, dematerialized = true, scoped, tag = 'FusionAdapter Buffer %fusion.1 = f32[4,16,32]{2,1,0:T(8,128)} fusion(%param_18.4), kind=kLoop, calls=%fused_computation.1.clone, metadata={op_name="jit(transformer_decoder_layer)/transpose" stack_frame_id=9}']
      %s653 = ssub.s32 %s28, 1
      %s654 = smul.u32 2, %s33
      %p655 = scmp.lt.s32.totalorder %s654, 3
      %s656 = scalar_select %p655, %s654, 3
      %s657 = smul.addr %s656, 8
      %s658 = scalar_lea.vmem %s21, %s657
      %p659 = pneg %p54
      %p660 = pneg %p51
      %s661 = smul.u32 2, %s33
      %p662 = scmp.lt.s32.totalorder %s661, 3
      %s663 = scalar_select %p662, %s661, 3
      %s664 = smul.addr %s663, 8
      %s665 = scalar_lea.vmem %s20, %s664
      %p666 = pneg %p80
      %p667 = pneg %p77
      %s668 = smul.u32 2, %s33
      %p669 = scmp.lt.s32.totalorder %s668, 3
      %s670 = scalar_select %p669, %s668, 3
      %s671 = smul.addr %s670, 2
      %s672 = smul.addr %s671, 8
      %s673 = scalar_lea.vmem %s19, %s672
      %p674 = pneg %p106
      %p675 = pneg %p103
      %s676 = smul.u32 2, %s33
      %p677 = scmp.lt.s32.totalorder %s676, 3
      %s678 = scalar_select %p677, %s676, 3
      %s679 = smul.addr %s678, 2
      %s680 = smul.addr %s679, 8
      %s681 = scalar_lea.vmem %s18, %s680
      %p682 = pneg %p132
      %p683 = pneg %p129
      %p684 = pneg %p153
      %p685 = pneg %p150
      %p686 = pneg %p174
      %p687 = pneg %p171
      %p688 = pneg %p195
      %p689 = pneg %p192
      %p690 = pneg %p216
      %p691 = pneg %p213
      %p692 = pneg %p237
      %p693 = pneg %p234
      %p694 = pneg %p258
      %p695 = pneg %p255
      %p696 = pneg %p279
      %p697 = pneg %p276
      %p698 = pneg %p300
      %p699 = pneg %p297
      %p700 = pneg %p321
      %p701 = pneg %p318
      %p702 = pneg %p342
      %p703 = pneg %p339
      %p704 = pneg %p363
      %p705 = pneg %p360
      %p706 = pneg %p384
      %p707 = pneg %p381
      %p708 = pneg %p405
      %p709 = pneg %p402
      %p710 = pneg %p426
      %p711 = pneg %p423
      %p712 = pneg %p447
      %p713 = pneg %p444
      %p714 = pneg %p468
      %p715 = pneg %p465
      %p716 = pneg %p489
      %p717 = pneg %p486
      %p718 = pneg %p510
      %p719 = pneg %p507
      %p720 = pneg %p536
      %p721 = pneg %p533
      %s722 = smul.u32 2, %s33
      %p723 = scmp.lt.s32.totalorder %s722, 3
      %s724 = scalar_select %p723, %s722, 3
      %s725 = smul.addr %s724, 8
      %s726 = scalar_lea.vmem %s22, %s725
      %s727 = smul.u32 2, %s33
      %p728 = scmp.lt.s32.totalorder %s727, 3
      %s729 = scalar_select %p728, %s727, 3
      %s730 = smul.addr %s729, 8
      %s731 = scalar_lea.vmem %s21, %s730
      %s732 = smul.u32 2, %s33
      %s733 = smul.u32 2, %s33
      %p734 = scmp.lt.s32.totalorder %s733, 3
      %s735 = scalar_select %p734, %s733, 3
      %s736 = smul.addr %s735, 8
      %s737 = scalar_lea.vmem %s20, %s736
      %s738 = smul.u32 2, %s33
      %s739 = smul.u32 2, %s33
      %p740 = scmp.lt.s32.totalorder %s739, 3
      %s741 = scalar_select %p740, %s739, 3
      %s742 = smul.addr %s741, 2
      %s743 = smul.addr %s742, 8
      %s744 = scalar_lea.vmem %s19, %s743
      %s745 = smul.u32 2, %s33
      %s746 = smul.u32 2, %s33
      %p747 = scmp.lt.s32.totalorder %s746, 3
      %s748 = scalar_select %p747, %s746, 3
      %s749 = smul.addr %s748, 2
      %s750 = smul.addr %s749, 8
      %s751 = scalar_lea.vmem %s18, %s750
      %s752 = smul.u32 2, %s33
      %s753 = smul.u32 2, %s33
      %p754 = scmp.lt.s32.totalorder %s753, 3
      %s755 = scalar_select %p754, %s753, 3
      %s756 = smul.addr %s755, 8
      %s757 = scalar_lea.vmem %s22, %s756
      %s758 = smul.u32 2, %s33
      %v759 = vld [vmem:[%s731] sm:$0xff]
      %s761 = ssub.s32 256, 1
      %762 = vst [vmem:[#allocation3] sm:%s761] %v759
      %s763 = scalar_lea.vmem %s731, 8
      %v764 = vld [vmem:[%s763] sm:$0xff]
      %s765 = scalar_lea.vmem [#allocation3], 8
      %s767 = ssub.s32 256, 1
      %768 = vst [vmem:[%s765] sm:%s767] %v764
      %v769 = vld [vmem:[%s737] sm:$0xff]
      %s771 = ssub.s32 256, 1
      %772 = vst [vmem:[#allocation4] sm:%s771] %v769
      %s773 = scalar_lea.vmem %s737, 8
      %v774 = vld [vmem:[%s773] sm:$0xff]
      %s775 = scalar_lea.vmem [#allocation4], 8
      %s777 = ssub.s32 256, 1
      %778 = vst [vmem:[%s775] sm:%s777] %v774
      %v779 = vld [vmem:[%s744] sm:$0xff]
      %s781 = ssub.s32 256, 1
      %782 = vst [vmem:[#allocation5] sm:%s781] %v779
      %s783 = scalar_lea.vmem %s744, 8
      %v784 = vld [vmem:[%s783] sm:$0xff]
      %s785 = scalar_lea.vmem [#allocation5], 8
      %s787 = ssub.s32 256, 1
      %788 = vst [vmem:[%s785] sm:%s787] %v784
      %s789 = scalar_lea.vmem %s744, 16
      %v790 = vld [vmem:[%s789] sm:$0xff]
      %s791 = scalar_lea.vmem [#allocation5], 16
      %s793 = ssub.s32 256, 1
      %794 = vst [vmem:[%s791] sm:%s793] %v790
      %s795 = scalar_lea.vmem %s744, 24
      %v796 = vld [vmem:[%s795] sm:$0xff]
      %s797 = scalar_lea.vmem [#allocation5], 24
      %s799 = ssub.s32 256, 1
      %800 = vst [vmem:[%s797] sm:%s799] %v796
      %v801 = vld [vmem:[%s751] sm:$0xff]
      %s803 = ssub.s32 256, 1
      %804 = vst [vmem:[#allocation6] sm:%s803] %v801
      %s805 = scalar_lea.vmem %s751, 8
      %v806 = vld [vmem:[%s805] sm:$0xff]
      %s807 = scalar_lea.vmem [#allocation6], 8
      %s809 = ssub.s32 256, 1
      %810 = vst [vmem:[%s807] sm:%s809] %v806
      %s811 = scalar_lea.vmem %s751, 16
      %v812 = vld [vmem:[%s811] sm:$0xff]
      %s813 = scalar_lea.vmem [#allocation6], 16
      %s815 = ssub.s32 256, 1
      %816 = vst [vmem:[%s813] sm:%s815] %v812
      %s817 = scalar_lea.vmem %s751, 24
      %v818 = vld [vmem:[%s817] sm:$0xff]
      %s819 = scalar_lea.vmem [#allocation6], 24
      %s821 = ssub.s32 256, 1
      %822 = vst [vmem:[%s819] sm:%s821] %v818
      %v823 = vld [vmem:[#allocation3] sm:$0xff]
      %v824 = vld [vmem:[#allocation3 + $0x8] sm:$0xff]
      %v825 = vld [vmem:[#allocation4] sm:$0xff]
      %v826 = vld [vmem:[#allocation4 + $0x8] sm:$0xff]
      %v827 = vld [vmem:[#allocation5] sm:$0xff]
      %v828 = vld [vmem:[#allocation5 + $0x8] sm:$0xff]
      %v829 = vld [vmem:[#allocation5 + $0x10] sm:$0xff]
      %v830 = vld [vmem:[#allocation5 + $0x18] sm:$0xff]
      %v831 = vld [vmem:[#allocation6] sm:$0xff]
      %v832 = vld [vmem:[#allocation6 + $0x8] sm:$0xff]
      %v833 = vld [vmem:[#allocation6 + $0x10] sm:$0xff]
      %v834 = vld [vmem:[#allocation6 + $0x18] sm:$0xff]
      %v835 = vld [vmem:[%s0] sm:$0xff]
      %v836 = vld [vmem:[%s0 + $0x8] sm:$0xff]
      %v837 = vld [vmem:[%s0 + $0x10] sm:$0xff]
      %v838 = vld [vmem:[%s0 + $0x18] sm:$0xff]
      %v839 = vld [vmem:[%s1] sm:$0x1]
      %v840 = vadd.f32 %v823, %v825
      %v841 = vadd.f32 %v824, %v826
      %v843 = vlaneseq
      %v844 = vshrl.u32 %v843, 7
      %v845 = vsub.s32 0, %v844
      %v846 = vrot.slane %v839, %v845
      %vm848 = vcmask 261120
      %v850 = vsel %vm848, %v840, 0
      %v853 = vsel %vm848, %v841, 0
      %855 = vmatprep.subr.mxu0 0.0
      %856 = vmatpush1.msra.mxu0 0.0
      %857 = vmatprep.subr.mxu0 0.0
      %858 = vmatpush1.msra.mxu0 0.0
      %859 = vmatprep.subr.mxu0 0.0
      %860 = vmatpush1.msra.mxu0 0.0
      %861 = vmatprep.subr.mxu0 0.0
      %862 = vmatpush1.msra.mxu0 0.0
      %863 = vmatprep.subr.mxu0 0.0
      %864 = vmatpush1.msra.mxu0 0.0
      %865 = vmatprep.subr.mxu0 0.0
      %866 = vmatpush1.msra.mxu0 0.0
      %867 = vmatprep.subr.mxu0 0.0
      %868 = vmatpush1.msra.mxu0 0.0
      %869 = vmatprep.subr.mxu0 0.0
      %870 = vmatpush1.msra.mxu0 0.0
      %871 = vmatprep.subr.mxu0 0.0
      %872 = vmatpush1.msra.mxu0 0.0
      %873 = vmatprep.subr.mxu0 0.0
      %874 = vmatpush1.msra.mxu0 0.0
      %875 = vmatprep.subr.mxu0 0.0
      %876 = vmatpush1.msra.mxu0 0.0
      %877 = vmatprep.subr.mxu0 0.0
      %878 = vmatpush1.msra.mxu0 0.0
      %879 = vmatprep.subr.mxu0 0.0
      %880 = vmatpush1.msra.mxu0 %v838
      %881 = vmatprep.subr.mxu0 0.0
      %882 = vmatpush1.msra.mxu0 %v837
      %883 = vmatprep.subr.mxu0 0.0
      %884 = vmatpush1.msra.mxu0 %v836
      %885 = vmatprep.subr.mxu0 0.0
      %886 = vmatpush1.msra.mxu0 %v835
      %887 = vmatprep.subr.mxu0 0.0
      %888 = vmatpush2.msra.mxu0 0.0
      %889 = vmatprep.subr.mxu0 0.0
      %890 = vmatpush2.msra.mxu0 0.0
      %891 = vmatprep.subr.mxu0 0.0
      %892 = vmatpush2.msra.mxu0 0.0
      %893 = vmatprep.subr.mxu0 0.0
      %894 = vmatpush2.msra.mxu0 0.0
      %895 = vmatprep.subr.mxu0 0.0
      %896 = vmatpush2.msra.mxu0 0.0
      %897 = vmatprep.subr.mxu0 0.0
      %898 = vmatpush2.msra.mxu0 0.0
      %899 = vmatprep.subr.mxu0 0.0
      %900 = vmatpush2.msra.mxu0 0.0
      %901 = vmatprep.subr.mxu0 0.0
      %902 = vmatpush2.msra.mxu0 0.0
      %903 = vmatprep.subr.mxu0 0.0
      %904 = vmatpush2.msra.mxu0 0.0
      %905 = vmatprep.subr.mxu0 0.0
      %906 = vmatpush2.msra.mxu0 0.0
      %907 = vmatprep.subr.mxu0 0.0
      %908 = vmatpush2.msra.mxu0 0.0
      %909 = vmatprep.subr.mxu0 0.0
      %910 = vmatpush2.msra.mxu0 0.0
      %911 = vmatprep.subr.mxu0 0.0
      %912 = vmatpush2.msra.mxu0 0.0
      %913 = vmatprep.subr.mxu0 0.0
      %914 = vmatpush2.msra.mxu0 0.0
      %915 = vmatprep.subr.mxu0 0.0
      %916 = vmatpush2.msra.mxu0 0.0
      %917 = vmatprep.subr.mxu0 0.0
      %918 = vmatpush2.msra.mxu0 0.0
      %919 = vmatprep.mubr.f32.mxu0 0.0
      %920 = vmatmul.mubr.f32.gmra.mxu0 %v850
      %v921 = vpop.f32.mrf.mxu0
      %v922 = vadd.f32 %v846, %v921
      %v923 = vpop.f32.mrf.mxu0
      %924 = vmatprep.mubr.f32.mxu0 0.0
      %925 = vmatmul.mubr.f32.gmra.mxu0 %v853
      %v926 = vpop.f32.mrf.mxu0
      %v927 = vadd.f32 %v846, %v926
      %v928 = vpop.f32.mrf.mxu0
      %929 = vdwg.mxu0
      %934 = vrot.lane.b32.xlu0 %v835, 64
      %v935 = vpop.permute.xlu0 %934
      %936 = vrot.lane.b32.xlu0 %v836, 64
      %v937 = vpop.permute.xlu0 %936
      %938 = vrot.lane.b32.xlu0 %v837, 64
      %v939 = vpop.permute.xlu0 %938
      %940 = vrot.lane.b32.xlu0 %v838, 64
      %v941 = vpop.permute.xlu0 %940
      %946 = vrot.lane.b32.xlu0 %v846, 64
      %v947 = vpop.permute.xlu0 %946
      %v950 = vsel %vm848, %v823, 0
      %v953 = vsel %vm848, %v824, 0
      %955 = vmatprep.subr.mxu0 0.0
      %956 = vmatpush1.msra.mxu0 0.0
      %957 = vmatprep.subr.mxu0 0.0
      %958 = vmatpush1.msra.mxu0 0.0
      %959 = vmatprep.subr.mxu0 0.0
      %960 = vmatpush1.msra.mxu0 0.0
      %961 = vmatprep.subr.mxu0 0.0
      %962 = vmatpush1.msra.mxu0 0.0
      %963 = vmatprep.subr.mxu0 0.0
      %964 = vmatpush1.msra.mxu0 0.0
      %965 = vmatprep.subr.mxu0 0.0
      %966 = vmatpush1.msra.mxu0 0.0
      %967 = vmatprep.subr.mxu0 0.0
      %968 = vmatpush1.msra.mxu0 0.0
      %969 = vmatprep.subr.mxu0 0.0
      %970 = vmatpush1.msra.mxu0 0.0
      %971 = vmatprep.subr.mxu0 0.0
      %972 = vmatpush1.msra.mxu0 0.0
      %973 = vmatprep.subr.mxu0 0.0
      %974 = vmatpush1.msra.mxu0 0.0
      %975 = vmatprep.subr.mxu0 0.0
      %976 = vmatpush1.msra.mxu0 0.0
      %977 = vmatprep.subr.mxu0 0.0
      %978 = vmatpush1.msra.mxu0 0.0
      %979 = vmatprep.subr.mxu0 0.0
      %980 = vmatpush1.msra.mxu0 %v941
      %981 = vmatprep.subr.mxu0 0.0
      %982 = vmatpush1.msra.mxu0 %v939
      %983 = vmatprep.subr.mxu0 0.0
      %984 = vmatpush1.msra.mxu0 %v937
      %985 = vmatprep.subr.mxu0 0.0
      %986 = vmatpush1.msra.mxu0 %v935
      %987 = vmatprep.subr.mxu0 0.0
      %988 = vmatpush2.msra.mxu0 0.0
      %989 = vmatprep.subr.mxu0 0.0
      %990 = vmatpush2.msra.mxu0 0.0
      %991 = vmatprep.subr.mxu0 0.0
      %992 = vmatpush2.msra.mxu0 0.0
      %993 = vmatprep.subr.mxu0 0.0
      %994 = vmatpush2.msra.mxu0 0.0
      %995 = vmatprep.subr.mxu0 0.0
      %996 = vmatpush2.msra.mxu0 0.0
      %997 = vmatprep.subr.mxu0 0.0
      %998 = vmatpush2.msra.mxu0 0.0
      %999 = vmatprep.subr.mxu0 0.0
      %1000 = vmatpush2.msra.mxu0 0.0
      %1001 = vmatprep.subr.mxu0 0.0
      %1002 = vmatpush2.msra.mxu0 0.0
      %1003 = vmatprep.subr.mxu0 0.0
      %1004 = vmatpush2.msra.mxu0 0.0
      %1005 = vmatprep.subr.mxu0 0.0
      %1006 = vmatpush2.msra.mxu0 0.0
      %1007 = vmatprep.subr.mxu0 0.0
      %1008 = vmatpush2.msra.mxu0 0.0
      %1009 = vmatprep.subr.mxu0 0.0
      %1010 = vmatpush2.msra.mxu0 0.0
      %1011 = vmatprep.subr.mxu0 0.0
      %1012 = vmatpush2.msra.mxu0 0.0
      %1013 = vmatprep.subr.mxu0 0.0
      %1014 = vmatpush2.msra.mxu0 0.0
      %1015 = vmatprep.subr.mxu0 0.0
      %1016 = vmatpush2.msra.mxu0 0.0
      %1017 = vmatprep.subr.mxu0 0.0
      %1018 = vmatpush2.msra.mxu0 0.0
      %1019 = vmatprep.mubr.f32.mxu0 0.0
      %1020 = vmatmul.mubr.f32.gmra.mxu0 %v950
      %v1021 = vpop.f32.mrf.mxu0
      %v1022 = vadd.f32 %v947, %v1021
      %v1023 = vpop.f32.mrf.mxu0
      %1024 = vmatprep.mubr.f32.mxu0 0.0
      %1025 = vmatmul.mubr.f32.gmra.mxu0 %v953
      %v1026 = vpop.f32.mrf.mxu0
      %v1027 = vadd.f32 %v947, %v1026
      %v1028 = vpop.f32.mrf.mxu0
      %1029 = vdwg.mxu0
      %v1030 = vld [vmem:[%s2] sm:$0xff]
      %v1031 = vld [vmem:[%s2 + $0x8] sm:$0xff]
      %v1032 = vld [vmem:[%s2 + $0x10] sm:$0xff]
      %v1033 = vld [vmem:[%s2 + $0x18] sm:$0xff]
      %v1034 = vld [vmem:[%s3] sm:$0x1]
      %1037 = vrot.lane.b32.xlu0 %v922, 120
      %v1038 = vpop.permute.xlu0 %1037
      %1039 = vrot.lane.b32.xlu0 %v927, 120
      %v1040 = vpop.permute.xlu0 %1039
      %1041 = vrot.lane.b32.xlu0 %v922, 112
      %v1042 = vpop.permute.xlu0 %1041
      %1043 = vrot.lane.b32.xlu0 %v927, 112
      %v1044 = vpop.permute.xlu0 %1043
      %1045 = vrot.lane.b32.xlu0 %v922, 104
      %v1046 = vpop.permute.xlu0 %1045
      %1047 = vrot.lane.b32.xlu0 %v927, 104
      %v1048 = vpop.permute.xlu0 %1047
      %1051 = vrot.lane.b32.xlu0 %v1022, 120
      %v1052 = vpop.permute.xlu0 %1051
      %1053 = vrot.lane.b32.xlu0 %v1027, 120
      %v1054 = vpop.permute.xlu0 %1053
      %1057 = vrot.lane.b32.xlu0 %v1022, 112
      %v1058 = vpop.permute.xlu0 %1057
      %1059 = vrot.lane.b32.xlu0 %v1027, 112
      %v1060 = vpop.permute.xlu0 %1059
      %1063 = vrot.lane.b32.xlu0 %v1022, 104
      %v1064 = vpop.permute.xlu0 %1063
      %1065 = vrot.lane.b32.xlu0 %v1027, 104
      %v1066 = vpop.permute.xlu0 %1065
      %1069 = vrot.lane.b32.xlu0 %v922, 96
      %v1070 = vpop.permute.xlu0 %1069
      %vm1071 = vcmask 64512
      %v1072 = vsel %vm1071, %v922, 0
      %v1074 = vsel %vm1071, %v1070, 0
      %1076 = vmatprep.subr.mxu0 0.0
      %1077 = vmatpush1.xpose.msra.mxu0 0.0
      %1078 = vmatprep.subr.mxu0 0.0
      %1079 = vmatpush1.xpose.msra.mxu0 0.0
      %1080 = vmatprep.subr.mxu0 0.0
      %1081 = vmatpush1.xpose.msra.mxu0 0.0
      %1082 = vmatprep.subr.mxu0 0.0
      %1083 = vmatpush1.xpose.msra.mxu0 0.0
      %1084 = vmatprep.subr.mxu0 0.0
      %1085 = vmatpush1.xpose.msra.mxu0 0.0
      %1086 = vmatprep.subr.mxu0 0.0
      %1087 = vmatpush1.xpose.msra.mxu0 0.0
      %1088 = vmatprep.subr.mxu0 0.0
      %1089 = vmatpush1.xpose.msra.mxu0 0.0
      %1090 = vmatprep.subr.mxu0 0.0
      %1091 = vmatpush1.xpose.msra.mxu0 0.0
      %1092 = vmatprep.subr.mxu0 0.0
      %1093 = vmatpush1.xpose.msra.mxu0 0.0
      %1094 = vmatprep.subr.mxu0 0.0
      %1095 = vmatpush1.xpose.msra.mxu0 0.0
      %1096 = vmatprep.subr.mxu0 0.0
      %1097 = vmatpush1.xpose.msra.mxu0 0.0
      %1098 = vmatprep.subr.mxu0 0.0
      %1099 = vmatpush1.xpose.msra.mxu0 0.0
      %1100 = vmatprep.subr.mxu0 0.0
      %1101 = vmatpush1.xpose.msra.mxu0 0.0
      %1102 = vmatprep.subr.mxu0 0.0
      %1103 = vmatpush1.xpose.msra.mxu0 0.0
      %1104 = vmatprep.subr.mxu0 0.0
      %1105 = vmatpush1.xpose.msra.mxu0 0.0
      %1106 = vmatprep.subr.mxu0 0.0
      %1107 = vmatpush1.xpose.msra.mxu0 %v1074
      %1108 = vmatprep.subr.mxu0 0.0
      %1109 = vmatpush2.xpose.msra.mxu0 0.0
      %1110 = vmatprep.subr.mxu0 0.0
      %1111 = vmatpush2.xpose.msra.mxu0 0.0
      %1112 = vmatprep.subr.mxu0 0.0
      %1113 = vmatpush2.xpose.msra.mxu0 0.0
      %1114 = vmatprep.subr.mxu0 0.0
      %1115 = vmatpush2.xpose.msra.mxu0 0.0
      %1116 = vmatprep.subr.mxu0 0.0
      %1117 = vmatpush2.xpose.msra.mxu0 0.0
      %1118 = vmatprep.subr.mxu0 0.0
      %1119 = vmatpush2.xpose.msra.mxu0 0.0
      %1120 = vmatprep.subr.mxu0 0.0
      %1121 = vmatpush2.xpose.msra.mxu0 0.0
      %1122 = vmatprep.subr.mxu0 0.0
      %1123 = vmatpush2.xpose.msra.mxu0 0.0
      %1124 = vmatprep.subr.mxu0 0.0
      %1125 = vmatpush2.xpose.msra.mxu0 0.0
      %1126 = vmatprep.subr.mxu0 0.0
      %1127 = vmatpush2.xpose.msra.mxu0 0.0
      %1128 = vmatprep.subr.mxu0 0.0
      %1129 = vmatpush2.xpose.msra.mxu0 0.0
      %1130 = vmatprep.subr.mxu0 0.0
      %1131 = vmatpush2.xpose.msra.mxu0 0.0
      %1132 = vmatprep.subr.mxu0 0.0
      %1133 = vmatpush2.xpose.msra.mxu0 0.0
      %1134 = vmatprep.subr.mxu0 0.0
      %1135 = vmatpush2.xpose.msra.mxu0 0.0
      %1136 = vmatprep.subr.mxu0 0.0
      %1137 = vmatpush2.xpose.msra.mxu0 0.0
      %1138 = vmatprep.subr.mxu0 0.0
      %1139 = vmatpush2.xpose.msra.mxu0 0.0
      %1140 = vmatprep.mubr.f32.mxu0 0.0
      %1141 = vmatmul.mubr.f32.gmra.mxu0 %v1072
      %v1142 = vpop.f32.mrf.mxu0
      %v1143 = vadd.f32 0.0, %v1142
      %v1144 = vpop.f32.mrf.mxu0
      %1145 = vdwg.mxu0
      %1146 = vrot.lane.b32.xlu0 %v1038, 96
      %v1147 = vpop.permute.xlu0 %1146
      %v1148 = vsel %vm1071, %v1038, 0
      %v1150 = vsel %vm1071, %v1147, 0
      %1152 = vmatprep.subr.mxu0 0.0
      %1153 = vmatpush1.xpose.msra.mxu0 0.0
      %1154 = vmatprep.subr.mxu0 0.0
      %1155 = vmatpush1.xpose.msra.mxu0 0.0
      %1156 = vmatprep.subr.mxu0 0.0
      %1157 = vmatpush1.xpose.msra.mxu0 0.0
      %1158 = vmatprep.subr.mxu0 0.0
      %1159 = vmatpush1.xpose.msra.mxu0 0.0
      %1160 = vmatprep.subr.mxu0 0.0
      %1161 = vmatpush1.xpose.msra.mxu0 0.0
      %1162 = vmatprep.subr.mxu0 0.0
      %1163 = vmatpush1.xpose.msra.mxu0 0.0
      %1164 = vmatprep.subr.mxu0 0.0
      %1165 = vmatpush1.xpose.msra.mxu0 0.0
      %1166 = vmatprep.subr.mxu0 0.0
      %1167 = vmatpush1.xpose.msra.mxu0 0.0
      %1168 = vmatprep.subr.mxu0 0.0
      %1169 = vmatpush1.xpose.msra.mxu0 0.0
      %1170 = vmatprep.subr.mxu0 0.0
      %1171 = vmatpush1.xpose.msra.mxu0 0.0
      %1172 = vmatprep.subr.mxu0 0.0
      %1173 = vmatpush1.xpose.msra.mxu0 0.0
      %1174 = vmatprep.subr.mxu0 0.0
      %1175 = vmatpush1.xpose.msra.mxu0 0.0
      %1176 = vmatprep.subr.mxu0 0.0
      %1177 = vmatpush1.xpose.msra.mxu0 0.0
      %1178 = vmatprep.subr.mxu0 0.0
      %1179 = vmatpush1.xpose.msra.mxu0 0.0
      %1180 = vmatprep.subr.mxu0 0.0
      %1181 = vmatpush1.xpose.msra.mxu0 0.0
      %1182 = vmatprep.subr.mxu0 0.0
      %1183 = vmatpush1.xpose.msra.mxu0 %v1150
      %1184 = vmatprep.subr.mxu0 0.0
      %1185 = vmatpush2.xpose.msra.mxu0 0.0
      %1186 = vmatprep.subr.mxu0 0.0
      %1187 = vmatpush2.xpose.msra.mxu0 0.0
      %1188 = vmatprep.subr.mxu0 0.0
      %1189 = vmatpush2.xpose.msra.mxu0 0.0
      %1190 = vmatprep.subr.mxu0 0.0
      %1191 = vmatpush2.xpose.msra.mxu0 0.0
      %1192 = vmatprep.subr.mxu0 0.0
      %1193 = vmatpush2.xpose.msra.mxu0 0.0
      %1194 = vmatprep.subr.mxu0 0.0
      %1195 = vmatpush2.xpose.msra.mxu0 0.0
      %1196 = vmatprep.subr.mxu0 0.0
      %1197 = vmatpush2.xpose.msra.mxu0 0.0
      %1198 = vmatprep.subr.mxu0 0.0
      %1199 = vmatpush2.xpose.msra.mxu0 0.0
      %1200 = vmatprep.subr.mxu0 0.0
      %1201 = vmatpush2.xpose.msra.mxu0 0.0
      %1202 = vmatprep.subr.mxu0 0.0
      %1203 = vmatpush2.xpose.msra.mxu0 0.0
      %1204 = vmatprep.subr.mxu0 0.0
      %1205 = vmatpush2.xpose.msra.mxu0 0.0
      %1206 = vmatprep.subr.mxu0 0.0
      %1207 = vmatpush2.xpose.msra.mxu0 0.0
      %1208 = vmatprep.subr.mxu0 0.0
      %1209 = vmatpush2.xpose.msra.mxu0 0.0
      %1210 = vmatprep.subr.mxu0 0.0
      %1211 = vmatpush2.xpose.msra.mxu0 0.0
      %1212 = vmatprep.subr.mxu0 0.0
      %1213 = vmatpush2.xpose.msra.mxu0 0.0
      %1214 = vmatprep.subr.mxu0 0.0
      %1215 = vmatpush2.xpose.msra.mxu0 0.0
      %1216 = vmatprep.mubr.f32.mxu0 0.0
      %1217 = vmatmul.mubr.f32.gmra.mxu0 %v1148
      %v1218 = vpop.f32.mrf.mxu0
      %v1219 = vadd.f32 0.0, %v1218
      %v1220 = vpop.f32.mrf.mxu0
      %1221 = vdwg.mxu0
      %1222 = vrot.lane.b32.xlu0 %v1042, 96
      %v1223 = vpop.permute.xlu0 %1222
      %v1224 = vsel %vm1071, %v1042, 0
      %v1226 = vsel %vm1071, %v1223, 0
      %1228 = vmatprep.subr.mxu0 0.0
      %1229 = vmatpush1.xpose.msra.mxu0 0.0
      %1230 = vmatprep.subr.mxu0 0.0
      %1231 = vmatpush1.xpose.msra.mxu0 0.0
      %1232 = vmatprep.subr.mxu0 0.0
      %1233 = vmatpush1.xpose.msra.mxu0 0.0
      %1234 = vmatprep.subr.mxu0 0.0
      %1235 = vmatpush1.xpose.msra.mxu0 0.0
      %1236 = vmatprep.subr.mxu0 0.0
      %1237 = vmatpush1.xpose.msra.mxu0 0.0
      %1238 = vmatprep.subr.mxu0 0.0
      %1239 = vmatpush1.xpose.msra.mxu0 0.0
      %1240 = vmatprep.subr.mxu0 0.0
      %1241 = vmatpush1.xpose.msra.mxu0 0.0
      %1242 = vmatprep.subr.mxu0 0.0
      %1243 = vmatpush1.xpose.msra.mxu0 0.0
      %1244 = vmatprep.subr.mxu0 0.0
      %1245 = vmatpush1.xpose.msra.mxu0 0.0
      %1246 = vmatprep.subr.mxu0 0.0
      %1247 = vmatpush1.xpose.msra.mxu0 0.0
      %1248 = vmatprep.subr.mxu0 0.0
      %1249 = vmatpush1.xpose.msra.mxu0 0.0
      %1250 = vmatprep.subr.mxu0 0.0
      %1251 = vmatpush1.xpose.msra.mxu0 0.0
      %1252 = vmatprep.subr.mxu0 0.0
      %1253 = vmatpush1.xpose.msra.mxu0 0.0
      %1254 = vmatprep.subr.mxu0 0.0
      %1255 = vmatpush1.xpose.msra.mxu0 0.0
      %1256 = vmatprep.subr.mxu0 0.0
      %1257 = vmatpush1.xpose.msra.mxu0 0.0
      %1258 = vmatprep.subr.mxu0 0.0
      %1259 = vmatpush1.xpose.msra.mxu0 %v1226
      %1260 = vmatprep.subr.mxu0 0.0
      %1261 = vmatpush2.xpose.msra.mxu0 0.0
      %1262 = vmatprep.subr.mxu0 0.0
      %1263 = vmatpush2.xpose.msra.mxu0 0.0
      %1264 = vmatprep.subr.mxu0 0.0
      %1265 = vmatpush2.xpose.msra.mxu0 0.0
      %1266 = vmatprep.subr.mxu0 0.0
      %1267 = vmatpush2.xpose.msra.mxu0 0.0
      %1268 = vmatprep.subr.mxu0 0.0
      %1269 = vmatpush2.xpose.msra.mxu0 0.0
      %1270 = vmatprep.subr.mxu0 0.0
      %1271 = vmatpush2.xpose.msra.mxu0 0.0
      %1272 = vmatprep.subr.mxu0 0.0
      %1273 = vmatpush2.xpose.msra.mxu0 0.0
      %1274 = vmatprep.subr.mxu0 0.0
      %1275 = vmatpush2.xpose.msra.mxu0 0.0
      %1276 = vmatprep.subr.mxu0 0.0
      %1277 = vmatpush2.xpose.msra.mxu0 0.0
      %1278 = vmatprep.subr.mxu0 0.0
      %1279 = vmatpush2.xpose.msra.mxu0 0.0
      %1280 = vmatprep.subr.mxu0 0.0
      %1281 = vmatpush2.xpose.msra.mxu0 0.0
      %1282 = vmatprep.subr.mxu0 0.0
      %1283 = vmatpush2.xpose.msra.mxu0 0.0
      %1284 = vmatprep.subr.mxu0 0.0
      %1285 = vmatpush2.xpose.msra.mxu0 0.0
      %1286 = vmatprep.subr.mxu0 0.0
      %1287 = vmatpush2.xpose.msra.mxu0 0.0
      %1288 = vmatprep.subr.mxu0 0.0
      %1289 = vmatpush2.xpose.msra.mxu0 0.0
      %1290 = vmatprep.subr.mxu0 0.0
      %1291 = vmatpush2.xpose.msra.mxu0 0.0
      %1292 = vmatprep.mubr.f32.mxu0 0.0
      %1293 = vmatmul.mubr.f32.gmra.mxu0 %v1224
      %v1294 = vpop.f32.mrf.mxu0
      %v1295 = vadd.f32 0.0, %v1294
      %v1296 = vpop.f32.mrf.mxu0
      %1297 = vdwg.mxu0
      %1298 = vrot.lane.b32.xlu0 %v1046, 96
      %v1299 = vpop.permute.xlu0 %1298
      %v1300 = vsel %vm1071, %v1046, 0
      %v1302 = vsel %vm1071, %v1299, 0
      %1304 = vmatprep.subr.mxu0 0.0
      %1305 = vmatpush1.xpose.msra.mxu0 0.0
      %1306 = vmatprep.subr.mxu0 0.0
      %1307 = vmatpush1.xpose.msra.mxu0 0.0
      %1308 = vmatprep.subr.mxu0 0.0
      %1309 = vmatpush1.xpose.msra.mxu0 0.0
      %1310 = vmatprep.subr.mxu0 0.0
      %1311 = vmatpush1.xpose.msra.mxu0 0.0
      %1312 = vmatprep.subr.mxu0 0.0
      %1313 = vmatpush1.xpose.msra.mxu0 0.0
      %1314 = vmatprep.subr.mxu0 0.0
      %1315 = vmatpush1.xpose.msra.mxu0 0.0
      %1316 = vmatprep.subr.mxu0 0.0
      %1317 = vmatpush1.xpose.msra.mxu0 0.0
      %1318 = vmatprep.subr.mxu0 0.0
      %1319 = vmatpush1.xpose.msra.mxu0 0.0
      %1320 = vmatprep.subr.mxu0 0.0
      %1321 = vmatpush1.xpose.msra.mxu0 0.0
      %1322 = vmatprep.subr.mxu0 0.0
      %1323 = vmatpush1.xpose.msra.mxu0 0.0
      %1324 = vmatprep.subr.mxu0 0.0
      %1325 = vmatpush1.xpose.msra.mxu0 0.0
      %1326 = vmatprep.subr.mxu0 0.0
      %1327 = vmatpush1.xpose.msra.mxu0 0.0
      %1328 = vmatprep.subr.mxu0 0.0
      %1329 = vmatpush1.xpose.msra.mxu0 0.0
      %1330 = vmatprep.subr.mxu0 0.0
      %1331 = vmatpush1.xpose.msra.mxu0 0.0
      %1332 = vmatprep.subr.mxu0 0.0
      %1333 = vmatpush1.xpose.msra.mxu0 0.0
      %1334 = vmatprep.subr.mxu0 0.0
      %1335 = vmatpush1.xpose.msra.mxu0 %v1302
      %1336 = vmatprep.subr.mxu0 0.0
      %1337 = vmatpush2.xpose.msra.mxu0 0.0
      %1338 = vmatprep.subr.mxu0 0.0
      %1339 = vmatpush2.xpose.msra.mxu0 0.0
      %1340 = vmatprep.subr.mxu0 0.0
      %1341 = vmatpush2.xpose.msra.mxu0 0.0
      %1342 = vmatprep.subr.mxu0 0.0
      %1343 = vmatpush2.xpose.msra.mxu0 0.0
      %1344 = vmatprep.subr.mxu0 0.0
      %1345 = vmatpush2.xpose.msra.mxu0 0.0
      %1346 = vmatprep.subr.mxu0 0.0
      %1347 = vmatpush2.xpose.msra.mxu0 0.0
      %1348 = vmatprep.subr.mxu0 0.0
      %1349 = vmatpush2.xpose.msra.mxu0 0.0
      %1350 = vmatprep.subr.mxu0 0.0
      %1351 = vmatpush2.xpose.msra.mxu0 0.0
      %1352 = vmatprep.subr.mxu0 0.0
      %1353 = vmatpush2.xpose.msra.mxu0 0.0
      %1354 = vmatprep.subr.mxu0 0.0
      %1355 = vmatpush2.xpose.msra.mxu0 0.0
      %1356 = vmatprep.subr.mxu0 0.0
      %1357 = vmatpush2.xpose.msra.mxu0 0.0
      %1358 = vmatprep.subr.mxu0 0.0
      %1359 = vmatpush2.xpose.msra.mxu0 0.0
      %1360 = vmatprep.subr.mxu0 0.0
      %1361 = vmatpush2.xpose.msra.mxu0 0.0
      %1362 = vmatprep.subr.mxu0 0.0
      %1363 = vmatpush2.xpose.msra.mxu0 0.0
      %1364 = vmatprep.subr.mxu0 0.0
      %1365 = vmatpush2.xpose.msra.mxu0 0.0
      %1366 = vmatprep.subr.mxu0 0.0
      %1367 = vmatpush2.xpose.msra.mxu0 0.0
      %1368 = vmatprep.mubr.f32.mxu0 0.0
      %1369 = vmatmul.mubr.f32.gmra.mxu0 %v1300
      %v1370 = vpop.f32.mrf.mxu0
      %v1371 = vadd.f32 0.0, %v1370
      %v1372 = vpop.f32.mrf.mxu0
      %1373 = vdwg.mxu0
      %1374 = vrot.lane.b32.xlu0 %v927, 96
      %v1375 = vpop.permute.xlu0 %1374
      %v1376 = vsel %vm1071, %v927, 0
      %v1378 = vsel %vm1071, %v1375, 0
      %1380 = vmatprep.subr.mxu0 0.0
      %1381 = vmatpush1.xpose.msra.mxu0 0.0
      %1382 = vmatprep.subr.mxu0 0.0
      %1383 = vmatpush1.xpose.msra.mxu0 0.0
      %1384 = vmatprep.subr.mxu0 0.0
      %1385 = vmatpush1.xpose.msra.mxu0 0.0
      %1386 = vmatprep.subr.mxu0 0.0
      %1387 = vmatpush1.xpose.msra.mxu0 0.0
      %1388 = vmatprep.subr.mxu0 0.0
      %1389 = vmatpush1.xpose.msra.mxu0 0.0
      %1390 = vmatprep.subr.mxu0 0.0
      %1391 = vmatpush1.xpose.msra.mxu0 0.0
      %1392 = vmatprep.subr.mxu0 0.0
      %1393 = vmatpush1.xpose.msra.mxu0 0.0
      %1394 = vmatprep.subr.mxu0 0.0
      %1395 = vmatpush1.xpose.msra.mxu0 0.0
      %1396 = vmatprep.subr.mxu0 0.0
      %1397 = vmatpush1.xpose.msra.mxu0 0.0
      %1398 = vmatprep.subr.mxu0 0.0
      %1399 = vmatpush1.xpose.msra.mxu0 0.0
      %1400 = vmatprep.subr.mxu0 0.0
      %1401 = vmatpush1.xpose.msra.mxu0 0.0
      %1402 = vmatprep.subr.mxu0 0.0
      %1403 = vmatpush1.xpose.msra.mxu0 0.0
      %1404 = vmatprep.subr.mxu0 0.0
      %1405 = vmatpush1.xpose.msra.mxu0 0.0
      %1406 = vmatprep.subr.mxu0 0.0
      %1407 = vmatpush1.xpose.msra.mxu0 0.0
      %1408 = vmatprep.subr.mxu0 0.0
      %1409 = vmatpush1.xpose.msra.mxu0 0.0
      %1410 = vmatprep.subr.mxu0 0.0
      %1411 = vmatpush1.xpose.msra.mxu0 %v1378
      %1412 = vmatprep.subr.mxu0 0.0
      %1413 = vmatpush2.xpose.msra.mxu0 0.0
      %1414 = vmatprep.subr.mxu0 0.0
      %1415 = vmatpush2.xpose.msra.mxu0 0.0
      %1416 = vmatprep.subr.mxu0 0.0
      %1417 = vmatpush2.xpose.msra.mxu0 0.0
      %1418 = vmatprep.subr.mxu0 0.0
      %1419 = vmatpush2.xpose.msra.mxu0 0.0
      %1420 = vmatprep.subr.mxu0 0.0
      %1421 = vmatpush2.xpose.msra.mxu0 0.0
      %1422 = vmatprep.subr.mxu0 0.0
      %1423 = vmatpush2.xpose.msra.mxu0 0.0
      %1424 = vmatprep.subr.mxu0 0.0
      %1425 = vmatpush2.xpose.msra.mxu0 0.0
      %1426 = vmatprep.subr.mxu0 0.0
      %1427 = vmatpush2.xpose.msra.mxu0 0.0
      %1428 = vmatprep.subr.mxu0 0.0
      %1429 = vmatpush2.xpose.msra.mxu0 0.0
      %1430 = vmatprep.subr.mxu0 0.0
      %1431 = vmatpush2.xpose.msra.mxu0 0.0
      %1432 = vmatprep.subr.mxu0 0.0
      %1433 = vmatpush2.xpose.msra.mxu0 0.0
      %1434 = vmatprep.subr.mxu0 0.0
      %1435 = vmatpush2.xpose.msra.mxu0 0.0
      %1436 = vmatprep.subr.mxu0 0.0
      %1437 = vmatpush2.xpose.msra.mxu0 0.0
      %1438 = vmatprep.subr.mxu0 0.0
      %1439 = vmatpush2.xpose.msra.mxu0 0.0
      %1440 = vmatprep.subr.mxu0 0.0
      %1441 = vmatpush2.xpose.msra.mxu0 0.0
      %1442 = vmatprep.subr.mxu0 0.0
      %1443 = vmatpush2.xpose.msra.mxu0 0.0
      %1444 = vmatprep.mubr.f32.mxu0 0.0
      %1445 = vmatmul.mubr.f32.gmra.mxu0 %v1376
      %v1446 = vpop.f32.mrf.mxu0
      %v1447 = vadd.f32 0.0, %v1446
      %v1448 = vpop.f32.mrf.mxu0
      %1449 = vdwg.mxu0
      %1450 = vrot.lane.b32.xlu0 %v1040, 96
      %v1451 = vpop.permute.xlu0 %1450
      %v1452 = vsel %vm1071, %v1040, 0
      %v1454 = vsel %vm1071, %v1451, 0
      %1456 = vmatprep.subr.mxu0 0.0
      %1457 = vmatpush1.xpose.msra.mxu0 0.0
      %1458 = vmatprep.subr.mxu0 0.0
      %1459 = vmatpush1.xpose.msra.mxu0 0.0
      %1460 = vmatprep.subr.mxu0 0.0
      %1461 = vmatpush1.xpose.msra.mxu0 0.0
      %1462 = vmatprep.subr.mxu0 0.0
      %1463 = vmatpush1.xpose.msra.mxu0 0.0
      %1464 = vmatprep.subr.mxu0 0.0
      %1465 = vmatpush1.xpose.msra.mxu0 0.0
      %1466 = vmatprep.subr.mxu0 0.0
      %1467 = vmatpush1.xpose.msra.mxu0 0.0
      %1468 = vmatprep.subr.mxu0 0.0
      %1469 = vmatpush1.xpose.msra.mxu0 0.0
      %1470 = vmatprep.subr.mxu0 0.0
      %1471 = vmatpush1.xpose.msra.mxu0 0.0
      %1472 = vmatprep.subr.mxu0 0.0
      %1473 = vmatpush1.xpose.msra.mxu0 0.0
      %1474 = vmatprep.subr.mxu0 0.0
      %1475 = vmatpush1.xpose.msra.mxu0 0.0
      %1476 = vmatprep.subr.mxu0 0.0
      %1477 = vmatpush1.xpose.msra.mxu0 0.0
      %1478 = vmatprep.subr.mxu0 0.0
      %1479 = vmatpush1.xpose.msra.mxu0 0.0
      %1480 = vmatprep.subr.mxu0 0.0
      %1481 = vmatpush1.xpose.msra.mxu0 0.0
      %1482 = vmatprep.subr.mxu0 0.0
      %1483 = vmatpush1.xpose.msra.mxu0 0.0
      %1484 = vmatprep.subr.mxu0 0.0
      %1485 = vmatpush1.xpose.msra.mxu0 0.0
      %1486 = vmatprep.subr.mxu0 0.0
      %1487 = vmatpush1.xpose.msra.mxu0 %v1454
      %1488 = vmatprep.subr.mxu0 0.0
      %1489 = vmatpush2.xpose.msra.mxu0 0.0
      %1490 = vmatprep.subr.mxu0 0.0
      %1491 = vmatpush2.xpose.msra.mxu0 0.0
      %1492 = vmatprep.subr.mxu0 0.0
      %1493 = vmatpush2.xpose.msra.mxu0 0.0
      %1494 = vmatprep.subr.mxu0 0.0
      %1495 = vmatpush2.xpose.msra.mxu0 0.0
      %1496 = vmatprep.subr.mxu0 0.0
      %1497 = vmatpush2.xpose.msra.mxu0 0.0
      %1498 = vmatprep.subr.mxu0 0.0
      %1499 = vmatpush2.xpose.msra.mxu0 0.0
      %1500 = vmatprep.subr.mxu0 0.0
      %1501 = vmatpush2.xpose.msra.mxu0 0.0
      %1502 = vmatprep.subr.mxu0 0.0
      %1503 = vmatpush2.xpose.msra.mxu0 0.0
      %1504 = vmatprep.subr.mxu0 0.0
      %1505 = vmatpush2.xpose.msra.mxu0 0.0
      %1506 = vmatprep.subr.mxu0 0.0
      %1507 = vmatpush2.xpose.msra.mxu0 0.0
      %1508 = vmatprep.subr.mxu0 0.0
      %1509 = vmatpush2.xpose.msra.mxu0 0.0
      %1510 = vmatprep.subr.mxu0 0.0
      %1511 = vmatpush2.xpose.msra.mxu0 0.0
      %1512 = vmatprep.subr.mxu0 0.0
      %1513 = vmatpush2.xpose.msra.mxu0 0.0
      %1514 = vmatprep.subr.mxu0 0.0
      %1515 = vmatpush2.xpose.msra.mxu0 0.0
      %1516 = vmatprep.subr.mxu0 0.0
      %1517 = vmatpush2.xpose.msra.mxu0 0.0
      %1518 = vmatprep.subr.mxu0 0.0
      %1519 = vmatpush2.xpose.msra.mxu0 0.0
      %1520 = vmatprep.mubr.f32.mxu0 0.0
      %1521 = vmatmul.mubr.f32.gmra.mxu0 %v1452
      %v1522 = vpop.f32.mrf.mxu0
      %v1523 = vadd.f32 0.0, %v1522
      %v1524 = vpop.f32.mrf.mxu0
      %1525 = vdwg.mxu0
      %1526 = vrot.lane.b32.xlu0 %v1044, 96
      %v1527 = vpop.permute.xlu0 %1526
      %v1528 = vsel %vm1071, %v1044, 0
      %v1530 = vsel %vm1071, %v1527, 0
      %1532 = vmatprep.subr.mxu0 0.0
      %1533 = vmatpush1.xpose.msra.mxu0 0.0
      %1534 = vmatprep.subr.mxu0 0.0
      %1535 = vmatpush1.xpose.msra.mxu0 0.0
      %1536 = vmatprep.subr.mxu0 0.0
      %1537 = vmatpush1.xpose.msra.mxu0 0.0
      %1538 = vmatprep.subr.mxu0 0.0
      %1539 = vmatpush1.xpose.msra.mxu0 0.0
      %1540 = vmatprep.subr.mxu0 0.0
      %1541 = vmatpush1.xpose.msra.mxu0 0.0
      %1542 = vmatprep.subr.mxu0 0.0
      %1543 = vmatpush1.xpose.msra.mxu0 0.0
      %1544 = vmatprep.subr.mxu0 0.0
      %1545 = vmatpush1.xpose.msra.mxu0 0.0
      %1546 = vmatprep.subr.mxu0 0.0
      %1547 = vmatpush1.xpose.msra.mxu0 0.0
      %1548 = vmatprep.subr.mxu0 0.0
      %1549 = vmatpush1.xpose.msra.mxu0 0.0
      %1550 = vmatprep.subr.mxu0 0.0
      %1551 = vmatpush1.xpose.msra.mxu0 0.0
      %1552 = vmatprep.subr.mxu0 0.0
      %1553 = vmatpush1.xpose.msra.mxu0 0.0
      %1554 = vmatprep.subr.mxu0 0.0
      %1555 = vmatpush1.xpose.msra.mxu0 0.0
      %1556 = vmatprep.subr.mxu0 0.0
      %1557 = vmatpush1.xpose.msra.mxu0 0.0
      %1558 = vmatprep.subr.mxu0 0.0
      %1559 = vmatpush1.xpose.msra.mxu0 0.0
      %1560 = vmatprep.subr.mxu0 0.0
      %1561 = vmatpush1.xpose.msra.mxu0 0.0
      %1562 = vmatprep.subr.mxu0 0.0
      %1563 = vmatpush1.xpose.msra.mxu0 %v1530
      %1564 = vmatprep.subr.mxu0 0.0
      %1565 = vmatpush2.xpose.msra.mxu0 0.0
      %1566 = vmatprep.subr.mxu0 0.0
      %1567 = vmatpush2.xpose.msra.mxu0 0.0
      %1568 = vmatprep.subr.mxu0 0.0
      %1569 = vmatpush2.xpose.msra.mxu0 0.0
      %1570 = vmatprep.subr.mxu0 0.0
      %1571 = vmatpush2.xpose.msra.mxu0 0.0
      %1572 = vmatprep.subr.mxu0 0.0
      %1573 = vmatpush2.xpose.msra.mxu0 0.0
      %1574 = vmatprep.subr.mxu0 0.0
      %1575 = vmatpush2.xpose.msra.mxu0 0.0
      %1576 = vmatprep.subr.mxu0 0.0
      %1577 = vmatpush2.xpose.msra.mxu0 0.0
      %1578 = vmatprep.subr.mxu0 0.0
      %1579 = vmatpush2.xpose.msra.mxu0 0.0
      %1580 = vmatprep.subr.mxu0 0.0
      %1581 = vmatpush2.xpose.msra.mxu0 0.0
      %1582 = vmatprep.subr.mxu0 0.0
      %1583 = vmatpush2.xpose.msra.mxu0 0.0
      %1584 = vmatprep.subr.mxu0 0.0
      %1585 = vmatpush2.xpose.msra.mxu0 0.0
      %1586 = vmatprep.subr.mxu0 0.0
      %1587 = vmatpush2.xpose.msra.mxu0 0.0
      %1588 = vmatprep.subr.mxu0 0.0
      %1589 = vmatpush2.xpose.msra.mxu0 0.0
      %1590 = vmatprep.subr.mxu0 0.0
      %1591 = vmatpush2.xpose.msra.mxu0 0.0
      %1592 = vmatprep.subr.mxu0 0.0
      %1593 = vmatpush2.xpose.msra.mxu0 0.0
      %1594 = vmatprep.subr.mxu0 0.0
      %1595 = vmatpush2.xpose.msra.mxu0 0.0
      %1596 = vmatprep.mubr.f32.mxu0 0.0
      %1597 = vmatmul.mubr.f32.gmra.mxu0 %v1528
      %v1598 = vpop.f32.mrf.mxu0
      %v1599 = vadd.f32 0.0, %v1598
      %v1600 = vpop.f32.mrf.mxu0
      %1601 = vdwg.mxu0
      %1602 = vrot.lane.b32.xlu0 %v1048, 96
      %v1603 = vpop.permute.xlu0 %1602
      %v1604 = vsel %vm1071, %v1048, 0
      %v1606 = vsel %vm1071, %v1603, 0
      %1608 = vmatprep.subr.mxu0 0.0
      %1609 = vmatpush1.xpose.msra.mxu0 0.0
      %1610 = vmatprep.subr.mxu0 0.0
      %1611 = vmatpush1.xpose.msra.mxu0 0.0
      %1612 = vmatprep.subr.mxu0 0.0
      %1613 = vmatpush1.xpose.msra.mxu0 0.0
      %1614 = vmatprep.subr.mxu0 0.0
      %1615 = vmatpush1.xpose.msra.mxu0 0.0
      %1616 = vmatprep.subr.mxu0 0.0
      %1617 = vmatpush1.xpose.msra.mxu0 0.0
      %1618 = vmatprep.subr.mxu0 0.0
      %1619 = vmatpush1.xpose.msra.mxu0 0.0
      %1620 = vmatprep.subr.mxu0 0.0
      %1621 = vmatpush1.xpose.msra.mxu0 0.0
      %1622 = vmatprep.subr.mxu0 0.0
      %1623 = vmatpush1.xpose.msra.mxu0 0.0
      %1624 = vmatprep.subr.mxu0 0.0
      %1625 = vmatpush1.xpose.msra.mxu0 0.0
      %1626 = vmatprep.subr.mxu0 0.0
      %1627 = vmatpush1.xpose.msra.mxu0 0.0
      %1628 = vmatprep.subr.mxu0 0.0
      %1629 = vmatpush1.xpose.msra.mxu0 0.0
      %1630 = vmatprep.subr.mxu0 0.0
      %1631 = vmatpush1.xpose.msra.mxu0 0.0
      %1632 = vmatprep.subr.mxu0 0.0
      %1633 = vmatpush1.xpose.msra.mxu0 0.0
      %1634 = vmatprep.subr.mxu0 0.0
      %1635 = vmatpush1.xpose.msra.mxu0 0.0
      %1636 = vmatprep.subr.mxu0 0.0
      %1637 = vmatpush1.xpose.msra.mxu0 0.0
      %1638 = vmatprep.subr.mxu0 0.0
      %1639 = vmatpush1.xpose.msra.mxu0 %v1606
      %1640 = vmatprep.subr.mxu0 0.0
      %1641 = vmatpush2.xpose.msra.mxu0 0.0
      %1642 = vmatprep.subr.mxu0 0.0
      %1643 = vmatpush2.xpose.msra.mxu0 0.0
      %1644 = vmatprep.subr.mxu0 0.0
      %1645 = vmatpush2.xpose.msra.mxu0 0.0
      %1646 = vmatprep.subr.mxu0 0.0
      %1647 = vmatpush2.xpose.msra.mxu0 0.0
      %1648 = vmatprep.subr.mxu0 0.0
      %1649 = vmatpush2.xpose.msra.mxu0 0.0
      %1650 = vmatprep.subr.mxu0 0.0
      %1651 = vmatpush2.xpose.msra.mxu0 0.0
      %1652 = vmatprep.subr.mxu0 0.0
      %1653 = vmatpush2.xpose.msra.mxu0 0.0
      %1654 = vmatprep.subr.mxu0 0.0
      %1655 = vmatpush2.xpose.msra.mxu0 0.0
      %1656 = vmatprep.subr.mxu0 0.0
      %1657 = vmatpush2.xpose.msra.mxu0 0.0
      %1658 = vmatprep.subr.mxu0 0.0
      %1659 = vmatpush2.xpose.msra.mxu0 0.0
      %1660 = vmatprep.subr.mxu0 0.0
      %1661 = vmatpush2.xpose.msra.mxu0 0.0
      %1662 = vmatprep.subr.mxu0 0.0
      %1663 = vmatpush2.xpose.msra.mxu0 0.0
      %1664 = vmatprep.subr.mxu0 0.0
      %1665 = vmatpush2.xpose.msra.mxu0 0.0
      %1666 = vmatprep.subr.mxu0 0.0
      %1667 = vmatpush2.xpose.msra.mxu0 0.0
      %1668 = vmatprep.subr.mxu0 0.0
      %1669 = vmatpush2.xpose.msra.mxu0 0.0
      %1670 = vmatprep.subr.mxu0 0.0
      %1671 = vmatpush2.xpose.msra.mxu0 0.0
      %1672 = vmatprep.mubr.f32.mxu0 0.0
      %1673 = vmatmul.mubr.f32.gmra.mxu0 %v1604
      %v1674 = vpop.f32.mrf.mxu0
      %v1675 = vadd.f32 0.0, %v1674
      %v1676 = vpop.f32.mrf.mxu0
      %1677 = vdwg.mxu0
      %v1678 = vsel %vm1071, %v1143, -inf
      %1679 = vmax.xlane.f32.xlu0 %v1678
      %v1680 = vpop.xlane.xlu0 %1679
      %v1681 = vsel %vm1071, %v1219, -inf
      %1682 = vmax.xlane.f32.xlu0 %v1681
      %v1683 = vpop.xlane.xlu0 %1682
      %v1684 = vsel %vm1071, %v1295, -inf
      %1685 = vmax.xlane.f32.xlu0 %v1684
      %v1686 = vpop.xlane.xlu0 %1685
      %v1687 = vsel %vm1071, %v1371, -inf
      %1688 = vmax.xlane.f32.xlu0 %v1687
      %v1689 = vpop.xlane.xlu0 %1688
      %v1690 = vsel %vm1071, %v1447, -inf
      %1691 = vmax.xlane.f32.xlu0 %v1690
      %v1692 = vpop.xlane.xlu0 %1691
      %v1693 = vsel %vm1071, %v1523, -inf
      %1694 = vmax.xlane.f32.xlu0 %v1693
      %v1695 = vpop.xlane.xlu0 %1694
      %v1696 = vsel %vm1071, %v1599, -inf
      %1697 = vmax.xlane.f32.xlu0 %v1696
      %v1698 = vpop.xlane.xlu0 %1697
      %v1699 = vsel %vm1071, %v1675, -inf
      %1700 = vmax.xlane.f32.xlu0 %v1699
      %v1701 = vpop.xlane.xlu0 %1700
      %v1702 = vsub.f32 %v1143, %v1680
      %v1703 = vsub.f32 %v1219, %v1683
      %v1704 = vsub.f32 %v1295, %v1686
      %v1705 = vsub.f32 %v1371, %v1689
      %v1706 = vsub.f32 %v1447, %v1692
      %v1707 = vsub.f32 %v1523, %v1695
      %v1708 = vsub.f32 %v1599, %v1698
      %v1709 = vsub.f32 %v1675, %v1701
      %v1710 = vmul.f32 %v1702, 1.442695
      %v1711 = vpow.pop %v1710
      %v1712 = vmul.f32 %v1703, 1.442695
      %v1713 = vpow.pop %v1712
      %v1714 = vmul.f32 %v1704, 1.442695
      %v1715 = vpow.pop %v1714
      %v1716 = vmul.f32 %v1705, 1.442695
      %v1717 = vpow.pop %v1716
      %v1718 = vmul.f32 %v1706, 1.442695
      %v1719 = vpow.pop %v1718
      %v1720 = vmul.f32 %v1707, 1.442695
      %v1721 = vpow.pop %v1720
      %v1722 = vmul.f32 %v1708, 1.442695
      %v1723 = vpow.pop %v1722
      %v1724 = vmul.f32 %v1709, 1.442695
      %v1725 = vpow.pop %v1724
      %v1726 = vsel %vm1071, %v1711, 0.0
      %1727 = vadd.xlane.f32.xlu0 %v1726
      %v1728 = vpop.xlane.xlu0 %1727
      %v1729 = vsel %vm1071, %v1713, 0.0
      %1730 = vadd.xlane.f32.xlu0 %v1729
      %v1731 = vpop.xlane.xlu0 %1730
      %v1732 = vsel %vm1071, %v1715, 0.0
      %1733 = vadd.xlane.f32.xlu0 %v1732
      %v1734 = vpop.xlane.xlu0 %1733
      %v1735 = vsel %vm1071, %v1717, 0.0
      %1736 = vadd.xlane.f32.xlu0 %v1735
      %v1737 = vpop.xlane.xlu0 %1736
      %v1738 = vsel %vm1071, %v1719, 0.0
      %1739 = vadd.xlane.f32.xlu0 %v1738
      %v1740 = vpop.xlane.xlu0 %1739
      %v1741 = vsel %vm1071, %v1721, 0.0
      %1742 = vadd.xlane.f32.xlu0 %v1741
      %v1743 = vpop.xlane.xlu0 %1742
      %v1744 = vsel %vm1071, %v1723, 0.0
      %1745 = vadd.xlane.f32.xlu0 %v1744
      %v1746 = vpop.xlane.xlu0 %1745
      %v1747 = vsel %vm1071, %v1725, 0.0
      %1748 = vadd.xlane.f32.xlu0 %v1747
      %v1749 = vpop.xlane.xlu0 %1748
      %v1750 = vrcp.pop %v1728
      %v1751 = vrcp.pop %v1731
      %v1752 = vrcp.pop %v1734
      %v1753 = vrcp.pop %v1737
      %v1754 = vrcp.pop %v1740
      %v1755 = vrcp.pop %v1743
      %v1756 = vrcp.pop %v1746
      %v1757 = vrcp.pop %v1749
      %v1758 = vmul.f32 %v1711, %v1750
      %v1759 = vmul.f32 %v1713, %v1751
      %v1760 = vmul.f32 %v1715, %v1752
      %v1761 = vmul.f32 %v1717, %v1753
      %v1762 = vmul.f32 %v1719, %v1754
      %v1763 = vmul.f32 %v1721, %v1755
      %v1764 = vmul.f32 %v1723, %v1756
      %v1765 = vmul.f32 %v1725, %v1757
      %v1767 = vsel %vm1071, %v1758, 0
      %1769 = vmatprep.subr.mxu0 0.0
      %1770 = vmatpush1.msra.mxu0 0.0
      %1771 = vmatprep.subr.mxu0 0.0
      %1772 = vmatpush1.msra.mxu0 0.0
      %1773 = vmatprep.subr.mxu0 0.0
      %1774 = vmatpush1.msra.mxu0 0.0
      %1775 = vmatprep.subr.mxu0 0.0
      %1776 = vmatpush1.msra.mxu0 0.0
      %1777 = vmatprep.subr.mxu0 0.0
      %1778 = vmatpush1.msra.mxu0 0.0
      %1779 = vmatprep.subr.mxu0 0.0
      %1780 = vmatpush1.msra.mxu0 0.0
      %1781 = vmatprep.subr.mxu0 0.0
      %1782 = vmatpush1.msra.mxu0 0.0
      %1783 = vmatprep.subr.mxu0 0.0
      %1784 = vmatpush1.msra.mxu0 0.0
      %1785 = vmatprep.subr.mxu0 0.0
      %1786 = vmatpush1.msra.mxu0 0.0
      %1787 = vmatprep.subr.mxu0 0.0
      %1788 = vmatpush1.msra.mxu0 0.0
      %1789 = vmatprep.subr.mxu0 0.0
      %1790 = vmatpush1.msra.mxu0 0.0
      %1791 = vmatprep.subr.mxu0 0.0
      %1792 = vmatpush1.msra.mxu0 0.0
      %1793 = vmatprep.subr.mxu0 0.0
      %1794 = vmatpush1.msra.mxu0 0.0
      %1795 = vmatprep.subr.mxu0 0.0
      %1796 = vmatpush1.msra.mxu0 0.0
      %1797 = vmatprep.subr.mxu0 0.0
      %1798 = vmatpush1.msra.mxu0 0.0
      %1799 = vmatprep.subr.mxu0 0.0
      %1800 = vmatpush1.msra.mxu0 %v1022
      %1801 = vmatprep.subr.mxu0 0.0
      %1802 = vmatpush2.msra.mxu0 0.0
      %1803 = vmatprep.subr.mxu0 0.0
      %1804 = vmatpush2.msra.mxu0 0.0
      %1805 = vmatprep.subr.mxu0 0.0
      %1806 = vmatpush2.msra.mxu0 0.0
      %1807 = vmatprep.subr.mxu0 0.0
      %1808 = vmatpush2.msra.mxu0 0.0
      %1809 = vmatprep.subr.mxu0 0.0
      %1810 = vmatpush2.msra.mxu0 0.0
      %1811 = vmatprep.subr.mxu0 0.0
      %1812 = vmatpush2.msra.mxu0 0.0
      %1813 = vmatprep.subr.mxu0 0.0
      %1814 = vmatpush2.msra.mxu0 0.0
      %1815 = vmatprep.subr.mxu0 0.0
      %1816 = vmatpush2.msra.mxu0 0.0
      %1817 = vmatprep.subr.mxu0 0.0
      %1818 = vmatpush2.msra.mxu0 0.0
      %1819 = vmatprep.subr.mxu0 0.0
      %1820 = vmatpush2.msra.mxu0 0.0
      %1821 = vmatprep.subr.mxu0 0.0
      %1822 = vmatpush2.msra.mxu0 0.0
      %1823 = vmatprep.subr.mxu0 0.0
      %1824 = vmatpush2.msra.mxu0 0.0
      %1825 = vmatprep.subr.mxu0 0.0
      %1826 = vmatpush2.msra.mxu0 0.0
      %1827 = vmatprep.subr.mxu0 0.0
      %1828 = vmatpush2.msra.mxu0 0.0
      %1829 = vmatprep.subr.mxu0 0.0
      %1830 = vmatpush2.msra.mxu0 0.0
      %1831 = vmatprep.subr.mxu0 0.0
      %1832 = vmatpush2.msra.mxu0 0.0
      %1833 = vmatprep.mubr.f32.mxu0 0.0
      %1834 = vmatmul.mubr.f32.gmra.mxu0 %v1767
      %v1835 = vpop.f32.mrf.mxu0
      %v1836 = vadd.f32 0.0, %v1835
      %v1837 = vpop.f32.mrf.mxu0
      %1838 = vdwg.mxu0
      %v1840 = vsel %vm1071, %v1759, 0
      %1842 = vmatprep.subr.mxu0 0.0
      %1843 = vmatpush1.msra.mxu0 0.0
      %1844 = vmatprep.subr.mxu0 0.0
      %1845 = vmatpush1.msra.mxu0 0.0
      %1846 = vmatprep.subr.mxu0 0.0
      %1847 = vmatpush1.msra.mxu0 0.0
      %1848 = vmatprep.subr.mxu0 0.0
      %1849 = vmatpush1.msra.mxu0 0.0
      %1850 = vmatprep.subr.mxu0 0.0
      %1851 = vmatpush1.msra.mxu0 0.0
      %1852 = vmatprep.subr.mxu0 0.0
      %1853 = vmatpush1.msra.mxu0 0.0
      %1854 = vmatprep.subr.mxu0 0.0
      %1855 = vmatpush1.msra.mxu0 0.0
      %1856 = vmatprep.subr.mxu0 0.0
      %1857 = vmatpush1.msra.mxu0 0.0
      %1858 = vmatprep.subr.mxu0 0.0
      %1859 = vmatpush1.msra.mxu0 0.0
      %1860 = vmatprep.subr.mxu0 0.0
      %1861 = vmatpush1.msra.mxu0 0.0
      %1862 = vmatprep.subr.mxu0 0.0
      %1863 = vmatpush1.msra.mxu0 0.0
      %1864 = vmatprep.subr.mxu0 0.0
      %1865 = vmatpush1.msra.mxu0 0.0
      %1866 = vmatprep.subr.mxu0 0.0
      %1867 = vmatpush1.msra.mxu0 0.0
      %1868 = vmatprep.subr.mxu0 0.0
      %1869 = vmatpush1.msra.mxu0 0.0
      %1870 = vmatprep.subr.mxu0 0.0
      %1871 = vmatpush1.msra.mxu0 0.0
      %1872 = vmatprep.subr.mxu0 0.0
      %1873 = vmatpush1.msra.mxu0 %v1052
      %1874 = vmatprep.subr.mxu0 0.0
      %1875 = vmatpush2.msra.mxu0 0.0
      %1876 = vmatprep.subr.mxu0 0.0
      %1877 = vmatpush2.msra.mxu0 0.0
      %1878 = vmatprep.subr.mxu0 0.0
      %1879 = vmatpush2.msra.mxu0 0.0
      %1880 = vmatprep.subr.mxu0 0.0
      %1881 = vmatpush2.msra.mxu0 0.0
      %1882 = vmatprep.subr.mxu0 0.0
      %1883 = vmatpush2.msra.mxu0 0.0
      %1884 = vmatprep.subr.mxu0 0.0
      %1885 = vmatpush2.msra.mxu0 0.0
      %1886 = vmatprep.subr.mxu0 0.0
      %1887 = vmatpush2.msra.mxu0 0.0
      %1888 = vmatprep.subr.mxu0 0.0
      %1889 = vmatpush2.msra.mxu0 0.0
      %1890 = vmatprep.subr.mxu0 0.0
      %1891 = vmatpush2.msra.mxu0 0.0
      %1892 = vmatprep.subr.mxu0 0.0
      %1893 = vmatpush2.msra.mxu0 0.0
      %1894 = vmatprep.subr.mxu0 0.0
      %1895 = vmatpush2.msra.mxu0 0.0
      %1896 = vmatprep.subr.mxu0 0.0
      %1897 = vmatpush2.msra.mxu0 0.0
      %1898 = vmatprep.subr.mxu0 0.0
      %1899 = vmatpush2.msra.mxu0 0.0
      %1900 = vmatprep.subr.mxu0 0.0
      %1901 = vmatpush2.msra.mxu0 0.0
      %1902 = vmatprep.subr.mxu0 0.0
      %1903 = vmatpush2.msra.mxu0 0.0
      %1904 = vmatprep.subr.mxu0 0.0
      %1905 = vmatpush2.msra.mxu0 0.0
      %1906 = vmatprep.mubr.f32.mxu0 0.0
      %1907 = vmatmul.mubr.f32.gmra.mxu0 %v1840
      %v1908 = vpop.f32.mrf.mxu0
      %v1909 = vadd.f32 0.0, %v1908
      %v1910 = vpop.f32.mrf.mxu0
      %1911 = vdwg.mxu0
      %v1913 = vsel %vm1071, %v1760, 0
      %1915 = vmatprep.subr.mxu0 0.0
      %1916 = vmatpush1.msra.mxu0 0.0
      %1917 = vmatprep.subr.mxu0 0.0
      %1918 = vmatpush1.msra.mxu0 0.0
      %1919 = vmatprep.subr.mxu0 0.0
      %1920 = vmatpush1.msra.mxu0 0.0
      %1921 = vmatprep.subr.mxu0 0.0
      %1922 = vmatpush1.msra.mxu0 0.0
      %1923 = vmatprep.subr.mxu0 0.0
      %1924 = vmatpush1.msra.mxu0 0.0
      %1925 = vmatprep.subr.mxu0 0.0
      %1926 = vmatpush1.msra.mxu0 0.0
      %1927 = vmatprep.subr.mxu0 0.0
      %1928 = vmatpush1.msra.mxu0 0.0
      %1929 = vmatprep.subr.mxu0 0.0
      %1930 = vmatpush1.msra.mxu0 0.0
      %1931 = vmatprep.subr.mxu0 0.0
      %1932 = vmatpush1.msra.mxu0 0.0
      %1933 = vmatprep.subr.mxu0 0.0
      %1934 = vmatpush1.msra.mxu0 0.0
      %1935 = vmatprep.subr.mxu0 0.0
      %1936 = vmatpush1.msra.mxu0 0.0
      %1937 = vmatprep.subr.mxu0 0.0
      %1938 = vmatpush1.msra.mxu0 0.0
      %1939 = vmatprep.subr.mxu0 0.0
      %1940 = vmatpush1.msra.mxu0 0.0
      %1941 = vmatprep.subr.mxu0 0.0
      %1942 = vmatpush1.msra.mxu0 0.0
      %1943 = vmatprep.subr.mxu0 0.0
      %1944 = vmatpush1.msra.mxu0 0.0
      %1945 = vmatprep.subr.mxu0 0.0
      %1946 = vmatpush1.msra.mxu0 %v1058
      %1947 = vmatprep.subr.mxu0 0.0
      %1948 = vmatpush2.msra.mxu0 0.0
      %1949 = vmatprep.subr.mxu0 0.0
      %1950 = vmatpush2.msra.mxu0 0.0
      %1951 = vmatprep.subr.mxu0 0.0
      %1952 = vmatpush2.msra.mxu0 0.0
      %1953 = vmatprep.subr.mxu0 0.0
      %1954 = vmatpush2.msra.mxu0 0.0
      %1955 = vmatprep.subr.mxu0 0.0
      %1956 = vmatpush2.msra.mxu0 0.0
      %1957 = vmatprep.subr.mxu0 0.0
      %1958 = vmatpush2.msra.mxu0 0.0
      %1959 = vmatprep.subr.mxu0 0.0
      %1960 = vmatpush2.msra.mxu0 0.0
      %1961 = vmatprep.subr.mxu0 0.0
      %1962 = vmatpush2.msra.mxu0 0.0
      %1963 = vmatprep.subr.mxu0 0.0
      %1964 = vmatpush2.msra.mxu0 0.0
      %1965 = vmatprep.subr.mxu0 0.0
      %1966 = vmatpush2.msra.mxu0 0.0
      %1967 = vmatprep.subr.mxu0 0.0
      %1968 = vmatpush2.msra.mxu0 0.0
      %1969 = vmatprep.subr.mxu0 0.0
      %1970 = vmatpush2.msra.mxu0 0.0
      %1971 = vmatprep.subr.mxu0 0.0
      %1972 = vmatpush2.msra.mxu0 0.0
      %1973 = vmatprep.subr.mxu0 0.0
      %1974 = vmatpush2.msra.mxu0 0.0
      %1975 = vmatprep.subr.mxu0 0.0
      %1976 = vmatpush2.msra.mxu0 0.0
      %1977 = vmatprep.subr.mxu0 0.0
      %1978 = vmatpush2.msra.mxu0 0.0
      %1979 = vmatprep.mubr.f32.mxu0 0.0
      %1980 = vmatmul.mubr.f32.gmra.mxu0 %v1913
      %v1981 = vpop.f32.mrf.mxu0
      %v1982 = vadd.f32 0.0, %v1981
      %v1983 = vpop.f32.mrf.mxu0
      %1984 = vdwg.mxu0
      %v1986 = vsel %vm1071, %v1761, 0
      %1988 = vmatprep.subr.mxu0 0.0
      %1989 = vmatpush1.msra.mxu0 0.0
      %1990 = vmatprep.subr.mxu0 0.0
      %1991 = vmatpush1.msra.mxu0 0.0
      %1992 = vmatprep.subr.mxu0 0.0
      %1993 = vmatpush1.msra.mxu0 0.0
      %1994 = vmatprep.subr.mxu0 0.0
      %1995 = vmatpush1.msra.mxu0 0.0
      %1996 = vmatprep.subr.mxu0 0.0
      %1997 = vmatpush1.msra.mxu0 0.0
      %1998 = vmatprep.subr.mxu0 0.0
      %1999 = vmatpush1.msra.mxu0 0.0
      %2000 = vmatprep.subr.mxu0 0.0
      %2001 = vmatpush1.msra.mxu0 0.0
      %2002 = vmatprep.subr.mxu0 0.0
      %2003 = vmatpush1.msra.mxu0 0.0
      %2004 = vmatprep.subr.mxu0 0.0
      %2005 = vmatpush1.msra.mxu0 0.0
      %2006 = vmatprep.subr.mxu0 0.0
      %2007 = vmatpush1.msra.mxu0 0.0
      %2008 = vmatprep.subr.mxu0 0.0
      %2009 = vmatpush1.msra.mxu0 0.0
      %2010 = vmatprep.subr.mxu0 0.0
      %2011 = vmatpush1.msra.mxu0 0.0
      %2012 = vmatprep.subr.mxu0 0.0
      %2013 = vmatpush1.msra.mxu0 0.0
      %2014 = vmatprep.subr.mxu0 0.0
      %2015 = vmatpush1.msra.mxu0 0.0
      %2016 = vmatprep.subr.mxu0 0.0
      %2017 = vmatpush1.msra.mxu0 0.0
      %2018 = vmatprep.subr.mxu0 0.0
      %2019 = vmatpush1.msra.mxu0 %v1064
      %2020 = vmatprep.subr.mxu0 0.0
      %2021 = vmatpush2.msra.mxu0 0.0
      %2022 = vmatprep.subr.mxu0 0.0
      %2023 = vmatpush2.msra.mxu0 0.0
      %2024 = vmatprep.subr.mxu0 0.0
      %2025 = vmatpush2.msra.mxu0 0.0
      %2026 = vmatprep.subr.mxu0 0.0
      %2027 = vmatpush2.msra.mxu0 0.0
      %2028 = vmatprep.subr.mxu0 0.0
      %2029 = vmatpush2.msra.mxu0 0.0
      %2030 = vmatprep.subr.mxu0 0.0
      %2031 = vmatpush2.msra.mxu0 0.0
      %2032 = vmatprep.subr.mxu0 0.0
      %2033 = vmatpush2.msra.mxu0 0.0
      %2034 = vmatprep.subr.mxu0 0.0
      %2035 = vmatpush2.msra.mxu0 0.0
      %2036 = vmatprep.subr.mxu0 0.0
      %2037 = vmatpush2.msra.mxu0 0.0
      %2038 = vmatprep.subr.mxu0 0.0
      %2039 = vmatpush2.msra.mxu0 0.0
      %2040 = vmatprep.subr.mxu0 0.0
      %2041 = vmatpush2.msra.mxu0 0.0
      %2042 = vmatprep.subr.mxu0 0.0
      %2043 = vmatpush2.msra.mxu0 0.0
      %2044 = vmatprep.subr.mxu0 0.0
      %2045 = vmatpush2.msra.mxu0 0.0
      %2046 = vmatprep.subr.mxu0 0.0
      %2047 = vmatpush2.msra.mxu0 0.0
      %2048 = vmatprep.subr.mxu0 0.0
      %2049 = vmatpush2.msra.mxu0 0.0
      %2050 = vmatprep.subr.mxu0 0.0
      %2051 = vmatpush2.msra.mxu0 0.0
      %2052 = vmatprep.mubr.f32.mxu0 0.0
      %2053 = vmatmul.mubr.f32.gmra.mxu0 %v1986
      %v2054 = vpop.f32.mrf.mxu0
      %v2055 = vadd.f32 0.0, %v2054
      %v2056 = vpop.f32.mrf.mxu0
      %2057 = vdwg.mxu0
      %v2059 = vsel %vm1071, %v1762, 0
      %2061 = vmatprep.subr.mxu0 0.0
      %2062 = vmatpush1.msra.mxu0 0.0
      %2063 = vmatprep.subr.mxu0 0.0
      %2064 = vmatpush1.msra.mxu0 0.0
      %2065 = vmatprep.subr.mxu0 0.0
      %2066 = vmatpush1.msra.mxu0 0.0
      %2067 = vmatprep.subr.mxu0 0.0
      %2068 = vmatpush1.msra.mxu0 0.0
      %2069 = vmatprep.subr.mxu0 0.0
      %2070 = vmatpush1.msra.mxu0 0.0
      %2071 = vmatprep.subr.mxu0 0.0
      %2072 = vmatpush1.msra.mxu0 0.0
      %2073 = vmatprep.subr.mxu0 0.0
      %2074 = vmatpush1.msra.mxu0 0.0
      %2075 = vmatprep.subr.mxu0 0.0
      %2076 = vmatpush1.msra.mxu0 0.0
      %2077 = vmatprep.subr.mxu0 0.0
      %2078 = vmatpush1.msra.mxu0 0.0
      %2079 = vmatprep.subr.mxu0 0.0
      %2080 = vmatpush1.msra.mxu0 0.0
      %2081 = vmatprep.subr.mxu0 0.0
      %2082 = vmatpush1.msra.mxu0 0.0
      %2083 = vmatprep.subr.mxu0 0.0
      %2084 = vmatpush1.msra.mxu0 0.0
      %2085 = vmatprep.subr.mxu0 0.0
      %2086 = vmatpush1.msra.mxu0 0.0
      %2087 = vmatprep.subr.mxu0 0.0
      %2088 = vmatpush1.msra.mxu0 0.0
      %2089 = vmatprep.subr.mxu0 0.0
      %2090 = vmatpush1.msra.mxu0 0.0
      %2091 = vmatprep.subr.mxu0 0.0
      %2092 = vmatpush1.msra.mxu0 %v1027
      %2093 = vmatprep.subr.mxu0 0.0
      %2094 = vmatpush2.msra.mxu0 0.0
      %2095 = vmatprep.subr.mxu0 0.0
      %2096 = vmatpush2.msra.mxu0 0.0
      %2097 = vmatprep.subr.mxu0 0.0
      %2098 = vmatpush2.msra.mxu0 0.0
      %2099 = vmatprep.subr.mxu0 0.0
      %2100 = vmatpush2.msra.mxu0 0.0
      %2101 = vmatprep.subr.mxu0 0.0
      %2102 = vmatpush2.msra.mxu0 0.0
      %2103 = vmatprep.subr.mxu0 0.0
      %2104 = vmatpush2.msra.mxu0 0.0
      %2105 = vmatprep.subr.mxu0 0.0
      %2106 = vmatpush2.msra.mxu0 0.0
      %2107 = vmatprep.subr.mxu0 0.0
      %2108 = vmatpush2.msra.mxu0 0.0
      %2109 = vmatprep.subr.mxu0 0.0
      %2110 = vmatpush2.msra.mxu0 0.0
      %2111 = vmatprep.subr.mxu0 0.0
      %2112 = vmatpush2.msra.mxu0 0.0
      %2113 = vmatprep.subr.mxu0 0.0
      %2114 = vmatpush2.msra.mxu0 0.0
      %2115 = vmatprep.subr.mxu0 0.0
      %2116 = vmatpush2.msra.mxu0 0.0
      %2117 = vmatprep.subr.mxu0 0.0
      %2118 = vmatpush2.msra.mxu0 0.0
      %2119 = vmatprep.subr.mxu0 0.0
      %2120 = vmatpush2.msra.mxu0 0.0
      %2121 = vmatprep.subr.mxu0 0.0
      %2122 = vmatpush2.msra.mxu0 0.0
      %2123 = vmatprep.subr.mxu0 0.0
      %2124 = vmatpush2.msra.mxu0 0.0
      %2125 = vmatprep.mubr.f32.mxu0 0.0
      %2126 = vmatmul.mubr.f32.gmra.mxu0 %v2059
      %v2127 = vpop.f32.mrf.mxu0
      %v2128 = vadd.f32 0.0, %v2127
      %v2129 = vpop.f32.mrf.mxu0
      %2130 = vdwg.mxu0
      %v2132 = vsel %vm1071, %v1763, 0
      %2134 = vmatprep.subr.mxu0 0.0
      %2135 = vmatpush1.msra.mxu0 0.0
      %2136 = vmatprep.subr.mxu0 0.0
      %2137 = vmatpush1.msra.mxu0 0.0
      %2138 = vmatprep.subr.mxu0 0.0
      %2139 = vmatpush1.msra.mxu0 0.0
      %2140 = vmatprep.subr.mxu0 0.0
      %2141 = vmatpush1.msra.mxu0 0.0
      %2142 = vmatprep.subr.mxu0 0.0
      %2143 = vmatpush1.msra.mxu0 0.0
      %2144 = vmatprep.subr.mxu0 0.0
      %2145 = vmatpush1.msra.mxu0 0.0
      %2146 = vmatprep.subr.mxu0 0.0
      %2147 = vmatpush1.msra.mxu0 0.0
      %2148 = vmatprep.subr.mxu0 0.0
      %2149 = vmatpush1.msra.mxu0 0.0
      %2150 = vmatprep.subr.mxu0 0.0
      %2151 = vmatpush1.msra.mxu0 0.0
      %2152 = vmatprep.subr.mxu0 0.0
      %2153 = vmatpush1.msra.mxu0 0.0
      %2154 = vmatprep.subr.mxu0 0.0
      %2155 = vmatpush1.msra.mxu0 0.0
      %2156 = vmatprep.subr.mxu0 0.0
      %2157 = vmatpush1.msra.mxu0 0.0
      %2158 = vmatprep.subr.mxu0 0.0
      %2159 = vmatpush1.msra.mxu0 0.0
      %2160 = vmatprep.subr.mxu0 0.0
      %2161 = vmatpush1.msra.mxu0 0.0
      %2162 = vmatprep.subr.mxu0 0.0
      %2163 = vmatpush1.msra.mxu0 0.0
      %2164 = vmatprep.subr.mxu0 0.0
      %2165 = vmatpush1.msra.mxu0 %v1054
      %2166 = vmatprep.subr.mxu0 0.0
      %2167 = vmatpush2.msra.mxu0 0.0
      %2168 = vmatprep.subr.mxu0 0.0
      %2169 = vmatpush2.msra.mxu0 0.0
      %2170 = vmatprep.subr.mxu0 0.0
      %2171 = vmatpush2.msra.mxu0 0.0
      %2172 = vmatprep.subr.mxu0 0.0
      %2173 = vmatpush2.msra.mxu0 0.0
      %2174 = vmatprep.subr.mxu0 0.0
      %2175 = vmatpush2.msra.mxu0 0.0
      %2176 = vmatprep.subr.mxu0 0.0
      %2177 = vmatpush2.msra.mxu0 0.0
      %2178 = vmatprep.subr.mxu0 0.0
      %2179 = vmatpush2.msra.mxu0 0.0
      %2180 = vmatprep.subr.mxu0 0.0
      %2181 = vmatpush2.msra.mxu0 0.0
      %2182 = vmatprep.subr.mxu0 0.0
      %2183 = vmatpush2.msra.mxu0 0.0
      %2184 = vmatprep.subr.mxu0 0.0
      %2185 = vmatpush2.msra.mxu0 0.0
      %2186 = vmatprep.subr.mxu0 0.0
      %2187 = vmatpush2.msra.mxu0 0.0
      %2188 = vmatprep.subr.mxu0 0.0
      %2189 = vmatpush2.msra.mxu0 0.0
      %2190 = vmatprep.subr.mxu0 0.0
      %2191 = vmatpush2.msra.mxu0 0.0
      %2192 = vmatprep.subr.mxu0 0.0
      %2193 = vmatpush2.msra.mxu0 0.0
      %2194 = vmatprep.subr.mxu0 0.0
      %2195 = vmatpush2.msra.mxu0 0.0
      %2196 = vmatprep.subr.mxu0 0.0
      %2197 = vmatpush2.msra.mxu0 0.0
      %2198 = vmatprep.mubr.f32.mxu0 0.0
      %2199 = vmatmul.mubr.f32.gmra.mxu0 %v2132
      %v2200 = vpop.f32.mrf.mxu0
      %v2201 = vadd.f32 0.0, %v2200
      %v2202 = vpop.f32.mrf.mxu0
      %2203 = vdwg.mxu0
      %v2205 = vsel %vm1071, %v1764, 0
      %2207 = vmatprep.subr.mxu0 0.0
      %2208 = vmatpush1.msra.mxu0 0.0
      %2209 = vmatprep.subr.mxu0 0.0
      %2210 = vmatpush1.msra.mxu0 0.0
      %2211 = vmatprep.subr.mxu0 0.0
      %2212 = vmatpush1.msra.mxu0 0.0
      %2213 = vmatprep.subr.mxu0 0.0
      %2214 = vmatpush1.msra.mxu0 0.0
      %2215 = vmatprep.subr.mxu0 0.0
      %2216 = vmatpush1.msra.mxu0 0.0
      %2217 = vmatprep.subr.mxu0 0.0
      %2218 = vmatpush1.msra.mxu0 0.0
      %2219 = vmatprep.subr.mxu0 0.0
      %2220 = vmatpush1.msra.mxu0 0.0
      %2221 = vmatprep.subr.mxu0 0.0
      %2222 = vmatpush1.msra.mxu0 0.0
      %2223 = vmatprep.subr.mxu0 0.0
      %2224 = vmatpush1.msra.mxu0 0.0
      %2225 = vmatprep.subr.mxu0 0.0
      %2226 = vmatpush1.msra.mxu0 0.0
      %2227 = vmatprep.subr.mxu0 0.0
      %2228 = vmatpush1.msra.mxu0 0.0
      %2229 = vmatprep.subr.mxu0 0.0
      %2230 = vmatpush1.msra.mxu0 0.0
      %2231 = vmatprep.subr.mxu0 0.0
      %2232 = vmatpush1.msra.mxu0 0.0
      %2233 = vmatprep.subr.mxu0 0.0
      %2234 = vmatpush1.msra.mxu0 0.0
      %2235 = vmatprep.subr.mxu0 0.0
      %2236 = vmatpush1.msra.mxu0 0.0
      %2237 = vmatprep.subr.mxu0 0.0
      %2238 = vmatpush1.msra.mxu0 %v1060
      %2239 = vmatprep.subr.mxu0 0.0
      %2240 = vmatpush2.msra.mxu0 0.0
      %2241 = vmatprep.subr.mxu0 0.0
      %2242 = vmatpush2.msra.mxu0 0.0
      %2243 = vmatprep.subr.mxu0 0.0
      %2244 = vmatpush2.msra.mxu0 0.0
      %2245 = vmatprep.subr.mxu0 0.0
      %2246 = vmatpush2.msra.mxu0 0.0
      %2247 = vmatprep.subr.mxu0 0.0
      %2248 = vmatpush2.msra.mxu0 0.0
      %2249 = vmatprep.subr.mxu0 0.0
      %2250 = vmatpush2.msra.mxu0 0.0
      %2251 = vmatprep.subr.mxu0 0.0
      %2252 = vmatpush2.msra.mxu0 0.0
      %2253 = vmatprep.subr.mxu0 0.0
      %2254 = vmatpush2.msra.mxu0 0.0
      %2255 = vmatprep.subr.mxu0 0.0
      %2256 = vmatpush2.msra.mxu0 0.0
      %2257 = vmatprep.subr.mxu0 0.0
      %2258 = vmatpush2.msra.mxu0 0.0
      %2259 = vmatprep.subr.mxu0 0.0
      %2260 = vmatpush2.msra.mxu0 0.0
      %2261 = vmatprep.subr.mxu0 0.0
      %2262 = vmatpush2.msra.mxu0 0.0
      %2263 = vmatprep.subr.mxu0 0.0
      %2264 = vmatpush2.msra.mxu0 0.0
      %2265 = vmatprep.subr.mxu0 0.0
      %2266 = vmatpush2.msra.mxu0 0.0
      %2267 = vmatprep.subr.mxu0 0.0
      %2268 = vmatpush2.msra.mxu0 0.0
      %2269 = vmatprep.subr.mxu0 0.0
      %2270 = vmatpush2.msra.mxu0 0.0
      %2271 = vmatprep.mubr.f32.mxu0 0.0
      %2272 = vmatmul.mubr.f32.gmra.mxu0 %v2205
      %v2273 = vpop.f32.mrf.mxu0
      %v2274 = vadd.f32 0.0, %v2273
      %v2275 = vpop.f32.mrf.mxu0
      %2276 = vdwg.mxu0
      %v2278 = vsel %vm1071, %v1765, 0
      %2280 = vmatprep.subr.mxu0 0.0
      %2281 = vmatpush1.msra.mxu0 0.0
      %2282 = vmatprep.subr.mxu0 0.0
      %2283 = vmatpush1.msra.mxu0 0.0
      %2284 = vmatprep.subr.mxu0 0.0
      %2285 = vmatpush1.msra.mxu0 0.0
      %2286 = vmatprep.subr.mxu0 0.0
      %2287 = vmatpush1.msra.mxu0 0.0
      %2288 = vmatprep.subr.mxu0 0.0
      %2289 = vmatpush1.msra.mxu0 0.0
      %2290 = vmatprep.subr.mxu0 0.0
      %2291 = vmatpush1.msra.mxu0 0.0
      %2292 = vmatprep.subr.mxu0 0.0
      %2293 = vmatpush1.msra.mxu0 0.0
      %2294 = vmatprep.subr.mxu0 0.0
      %2295 = vmatpush1.msra.mxu0 0.0
      %2296 = vmatprep.subr.mxu0 0.0
      %2297 = vmatpush1.msra.mxu0 0.0
      %2298 = vmatprep.subr.mxu0 0.0
      %2299 = vmatpush1.msra.mxu0 0.0
      %2300 = vmatprep.subr.mxu0 0.0
      %2301 = vmatpush1.msra.mxu0 0.0
      %2302 = vmatprep.subr.mxu0 0.0
      %2303 = vmatpush1.msra.mxu0 0.0
      %2304 = vmatprep.subr.mxu0 0.0
      %2305 = vmatpush1.msra.mxu0 0.0
      %2306 = vmatprep.subr.mxu0 0.0
      %2307 = vmatpush1.msra.mxu0 0.0
      %2308 = vmatprep.subr.mxu0 0.0
      %2309 = vmatpush1.msra.mxu0 0.0
      %2310 = vmatprep.subr.mxu0 0.0
      %2311 = vmatpush1.msra.mxu0 %v1066
      %2312 = vmatprep.subr.mxu0 0.0
      %2313 = vmatpush2.msra.mxu0 0.0
      %2314 = vmatprep.subr.mxu0 0.0
      %2315 = vmatpush2.msra.mxu0 0.0
      %2316 = vmatprep.subr.mxu0 0.0
      %2317 = vmatpush2.msra.mxu0 0.0
      %2318 = vmatprep.subr.mxu0 0.0
      %2319 = vmatpush2.msra.mxu0 0.0
      %2320 = vmatprep.subr.mxu0 0.0
      %2321 = vmatpush2.msra.mxu0 0.0
      %2322 = vmatprep.subr.mxu0 0.0
      %2323 = vmatpush2.msra.mxu0 0.0
      %2324 = vmatprep.subr.mxu0 0.0
      %2325 = vmatpush2.msra.mxu0 0.0
      %2326 = vmatprep.subr.mxu0 0.0
      %2327 = vmatpush2.msra.mxu0 0.0
      %2328 = vmatprep.subr.mxu0 0.0
      %2329 = vmatpush2.msra.mxu0 0.0
      %2330 = vmatprep.subr.mxu0 0.0
      %2331 = vmatpush2.msra.mxu0 0.0
      %2332 = vmatprep.subr.mxu0 0.0
      %2333 = vmatpush2.msra.mxu0 0.0
      %2334 = vmatprep.subr.mxu0 0.0
      %2335 = vmatpush2.msra.mxu0 0.0
      %2336 = vmatprep.subr.mxu0 0.0
      %2337 = vmatpush2.msra.mxu0 0.0
      %2338 = vmatprep.subr.mxu0 0.0
      %2339 = vmatpush2.msra.mxu0 0.0
      %2340 = vmatprep.subr.mxu0 0.0
      %2341 = vmatpush2.msra.mxu0 0.0
      %2342 = vmatprep.subr.mxu0 0.0
      %2343 = vmatpush2.msra.mxu0 0.0
      %2344 = vmatprep.mubr.f32.mxu0 0.0
      %2345 = vmatmul.mubr.f32.gmra.mxu0 %v2278
      %v2346 = vpop.f32.mrf.mxu0
      %v2347 = vadd.f32 0.0, %v2346
      %v2348 = vpop.f32.mrf.mxu0
      %2349 = vdwg.mxu0
      %2350 = vst.msk [vmem:[#allocation2] sm:$0xff] %vm1071, %v1836
      %2352 = vrot.lane.b32.xlu0 %v1909, 8
      %v2353 = vpop.permute.xlu0 %2352
      %vm2355 = vcmask 130112
      %2356 = vst.msk [vmem:[#allocation2] sm:$0xff] %vm2355, %v2353
      %2358 = vrot.lane.b32.xlu0 %v1982, 16
      %v2359 = vpop.permute.xlu0 %2358
      %vm2361 = vcmask 195712
      %2362 = vst.msk [vmem:[#allocation2] sm:$0xff] %vm2361, %v2359
      %2364 = vrot.lane.b32.xlu0 %v2055, 24
      %v2365 = vpop.permute.xlu0 %2364
      %vm2367 = vcmask 261312
      %2368 = vst.msk [vmem:[#allocation2] sm:$0xff] %vm2367, %v2365
      %2369 = vst.msk [vmem:[#allocation2 + $0x8] sm:$0xff] %vm1071, %v2128
      %2371 = vrot.lane.b32.xlu0 %v2201, 8
      %v2372 = vpop.permute.xlu0 %2371
      %2374 = vst.msk [vmem:[#allocation2 + $0x8] sm:$0xff] %vm2355, %v2372
      %2376 = vrot.lane.b32.xlu0 %v2274, 16
      %v2377 = vpop.permute.xlu0 %2376
      %2379 = vst.msk [vmem:[#allocation2 + $0x8] sm:$0xff] %vm2361, %v2377
      %2381 = vrot.lane.b32.xlu0 %v2347, 24
      %v2382 = vpop.permute.xlu0 %2381
      %2384 = vst.msk [vmem:[#allocation2 + $0x8] sm:$0xff] %vm2367, %v2382
      %v2385 = vld [vmem:[#allocation2] sm:$0xff]
      %v2386 = vld [vmem:[#allocation2 + $0x8] sm:$0xff]
      %v2388 = vlaneseq
      %v2389 = vshrl.u32 %v2388, 7
      %v2390 = vsub.s32 0, %v2389
      %v2391 = vrot.slane %v1034, %v2390
      %v2394 = vsel %vm848, %v2385, 0
      %v2397 = vsel %vm848, %v2386, 0
      %2399 = vmatprep.subr.mxu0 0.0
      %2400 = vmatpush1.msra.mxu0 0.0
      %2401 = vmatprep.subr.mxu0 0.0
      %2402 = vmatpush1.msra.mxu0 0.0
      %2403 = vmatprep.subr.mxu0 0.0
      %2404 = vmatpush1.msra.mxu0 0.0
      %2405 = vmatprep.subr.mxu0 0.0
      %2406 = vmatpush1.msra.mxu0 0.0
      %2407 = vmatprep.subr.mxu0 0.0
      %2408 = vmatpush1.msra.mxu0 0.0
      %2409 = vmatprep.subr.mxu0 0.0
      %2410 = vmatpush1.msra.mxu0 0.0
      %2411 = vmatprep.subr.mxu0 0.0
      %2412 = vmatpush1.msra.mxu0 0.0
      %2413 = vmatprep.subr.mxu0 0.0
      %2414 = vmatpush1.msra.mxu0 0.0
      %2415 = vmatprep.subr.mxu0 0.0
      %2416 = vmatpush1.msra.mxu0 0.0
      %2417 = vmatprep.subr.mxu0 0.0
      %2418 = vmatpush1.msra.mxu0 0.0
      %2419 = vmatprep.subr.mxu0 0.0
      %2420 = vmatpush1.msra.mxu0 0.0
      %2421 = vmatprep.subr.mxu0 0.0
      %2422 = vmatpush1.msra.mxu0 0.0
      %2423 = vmatprep.subr.mxu0 0.0
      %2424 = vmatpush1.msra.mxu0 %v1033
      %2425 = vmatprep.subr.mxu0 0.0
      %2426 = vmatpush1.msra.mxu0 %v1032
      %2427 = vmatprep.subr.mxu0 0.0
      %2428 = vmatpush1.msra.mxu0 %v1031
      %2429 = vmatprep.subr.mxu0 0.0
      %2430 = vmatpush1.msra.mxu0 %v1030
      %2431 = vmatprep.subr.mxu0 0.0
      %2432 = vmatpush2.msra.mxu0 0.0
      %2433 = vmatprep.subr.mxu0 0.0
      %2434 = vmatpush2.msra.mxu0 0.0
      %2435 = vmatprep.subr.mxu0 0.0
      %2436 = vmatpush2.msra.mxu0 0.0
      %2437 = vmatprep.subr.mxu0 0.0
      %2438 = vmatpush2.msra.mxu0 0.0
      %2439 = vmatprep.subr.mxu0 0.0
      %2440 = vmatpush2.msra.mxu0 0.0
      %2441 = vmatprep.subr.mxu0 0.0
      %2442 = vmatpush2.msra.mxu0 0.0
      %2443 = vmatprep.subr.mxu0 0.0
      %2444 = vmatpush2.msra.mxu0 0.0
      %2445 = vmatprep.subr.mxu0 0.0
      %2446 = vmatpush2.msra.mxu0 0.0
      %2447 = vmatprep.subr.mxu0 0.0
      %2448 = vmatpush2.msra.mxu0 0.0
      %2449 = vmatprep.subr.mxu0 0.0
      %2450 = vmatpush2.msra.mxu0 0.0
      %2451 = vmatprep.subr.mxu0 0.0
      %2452 = vmatpush2.msra.mxu0 0.0
      %2453 = vmatprep.subr.mxu0 0.0
      %2454 = vmatpush2.msra.mxu0 0.0
      %2455 = vmatprep.subr.mxu0 0.0
      %2456 = vmatpush2.msra.mxu0 0.0
      %2457 = vmatprep.subr.mxu0 0.0
      %2458 = vmatpush2.msra.mxu0 0.0
      %2459 = vmatprep.subr.mxu0 0.0
      %2460 = vmatpush2.msra.mxu0 0.0
      %2461 = vmatprep.subr.mxu0 0.0
      %2462 = vmatpush2.msra.mxu0 0.0
      %2463 = vmatprep.mubr.f32.mxu0 0.0
      %2464 = vmatmul.mubr.f32.gmra.mxu0 %v2394
      %v2465 = vpop.f32.mrf.mxu0
      %v2466 = vadd.f32 %v2391, %v2465
      %v2467 = vpop.f32.mrf.mxu0
      %2468 = vmatprep.mubr.f32.mxu0 0.0
      %2469 = vmatmul.mubr.f32.gmra.mxu0 %v2397
      %v2470 = vpop.f32.mrf.mxu0
      %v2471 = vadd.f32 %v2391, %v2470
      %v2472 = vpop.f32.mrf.mxu0
      %2473 = vdwg.mxu0
      %v2474 = vadd.f32 %v823, %v2466
      %v2475 = vadd.f32 %v824, %v2471
      %v2476 = vsel %vm848, %v2474, 0.0
      %2477 = vadd.xlane.f32.xlu0 %v2476
      %v2478 = vpop.xlane.xlu0 %2477
      %v2479 = vsel %vm848, %v2475, 0.0
      %2480 = vadd.xlane.f32.xlu0 %v2479
      %v2481 = vpop.xlane.xlu0 %2480
      %v2482 = vrcp.pop 32.0
      %v2483 = vmul.f32 %v2478, %v2482
      %v2484 = vmul.f32 %v2481, %v2482
      %v2485 = vsub.f32 %v2474, %v2483
      %v2486 = vsub.f32 %v2475, %v2484
      %v2487 = vmul.f32 %v2485, %v2485
      %v2488 = vmul.f32 %v2486, %v2486
      %v2489 = vsel %vm848, %v2487, 0.0
      %2490 = vadd.xlane.f32.xlu0 %v2489
      %v2491 = vpop.xlane.xlu0 %2490
      %v2492 = vsel %vm848, %v2488, 0.0
      %2493 = vadd.xlane.f32.xlu0 %v2492
      %v2494 = vpop.xlane.xlu0 %2493
      %v2495 = vmul.f32 %v2491, %v2482
      %v2496 = vmul.f32 %v2494, %v2482
      %v2497 = vadd.f32 %v2495, 1e-05
      %v2498 = vadd.f32 %v2496, 1e-05
      %v2499 = vrsqrt.pop %v2497
      %v2500 = vrsqrt.pop %v2498
      %v2501 = vmul.f32 %v2485, %v2499
      %v2502 = vmul.f32 %v2486, %v2500
      %v2503 = vld [vmem:[%s12] sm:$0x1]
      %v2505 = vlaneseq
      %v2506 = vshrl.u32 %v2505, 7
      %v2507 = vsub.s32 0, %v2506
      %v2508 = vrot.slane %v2503, %v2507
      %v2510 = vmul.f32 %v2501, %v2508
      %v2511 = vmul.f32 %v2502, %v2508
      %v2512 = vld [vmem:[%s13] sm:$0x1]
      %v2514 = vlaneseq
      %v2515 = vshrl.u32 %v2514, 7
      %v2516 = vsub.s32 0, %v2515
      %v2517 = vrot.slane %v2512, %v2516
      %v2519 = vadd.f32 %v2510, %v2517
      %v2520 = vadd.f32 %v2511, %v2517
      %v2521 = vld [vmem:[%s4] sm:$0xff]
      %v2522 = vld [vmem:[%s4 + $0x8] sm:$0xff]
      %v2523 = vld [vmem:[%s4 + $0x10] sm:$0xff]
      %v2524 = vld [vmem:[%s4 + $0x18] sm:$0xff]
      %v2525 = vld [vmem:[%s5] sm:$0x1]
      %v2526 = vadd.f32 %v2519, %v825
      %v2527 = vadd.f32 %v2520, %v826
      %v2529 = vlaneseq
      %v2530 = vshrl.u32 %v2529, 7
      %v2531 = vsub.s32 0, %v2530
      %v2532 = vrot.slane %v2525, %v2531
      %v2535 = vsel %vm848, %v2526, 0
      %v2538 = vsel %vm848, %v2527, 0
      %2540 = vmatprep.subr.mxu0 0.0
      %2541 = vmatpush1.msra.mxu0 0.0
      %2542 = vmatprep.subr.mxu0 0.0
      %2543 = vmatpush1.msra.mxu0 0.0
      %2544 = vmatprep.subr.mxu0 0.0
      %2545 = vmatpush1.msra.mxu0 0.0
      %2546 = vmatprep.subr.mxu0 0.0
      %2547 = vmatpush1.msra.mxu0 0.0
      %2548 = vmatprep.subr.mxu0 0.0
      %2549 = vmatpush1.msra.mxu0 0.0
      %2550 = vmatprep.subr.mxu0 0.0
      %2551 = vmatpush1.msra.mxu0 0.0
      %2552 = vmatprep.subr.mxu0 0.0
      %2553 = vmatpush1.msra.mxu0 0.0
      %2554 = vmatprep.subr.mxu0 0.0
      %2555 = vmatpush1.msra.mxu0 0.0
      %2556 = vmatprep.subr.mxu0 0.0
      %2557 = vmatpush1.msra.mxu0 0.0
      %2558 = vmatprep.subr.mxu0 0.0
      %2559 = vmatpush1.msra.mxu0 0.0
      %2560 = vmatprep.subr.mxu0 0.0
      %2561 = vmatpush1.msra.mxu0 0.0
      %2562 = vmatprep.subr.mxu0 0.0
      %2563 = vmatpush1.msra.mxu0 0.0
      %2564 = vmatprep.subr.mxu0 0.0
      %2565 = vmatpush1.msra.mxu0 %v2524
      %2566 = vmatprep.subr.mxu0 0.0
      %2567 = vmatpush1.msra.mxu0 %v2523
      %2568 = vmatprep.subr.mxu0 0.0
      %2569 = vmatpush1.msra.mxu0 %v2522
      %2570 = vmatprep.subr.mxu0 0.0
      %2571 = vmatpush1.msra.mxu0 %v2521
      %2572 = vmatprep.subr.mxu0 0.0
      %2573 = vmatpush2.msra.mxu0 0.0
      %2574 = vmatprep.subr.mxu0 0.0
      %2575 = vmatpush2.msra.mxu0 0.0
      %2576 = vmatprep.subr.mxu0 0.0
      %2577 = vmatpush2.msra.mxu0 0.0
      %2578 = vmatprep.subr.mxu0 0.0
      %2579 = vmatpush2.msra.mxu0 0.0
      %2580 = vmatprep.subr.mxu0 0.0
      %2581 = vmatpush2.msra.mxu0 0.0
      %2582 = vmatprep.subr.mxu0 0.0
      %2583 = vmatpush2.msra.mxu0 0.0
      %2584 = vmatprep.subr.mxu0 0.0
      %2585 = vmatpush2.msra.mxu0 0.0
      %2586 = vmatprep.subr.mxu0 0.0
      %2587 = vmatpush2.msra.mxu0 0.0
      %2588 = vmatprep.subr.mxu0 0.0
      %2589 = vmatpush2.msra.mxu0 0.0
      %2590 = vmatprep.subr.mxu0 0.0
      %2591 = vmatpush2.msra.mxu0 0.0
      %2592 = vmatprep.subr.mxu0 0.0
      %2593 = vmatpush2.msra.mxu0 0.0
      %2594 = vmatprep.subr.mxu0 0.0
      %2595 = vmatpush2.msra.mxu0 0.0
      %2596 = vmatprep.subr.mxu0 0.0
      %2597 = vmatpush2.msra.mxu0 0.0
      %2598 = vmatprep.subr.mxu0 0.0
      %2599 = vmatpush2.msra.mxu0 0.0
      %2600 = vmatprep.subr.mxu0 0.0
      %2601 = vmatpush2.msra.mxu0 0.0
      %2602 = vmatprep.subr.mxu0 0.0
      %2603 = vmatpush2.msra.mxu0 0.0
      %2604 = vmatprep.mubr.f32.mxu0 0.0
      %2605 = vmatmul.mubr.f32.gmra.mxu0 %v2535
      %v2606 = vpop.f32.mrf.mxu0
      %v2607 = vadd.f32 %v2532, %v2606
      %v2608 = vpop.f32.mrf.mxu0
      %2609 = vmatprep.mubr.f32.mxu0 0.0
      %2610 = vmatmul.mubr.f32.gmra.mxu0 %v2538
      %v2611 = vpop.f32.mrf.mxu0
      %v2612 = vadd.f32 %v2532, %v2611
      %v2613 = vpop.f32.mrf.mxu0
      %2614 = vdwg.mxu0
      %v2615 = vadd.f32 %v827, %v831
      %v2616 = vadd.f32 %v828, %v832
      %v2617 = vadd.f32 %v829, %v833
      %v2618 = vadd.f32 %v830, %v834
      %2623 = vrot.lane.b32.xlu0 %v2521, 96
      %v2624 = vpop.permute.xlu0 %2623
      %2625 = vrot.lane.b32.xlu0 %v2522, 96
      %v2626 = vpop.permute.xlu0 %2625
      %2627 = vrot.lane.b32.xlu0 %v2523, 96
      %v2628 = vpop.permute.xlu0 %2627
      %2629 = vrot.lane.b32.xlu0 %v2524, 96
      %v2630 = vpop.permute.xlu0 %2629
      %2635 = vrot.lane.b32.xlu0 %v2532, 96
      %v2636 = vpop.permute.xlu0 %2635
      %v2639 = vsel %vm848, %v2615, 0
      %v2642 = vsel %vm848, %v2616, 0
      %v2645 = vsel %vm848, %v2617, 0
      %v2648 = vsel %vm848, %v2618, 0
      %2650 = vmatprep.subr.mxu0 0.0
      %2651 = vmatpush1.msra.mxu0 0.0
      %2652 = vmatprep.subr.mxu0 0.0
      %2653 = vmatpush1.msra.mxu0 0.0
      %2654 = vmatprep.subr.mxu0 0.0
      %2655 = vmatpush1.msra.mxu0 0.0
      %2656 = vmatprep.subr.mxu0 0.0
      %2657 = vmatpush1.msra.mxu0 0.0
      %2658 = vmatprep.subr.mxu0 0.0
      %2659 = vmatpush1.msra.mxu0 0.0
      %2660 = vmatprep.subr.mxu0 0.0
      %2661 = vmatpush1.msra.mxu0 0.0
      %2662 = vmatprep.subr.mxu0 0.0
      %2663 = vmatpush1.msra.mxu0 0.0
      %2664 = vmatprep.subr.mxu0 0.0
      %2665 = vmatpush1.msra.mxu0 0.0
      %2666 = vmatprep.subr.mxu0 0.0
      %2667 = vmatpush1.msra.mxu0 0.0
      %2668 = vmatprep.subr.mxu0 0.0
      %2669 = vmatpush1.msra.mxu0 0.0
      %2670 = vmatprep.subr.mxu0 0.0
      %2671 = vmatpush1.msra.mxu0 0.0
      %2672 = vmatprep.subr.mxu0 0.0
      %2673 = vmatpush1.msra.mxu0 0.0
      %2674 = vmatprep.subr.mxu0 0.0
      %2675 = vmatpush1.msra.mxu0 %v2630
      %2676 = vmatprep.subr.mxu0 0.0
      %2677 = vmatpush1.msra.mxu0 %v2628
      %2678 = vmatprep.subr.mxu0 0.0
      %2679 = vmatpush1.msra.mxu0 %v2626
      %2680 = vmatprep.subr.mxu0 0.0
      %2681 = vmatpush1.msra.mxu0 %v2624
      %2682 = vmatprep.subr.mxu0 0.0
      %2683 = vmatpush2.msra.mxu0 0.0
      %2684 = vmatprep.subr.mxu0 0.0
      %2685 = vmatpush2.msra.mxu0 0.0
      %2686 = vmatprep.subr.mxu0 0.0
      %2687 = vmatpush2.msra.mxu0 0.0
      %2688 = vmatprep.subr.mxu0 0.0
      %2689 = vmatpush2.msra.mxu0 0.0
      %2690 = vmatprep.subr.mxu0 0.0
      %2691 = vmatpush2.msra.mxu0 0.0
      %2692 = vmatprep.subr.mxu0 0.0
      %2693 = vmatpush2.msra.mxu0 0.0
      %2694 = vmatprep.subr.mxu0 0.0
      %2695 = vmatpush2.msra.mxu0 0.0
      %2696 = vmatprep.subr.mxu0 0.0
      %2697 = vmatpush2.msra.mxu0 0.0
      %2698 = vmatprep.subr.mxu0 0.0
      %2699 = vmatpush2.msra.mxu0 0.0
      %2700 = vmatprep.subr.mxu0 0.0
      %2701 = vmatpush2.msra.mxu0 0.0
      %2702 = vmatprep.subr.mxu0 0.0
      %2703 = vmatpush2.msra.mxu0 0.0
      %2704 = vmatprep.subr.mxu0 0.0
      %2705 = vmatpush2.msra.mxu0 0.0
      %2706 = vmatprep.subr.mxu0 0.0
      %2707 = vmatpush2.msra.mxu0 0.0
      %2708 = vmatprep.subr.mxu0 0.0
      %2709 = vmatpush2.msra.mxu0 0.0
      %2710 = vmatprep.subr.mxu0 0.0
      %2711 = vmatpush2.msra.mxu0 0.0
      %2712 = vmatprep.subr.mxu0 0.0
      %2713 = vmatpush2.msra.mxu0 0.0
      %2714 = vmatprep.mubr.f32.mxu0 0.0
      %2715 = vmatmul.mubr.f32.gmra.mxu0 %v2639
      %v2716 = vpop.f32.mrf.mxu0
      %v2717 = vadd.f32 %v2636, %v2716
      %v2718 = vpop.f32.mrf.mxu0
      %2719 = vmatprep.mubr.f32.mxu0 0.0
      %2720 = vmatmul.mubr.f32.gmra.mxu0 %v2642
      %v2721 = vpop.f32.mrf.mxu0
      %v2722 = vadd.f32 %v2636, %v2721
      %v2723 = vpop.f32.mrf.mxu0
      %2724 = vmatprep.mubr.f32.mxu0 0.0
      %2725 = vmatmul.mubr.f32.gmra.mxu0 %v2645
      %v2726 = vpop.f32.mrf.mxu0
      %v2727 = vadd.f32 %v2636, %v2726
      %v2728 = vpop.f32.mrf.mxu0
      %2729 = vmatprep.mubr.f32.mxu0 0.0
      %2730 = vmatmul.mubr.f32.gmra.mxu0 %v2648
      %v2731 = vpop.f32.mrf.mxu0
      %v2732 = vadd.f32 %v2636, %v2731
      %v2733 = vpop.f32.mrf.mxu0
      %2734 = vdwg.mxu0
      %2735 = vrot.lane.b32.xlu0 %v2521, 64
      %v2736 = vpop.permute.xlu0 %2735
      %2737 = vrot.lane.b32.xlu0 %v2522, 64
      %v2738 = vpop.permute.xlu0 %2737
      %2739 = vrot.lane.b32.xlu0 %v2523, 64
      %v2740 = vpop.permute.xlu0 %2739
      %2741 = vrot.lane.b32.xlu0 %v2524, 64
      %v2742 = vpop.permute.xlu0 %2741
      %2747 = vrot.lane.b32.xlu0 %v2532, 64
      %v2748 = vpop.permute.xlu0 %2747
      %v2751 = vsel %vm848, %v827, 0
      %v2754 = vsel %vm848, %v828, 0
      %v2757 = vsel %vm848, %v829, 0
      %v2760 = vsel %vm848, %v830, 0
      %2762 = vmatprep.subr.mxu0 0.0
      %2763 = vmatpush1.msra.mxu0 0.0
      %2764 = vmatprep.subr.mxu0 0.0
      %2765 = vmatpush1.msra.mxu0 0.0
      %2766 = vmatprep.subr.mxu0 0.0
      %2767 = vmatpush1.msra.mxu0 0.0
      %2768 = vmatprep.subr.mxu0 0.0
      %2769 = vmatpush1.msra.mxu0 0.0
      %2770 = vmatprep.subr.mxu0 0.0
      %2771 = vmatpush1.msra.mxu0 0.0
      %2772 = vmatprep.subr.mxu0 0.0
      %2773 = vmatpush1.msra.mxu0 0.0
      %2774 = vmatprep.subr.mxu0 0.0
      %2775 = vmatpush1.msra.mxu0 0.0
      %2776 = vmatprep.subr.mxu0 0.0
      %2777 = vmatpush1.msra.mxu0 0.0
      %2778 = vmatprep.subr.mxu0 0.0
      %2779 = vmatpush1.msra.mxu0 0.0
      %2780 = vmatprep.subr.mxu0 0.0
      %2781 = vmatpush1.msra.mxu0 0.0
      %2782 = vmatprep.subr.mxu0 0.0
      %2783 = vmatpush1.msra.mxu0 0.0
      %2784 = vmatprep.subr.mxu0 0.0
      %2785 = vmatpush1.msra.mxu0 0.0
      %2786 = vmatprep.subr.mxu0 0.0
      %2787 = vmatpush1.msra.mxu0 %v2742
      %2788 = vmatprep.subr.mxu0 0.0
      %2789 = vmatpush1.msra.mxu0 %v2740
      %2790 = vmatprep.subr.mxu0 0.0
      %2791 = vmatpush1.msra.mxu0 %v2738
      %2792 = vmatprep.subr.mxu0 0.0
      %2793 = vmatpush1.msra.mxu0 %v2736
      %2794 = vmatprep.subr.mxu0 0.0
      %2795 = vmatpush2.msra.mxu0 0.0
      %2796 = vmatprep.subr.mxu0 0.0
      %2797 = vmatpush2.msra.mxu0 0.0
      %2798 = vmatprep.subr.mxu0 0.0
      %2799 = vmatpush2.msra.mxu0 0.0
      %2800 = vmatprep.subr.mxu0 0.0
      %2801 = vmatpush2.msra.mxu0 0.0
      %2802 = vmatprep.subr.mxu0 0.0
      %2803 = vmatpush2.msra.mxu0 0.0
      %2804 = vmatprep.subr.mxu0 0.0
      %2805 = vmatpush2.msra.mxu0 0.0
      %2806 = vmatprep.subr.mxu0 0.0
      %2807 = vmatpush2.msra.mxu0 0.0
      %2808 = vmatprep.subr.mxu0 0.0
      %2809 = vmatpush2.msra.mxu0 0.0
      %2810 = vmatprep.subr.mxu0 0.0
      %2811 = vmatpush2.msra.mxu0 0.0
      %2812 = vmatprep.subr.mxu0 0.0
      %2813 = vmatpush2.msra.mxu0 0.0
      %2814 = vmatprep.subr.mxu0 0.0
      %2815 = vmatpush2.msra.mxu0 0.0
      %2816 = vmatprep.subr.mxu0 0.0
      %2817 = vmatpush2.msra.mxu0 0.0
      %2818 = vmatprep.subr.mxu0 0.0
      %2819 = vmatpush2.msra.mxu0 0.0
      %2820 = vmatprep.subr.mxu0 0.0
      %2821 = vmatpush2.msra.mxu0 0.0
      %2822 = vmatprep.subr.mxu0 0.0
      %2823 = vmatpush2.msra.mxu0 0.0
      %2824 = vmatprep.subr.mxu0 0.0
      %2825 = vmatpush2.msra.mxu0 0.0
      %2826 = vmatprep.mubr.f32.mxu0 0.0
      %2827 = vmatmul.mubr.f32.gmra.mxu0 %v2751
      %v2828 = vpop.f32.mrf.mxu0
      %v2829 = vadd.f32 %v2748, %v2828
      %v2830 = vpop.f32.mrf.mxu0
      %2831 = vmatprep.mubr.f32.mxu0 0.0
      %2832 = vmatmul.mubr.f32.gmra.mxu0 %v2754
      %v2833 = vpop.f32.mrf.mxu0
      %v2834 = vadd.f32 %v2748, %v2833
      %v2835 = vpop.f32.mrf.mxu0
      %2836 = vmatprep.mubr.f32.mxu0 0.0
      %2837 = vmatmul.mubr.f32.gmra.mxu0 %v2757
      %v2838 = vpop.f32.mrf.mxu0
      %v2839 = vadd.f32 %v2748, %v2838
      %v2840 = vpop.f32.mrf.mxu0
      %2841 = vmatprep.mubr.f32.mxu0 0.0
      %2842 = vmatmul.mubr.f32.gmra.mxu0 %v2760
      %v2843 = vpop.f32.mrf.mxu0
      %v2844 = vadd.f32 %v2748, %v2843
      %v2845 = vpop.f32.mrf.mxu0
      %2846 = vdwg.mxu0
      %v2847 = vld [vmem:[%s6] sm:$0xff]
      %v2848 = vld [vmem:[%s6 + $0x8] sm:$0xff]
      %v2849 = vld [vmem:[%s6 + $0x10] sm:$0xff]
      %v2850 = vld [vmem:[%s6 + $0x18] sm:$0xff]
      %v2851 = vld [vmem:[%s7] sm:$0x1]
      %2854 = vrot.lane.b32.xlu0 %v2607, 120
      %v2855 = vpop.permute.xlu0 %2854
      %2856 = vrot.lane.b32.xlu0 %v2612, 120
      %v2857 = vpop.permute.xlu0 %2856
      %2858 = vrot.lane.b32.xlu0 %v2607, 112
      %v2859 = vpop.permute.xlu0 %2858
      %2860 = vrot.lane.b32.xlu0 %v2612, 112
      %v2861 = vpop.permute.xlu0 %2860
      %2862 = vrot.lane.b32.xlu0 %v2607, 104
      %v2863 = vpop.permute.xlu0 %2862
      %2864 = vrot.lane.b32.xlu0 %v2612, 104
      %v2865 = vpop.permute.xlu0 %2864
      %2870 = vrot.lane.b32.xlu0 %v2717, 120
      %v2871 = vpop.permute.xlu0 %2870
      %2872 = vrot.lane.b32.xlu0 %v2722, 120
      %v2873 = vpop.permute.xlu0 %2872
      %2874 = vrot.lane.b32.xlu0 %v2727, 120
      %v2875 = vpop.permute.xlu0 %2874
      %2876 = vrot.lane.b32.xlu0 %v2732, 120
      %v2877 = vpop.permute.xlu0 %2876
      %2878 = vrot.lane.b32.xlu0 %v2717, 112
      %v2879 = vpop.permute.xlu0 %2878
      %2880 = vrot.lane.b32.xlu0 %v2722, 112
      %v2881 = vpop.permute.xlu0 %2880
      %2882 = vrot.lane.b32.xlu0 %v2727, 112
      %v2883 = vpop.permute.xlu0 %2882
      %2884 = vrot.lane.b32.xlu0 %v2732, 112
      %v2885 = vpop.permute.xlu0 %2884
      %2886 = vrot.lane.b32.xlu0 %v2717, 104
      %v2887 = vpop.permute.xlu0 %2886
      %2888 = vrot.lane.b32.xlu0 %v2722, 104
      %v2889 = vpop.permute.xlu0 %2888
      %2890 = vrot.lane.b32.xlu0 %v2727, 104
      %v2891 = vpop.permute.xlu0 %2890
      %2892 = vrot.lane.b32.xlu0 %v2732, 104
      %v2893 = vpop.permute.xlu0 %2892
      %2898 = vrot.lane.b32.xlu0 %v2829, 120
      %v2899 = vpop.permute.xlu0 %2898
      %2900 = vrot.lane.b32.xlu0 %v2834, 120
      %v2901 = vpop.permute.xlu0 %2900
      %2902 = vrot.lane.b32.xlu0 %v2839, 120
      %v2903 = vpop.permute.xlu0 %2902
      %2904 = vrot.lane.b32.xlu0 %v2844, 120
      %v2905 = vpop.permute.xlu0 %2904
      %2910 = vrot.lane.b32.xlu0 %v2829, 112
      %v2911 = vpop.permute.xlu0 %2910
      %2912 = vrot.lane.b32.xlu0 %v2834, 112
      %v2913 = vpop.permute.xlu0 %2912
      %2914 = vrot.lane.b32.xlu0 %v2839, 112
      %v2915 = vpop.permute.xlu0 %2914
      %2916 = vrot.lane.b32.xlu0 %v2844, 112
      %v2917 = vpop.permute.xlu0 %2916
      %2922 = vrot.lane.b32.xlu0 %v2829, 104
      %v2923 = vpop.permute.xlu0 %2922
      %2924 = vrot.lane.b32.xlu0 %v2834, 104
      %v2925 = vpop.permute.xlu0 %2924
      %2926 = vrot.lane.b32.xlu0 %v2839, 104
      %v2927 = vpop.permute.xlu0 %2926
      %2928 = vrot.lane.b32.xlu0 %v2844, 104
      %v2929 = vpop.permute.xlu0 %2928
      %v2934 = vsel %vm1071, %v2607, 0
      %v2936 = vsel %vm1071, %v2717, 0
      %v2938 = vsel %vm1071, %v2722, 0
      %2940 = vmatprep.subr.mxu0 0.0
      %2941 = vmatpush1.xpose.msra.mxu0 0.0
      %2942 = vmatprep.subr.mxu0 0.0
      %2943 = vmatpush1.xpose.msra.mxu0 0.0
      %2944 = vmatprep.subr.mxu0 0.0
      %2945 = vmatpush1.xpose.msra.mxu0 0.0
      %2946 = vmatprep.subr.mxu0 0.0
      %2947 = vmatpush1.xpose.msra.mxu0 0.0
      %2948 = vmatprep.subr.mxu0 0.0
      %2949 = vmatpush1.xpose.msra.mxu0 0.0
      %2950 = vmatprep.subr.mxu0 0.0
      %2951 = vmatpush1.xpose.msra.mxu0 0.0
      %2952 = vmatprep.subr.mxu0 0.0
      %2953 = vmatpush1.xpose.msra.mxu0 0.0
      %2954 = vmatprep.subr.mxu0 0.0
      %2955 = vmatpush1.xpose.msra.mxu0 0.0
      %2956 = vmatprep.subr.mxu0 0.0
      %2957 = vmatpush1.xpose.msra.mxu0 0.0
      %2958 = vmatprep.subr.mxu0 0.0
      %2959 = vmatpush1.xpose.msra.mxu0 0.0
      %2960 = vmatprep.subr.mxu0 0.0
      %2961 = vmatpush1.xpose.msra.mxu0 0.0
      %2962 = vmatprep.subr.mxu0 0.0
      %2963 = vmatpush1.xpose.msra.mxu0 0.0
      %2964 = vmatprep.subr.mxu0 0.0
      %2965 = vmatpush1.xpose.msra.mxu0 0.0
      %2966 = vmatprep.subr.mxu0 0.0
      %2967 = vmatpush1.xpose.msra.mxu0 0.0
      %2968 = vmatprep.subr.mxu0 0.0
      %2969 = vmatpush1.xpose.msra.mxu0 %v2938
      %2970 = vmatprep.subr.mxu0 0.0
      %2971 = vmatpush1.xpose.msra.mxu0 %v2936
      %2972 = vmatprep.subr.mxu0 0.0
      %2973 = vmatpush2.xpose.msra.mxu0 0.0
      %2974 = vmatprep.subr.mxu0 0.0
      %2975 = vmatpush2.xpose.msra.mxu0 0.0
      %2976 = vmatprep.subr.mxu0 0.0
      %2977 = vmatpush2.xpose.msra.mxu0 0.0
      %2978 = vmatprep.subr.mxu0 0.0
      %2979 = vmatpush2.xpose.msra.mxu0 0.0
      %2980 = vmatprep.subr.mxu0 0.0
      %2981 = vmatpush2.xpose.msra.mxu0 0.0
      %2982 = vmatprep.subr.mxu0 0.0
      %2983 = vmatpush2.xpose.msra.mxu0 0.0
      %2984 = vmatprep.subr.mxu0 0.0
      %2985 = vmatpush2.xpose.msra.mxu0 0.0
      %2986 = vmatprep.subr.mxu0 0.0
      %2987 = vmatpush2.xpose.msra.mxu0 0.0
      %2988 = vmatprep.subr.mxu0 0.0
      %2989 = vmatpush2.xpose.msra.mxu0 0.0
      %2990 = vmatprep.subr.mxu0 0.0
      %2991 = vmatpush2.xpose.msra.mxu0 0.0
      %2992 = vmatprep.subr.mxu0 0.0
      %2993 = vmatpush2.xpose.msra.mxu0 0.0
      %2994 = vmatprep.subr.mxu0 0.0
      %2995 = vmatpush2.xpose.msra.mxu0 0.0
      %2996 = vmatprep.subr.mxu0 0.0
      %2997 = vmatpush2.xpose.msra.mxu0 0.0
      %2998 = vmatprep.subr.mxu0 0.0
      %2999 = vmatpush2.xpose.msra.mxu0 0.0
      %3000 = vmatprep.subr.mxu0 0.0
      %3001 = vmatpush2.xpose.msra.mxu0 0.0
      %3002 = vmatprep.subr.mxu0 0.0
      %3003 = vmatpush2.xpose.msra.mxu0 0.0
      %3004 = vmatprep.mubr.f32.mxu0 0.0
      %3005 = vmatmul.mubr.f32.gmra.mxu0 %v2934
      %v3006 = vpop.f32.mrf.mxu0
      %v3007 = vadd.f32 0.0, %v3006
      %v3008 = vpop.f32.mrf.mxu0
      %3009 = vdwg.mxu0
      %v3010 = vsel %vm1071, %v2855, 0
      %v3012 = vsel %vm1071, %v2871, 0
      %v3014 = vsel %vm1071, %v2873, 0
      %3016 = vmatprep.subr.mxu0 0.0
      %3017 = vmatpush1.xpose.msra.mxu0 0.0
      %3018 = vmatprep.subr.mxu0 0.0
      %3019 = vmatpush1.xpose.msra.mxu0 0.0
      %3020 = vmatprep.subr.mxu0 0.0
      %3021 = vmatpush1.xpose.msra.mxu0 0.0
      %3022 = vmatprep.subr.mxu0 0.0
      %3023 = vmatpush1.xpose.msra.mxu0 0.0
      %3024 = vmatprep.subr.mxu0 0.0
      %3025 = vmatpush1.xpose.msra.mxu0 0.0
      %3026 = vmatprep.subr.mxu0 0.0
      %3027 = vmatpush1.xpose.msra.mxu0 0.0
      %3028 = vmatprep.subr.mxu0 0.0
      %3029 = vmatpush1.xpose.msra.mxu0 0.0
      %3030 = vmatprep.subr.mxu0 0.0
      %3031 = vmatpush1.xpose.msra.mxu0 0.0
      %3032 = vmatprep.subr.mxu0 0.0
      %3033 = vmatpush1.xpose.msra.mxu0 0.0
      %3034 = vmatprep.subr.mxu0 0.0
      %3035 = vmatpush1.xpose.msra.mxu0 0.0
      %3036 = vmatprep.subr.mxu0 0.0
      %3037 = vmatpush1.xpose.msra.mxu0 0.0
      %3038 = vmatprep.subr.mxu0 0.0
      %3039 = vmatpush1.xpose.msra.mxu0 0.0
      %3040 = vmatprep.subr.mxu0 0.0
      %3041 = vmatpush1.xpose.msra.mxu0 0.0
      %3042 = vmatprep.subr.mxu0 0.0
      %3043 = vmatpush1.xpose.msra.mxu0 0.0
      %3044 = vmatprep.subr.mxu0 0.0
      %3045 = vmatpush1.xpose.msra.mxu0 %v3014
      %3046 = vmatprep.subr.mxu0 0.0
      %3047 = vmatpush1.xpose.msra.mxu0 %v3012
      %3048 = vmatprep.subr.mxu0 0.0
      %3049 = vmatpush2.xpose.msra.mxu0 0.0
      %3050 = vmatprep.subr.mxu0 0.0
      %3051 = vmatpush2.xpose.msra.mxu0 0.0
      %3052 = vmatprep.subr.mxu0 0.0
      %3053 = vmatpush2.xpose.msra.mxu0 0.0
      %3054 = vmatprep.subr.mxu0 0.0
      %3055 = vmatpush2.xpose.msra.mxu0 0.0
      %3056 = vmatprep.subr.mxu0 0.0
      %3057 = vmatpush2.xpose.msra.mxu0 0.0
      %3058 = vmatprep.subr.mxu0 0.0
      %3059 = vmatpush2.xpose.msra.mxu0 0.0
      %3060 = vmatprep.subr.mxu0 0.0
      %3061 = vmatpush2.xpose.msra.mxu0 0.0
      %3062 = vmatprep.subr.mxu0 0.0
      %3063 = vmatpush2.xpose.msra.mxu0 0.0
      %3064 = vmatprep.subr.mxu0 0.0
      %3065 = vmatpush2.xpose.msra.mxu0 0.0
      %3066 = vmatprep.subr.mxu0 0.0
      %3067 = vmatpush2.xpose.msra.mxu0 0.0
      %3068 = vmatprep.subr.mxu0 0.0
      %3069 = vmatpush2.xpose.msra.mxu0 0.0
      %3070 = vmatprep.subr.mxu0 0.0
      %3071 = vmatpush2.xpose.msra.mxu0 0.0
      %3072 = vmatprep.subr.mxu0 0.0
      %3073 = vmatpush2.xpose.msra.mxu0 0.0
      %3074 = vmatprep.subr.mxu0 0.0
      %3075 = vmatpush2.xpose.msra.mxu0 0.0
      %3076 = vmatprep.subr.mxu0 0.0
      %3077 = vmatpush2.xpose.msra.mxu0 0.0
      %3078 = vmatprep.subr.mxu0 0.0
      %3079 = vmatpush2.xpose.msra.mxu0 0.0
      %3080 = vmatprep.mubr.f32.mxu0 0.0
      %3081 = vmatmul.mubr.f32.gmra.mxu0 %v3010
      %v3082 = vpop.f32.mrf.mxu0
      %v3083 = vadd.f32 0.0, %v3082
      %v3084 = vpop.f32.mrf.mxu0
      %3085 = vdwg.mxu0
      %v3086 = vsel %vm1071, %v2859, 0
      %v3088 = vsel %vm1071, %v2879, 0
      %v3090 = vsel %vm1071, %v2881, 0
      %3092 = vmatprep.subr.mxu0 0.0
      %3093 = vmatpush1.xpose.msra.mxu0 0.0
      %3094 = vmatprep.subr.mxu0 0.0
      %3095 = vmatpush1.xpose.msra.mxu0 0.0
      %3096 = vmatprep.subr.mxu0 0.0
      %3097 = vmatpush1.xpose.msra.mxu0 0.0
      %3098 = vmatprep.subr.mxu0 0.0
      %3099 = vmatpush1.xpose.msra.mxu0 0.0
      %3100 = vmatprep.subr.mxu0 0.0
      %3101 = vmatpush1.xpose.msra.mxu0 0.0
      %3102 = vmatprep.subr.mxu0 0.0
      %3103 = vmatpush1.xpose.msra.mxu0 0.0
      %3104 = vmatprep.subr.mxu0 0.0
      %3105 = vmatpush1.xpose.msra.mxu0 0.0
      %3106 = vmatprep.subr.mxu0 0.0
      %3107 = vmatpush1.xpose.msra.mxu0 0.0
      %3108 = vmatprep.subr.mxu0 0.0
      %3109 = vmatpush1.xpose.msra.mxu0 0.0
      %3110 = vmatprep.subr.mxu0 0.0
      %3111 = vmatpush1.xpose.msra.mxu0 0.0
      %3112 = vmatprep.subr.mxu0 0.0
      %3113 = vmatpush1.xpose.msra.mxu0 0.0
      %3114 = vmatprep.subr.mxu0 0.0
      %3115 = vmatpush1.xpose.msra.mxu0 0.0
      %3116 = vmatprep.subr.mxu0 0.0
      %3117 = vmatpush1.xpose.msra.mxu0 0.0
      %3118 = vmatprep.subr.mxu0 0.0
      %3119 = vmatpush1.xpose.msra.mxu0 0.0
      %3120 = vmatprep.subr.mxu0 0.0
      %3121 = vmatpush1.xpose.msra.mxu0 %v3090
      %3122 = vmatprep.subr.mxu0 0.0
      %3123 = vmatpush1.xpose.msra.mxu0 %v3088
      %3124 = vmatprep.subr.mxu0 0.0
      %3125 = vmatpush2.xpose.msra.mxu0 0.0
      %3126 = vmatprep.subr.mxu0 0.0
      %3127 = vmatpush2.xpose.msra.mxu0 0.0
      %3128 = vmatprep.subr.mxu0 0.0
      %3129 = vmatpush2.xpose.msra.mxu0 0.0
      %3130 = vmatprep.subr.mxu0 0.0
      %3131 = vmatpush2.xpose.msra.mxu0 0.0
      %3132 = vmatprep.subr.mxu0 0.0
      %3133 = vmatpush2.xpose.msra.mxu0 0.0
      %3134 = vmatprep.subr.mxu0 0.0
      %3135 = vmatpush2.xpose.msra.mxu0 0.0
      %3136 = vmatprep.subr.mxu0 0.0
      %3137 = vmatpush2.xpose.msra.mxu0 0.0
      %3138 = vmatprep.subr.mxu0 0.0
      %3139 = vmatpush2.xpose.msra.mxu0 0.0
      %3140 = vmatprep.subr.mxu0 0.0
      %3141 = vmatpush2.xpose.msra.mxu0 0.0
      %3142 = vmatprep.subr.mxu0 0.0
      %3143 = vmatpush2.xpose.msra.mxu0 0.0
      %3144 = vmatprep.subr.mxu0 0.0
      %3145 = vmatpush2.xpose.msra.mxu0 0.0
      %3146 = vmatprep.subr.mxu0 0.0
      %3147 = vmatpush2.xpose.msra.mxu0 0.0
      %3148 = vmatprep.subr.mxu0 0.0
      %3149 = vmatpush2.xpose.msra.mxu0 0.0
      %3150 = vmatprep.subr.mxu0 0.0
      %3151 = vmatpush2.xpose.msra.mxu0 0.0
      %3152 = vmatprep.subr.mxu0 0.0
      %3153 = vmatpush2.xpose.msra.mxu0 0.0
      %3154 = vmatprep.subr.mxu0 0.0
      %3155 = vmatpush2.xpose.msra.mxu0 0.0
      %3156 = vmatprep.mubr.f32.mxu0 0.0
      %3157 = vmatmul.mubr.f32.gmra.mxu0 %v3086
      %v3158 = vpop.f32.mrf.mxu0
      %v3159 = vadd.f32 0.0, %v3158
      %v3160 = vpop.f32.mrf.mxu0
      %3161 = vdwg.mxu0
      %v3162 = vsel %vm1071, %v2863, 0
      %v3164 = vsel %vm1071, %v2887, 0
      %v3166 = vsel %vm1071, %v2889, 0
      %3168 = vmatprep.subr.mxu0 0.0
      %3169 = vmatpush1.xpose.msra.mxu0 0.0
      %3170 = vmatprep.subr.mxu0 0.0
      %3171 = vmatpush1.xpose.msra.mxu0 0.0
      %3172 = vmatprep.subr.mxu0 0.0
      %3173 = vmatpush1.xpose.msra.mxu0 0.0
      %3174 = vmatprep.subr.mxu0 0.0
      %3175 = vmatpush1.xpose.msra.mxu0 0.0
      %3176 = vmatprep.subr.mxu0 0.0
      %3177 = vmatpush1.xpose.msra.mxu0 0.0
      %3178 = vmatprep.subr.mxu0 0.0
      %3179 = vmatpush1.xpose.msra.mxu0 0.0
      %3180 = vmatprep.subr.mxu0 0.0
      %3181 = vmatpush1.xpose.msra.mxu0 0.0
      %3182 = vmatprep.subr.mxu0 0.0
      %3183 = vmatpush1.xpose.msra.mxu0 0.0
      %3184 = vmatprep.subr.mxu0 0.0
      %3185 = vmatpush1.xpose.msra.mxu0 0.0
      %3186 = vmatprep.subr.mxu0 0.0
      %3187 = vmatpush1.xpose.msra.mxu0 0.0
      %3188 = vmatprep.subr.mxu0 0.0
      %3189 = vmatpush1.xpose.msra.mxu0 0.0
      %3190 = vmatprep.subr.mxu0 0.0
      %3191 = vmatpush1.xpose.msra.mxu0 0.0
      %3192 = vmatprep.subr.mxu0 0.0
      %3193 = vmatpush1.xpose.msra.mxu0 0.0
      %3194 = vmatprep.subr.mxu0 0.0
      %3195 = vmatpush1.xpose.msra.mxu0 0.0
      %3196 = vmatprep.subr.mxu0 0.0
      %3197 = vmatpush1.xpose.msra.mxu0 %v3166
      %3198 = vmatprep.subr.mxu0 0.0
      %3199 = vmatpush1.xpose.msra.mxu0 %v3164
      %3200 = vmatprep.subr.mxu0 0.0
      %3201 = vmatpush2.xpose.msra.mxu0 0.0
      %3202 = vmatprep.subr.mxu0 0.0
      %3203 = vmatpush2.xpose.msra.mxu0 0.0
      %3204 = vmatprep.subr.mxu0 0.0
      %3205 = vmatpush2.xpose.msra.mxu0 0.0
      %3206 = vmatprep.subr.mxu0 0.0
      %3207 = vmatpush2.xpose.msra.mxu0 0.0
      %3208 = vmatprep.subr.mxu0 0.0
      %3209 = vmatpush2.xpose.msra.mxu0 0.0
      %3210 = vmatprep.subr.mxu0 0.0
      %3211 = vmatpush2.xpose.msra.mxu0 0.0
      %3212 = vmatprep.subr.mxu0 0.0
      %3213 = vmatpush2.xpose.msra.mxu0 0.0
      %3214 = vmatprep.subr.mxu0 0.0
      %3215 = vmatpush2.xpose.msra.mxu0 0.0
      %3216 = vmatprep.subr.mxu0 0.0
      %3217 = vmatpush2.xpose.msra.mxu0 0.0
      %3218 = vmatprep.subr.mxu0 0.0
      %3219 = vmatpush2.xpose.msra.mxu0 0.0
      %3220 = vmatprep.subr.mxu0 0.0
      %3221 = vmatpush2.xpose.msra.mxu0 0.0
      %3222 = vmatprep.subr.mxu0 0.0
      %3223 = vmatpush2.xpose.msra.mxu0 0.0
      %3224 = vmatprep.subr.mxu0 0.0
      %3225 = vmatpush2.xpose.msra.mxu0 0.0
      %3226 = vmatprep.subr.mxu0 0.0
      %3227 = vmatpush2.xpose.msra.mxu0 0.0
      %3228 = vmatprep.subr.mxu0 0.0
      %3229 = vmatpush2.xpose.msra.mxu0 0.0
      %3230 = vmatprep.subr.mxu0 0.0
      %3231 = vmatpush2.xpose.msra.mxu0 0.0
      %3232 = vmatprep.mubr.f32.mxu0 0.0
      %3233 = vmatmul.mubr.f32.gmra.mxu0 %v3162
      %v3234 = vpop.f32.mrf.mxu0
      %v3235 = vadd.f32 0.0, %v3234
      %v3236 = vpop.f32.mrf.mxu0
      %3237 = vdwg.mxu0
      %v3238 = vsel %vm1071, %v2612, 0
      %v3240 = vsel %vm1071, %v2727, 0
      %v3242 = vsel %vm1071, %v2732, 0
      %3244 = vmatprep.subr.mxu0 0.0
      %3245 = vmatpush1.xpose.msra.mxu0 0.0
      %3246 = vmatprep.subr.mxu0 0.0
      %3247 = vmatpush1.xpose.msra.mxu0 0.0
      %3248 = vmatprep.subr.mxu0 0.0
      %3249 = vmatpush1.xpose.msra.mxu0 0.0
      %3250 = vmatprep.subr.mxu0 0.0
      %3251 = vmatpush1.xpose.msra.mxu0 0.0
      %3252 = vmatprep.subr.mxu0 0.0
      %3253 = vmatpush1.xpose.msra.mxu0 0.0
      %3254 = vmatprep.subr.mxu0 0.0
      %3255 = vmatpush1.xpose.msra.mxu0 0.0
      %3256 = vmatprep.subr.mxu0 0.0
      %3257 = vmatpush1.xpose.msra.mxu0 0.0
      %3258 = vmatprep.subr.mxu0 0.0
      %3259 = vmatpush1.xpose.msra.mxu0 0.0
      %3260 = vmatprep.subr.mxu0 0.0
      %3261 = vmatpush1.xpose.msra.mxu0 0.0
      %3262 = vmatprep.subr.mxu0 0.0
      %3263 = vmatpush1.xpose.msra.mxu0 0.0
      %3264 = vmatprep.subr.mxu0 0.0
      %3265 = vmatpush1.xpose.msra.mxu0 0.0
      %3266 = vmatprep.subr.mxu0 0.0
      %3267 = vmatpush1.xpose.msra.mxu0 0.0
      %3268 = vmatprep.subr.mxu0 0.0
      %3269 = vmatpush1.xpose.msra.mxu0 0.0
      %3270 = vmatprep.subr.mxu0 0.0
      %3271 = vmatpush1.xpose.msra.mxu0 0.0
      %3272 = vmatprep.subr.mxu0 0.0
      %3273 = vmatpush1.xpose.msra.mxu0 %v3242
      %3274 = vmatprep.subr.mxu0 0.0
      %3275 = vmatpush1.xpose.msra.mxu0 %v3240
      %3276 = vmatprep.subr.mxu0 0.0
      %3277 = vmatpush2.xpose.msra.mxu0 0.0
      %3278 = vmatprep.subr.mxu0 0.0
      %3279 = vmatpush2.xpose.msra.mxu0 0.0
      %3280 = vmatprep.subr.mxu0 0.0
      %3281 = vmatpush2.xpose.msra.mxu0 0.0
      %3282 = vmatprep.subr.mxu0 0.0
      %3283 = vmatpush2.xpose.msra.mxu0 0.0
      %3284 = vmatprep.subr.mxu0 0.0
      %3285 = vmatpush2.xpose.msra.mxu0 0.0
      %3286 = vmatprep.subr.mxu0 0.0
      %3287 = vmatpush2.xpose.msra.mxu0 0.0
      %3288 = vmatprep.subr.mxu0 0.0
      %3289 = vmatpush2.xpose.msra.mxu0 0.0
      %3290 = vmatprep.subr.mxu0 0.0
      %3291 = vmatpush2.xpose.msra.mxu0 0.0
      %3292 = vmatprep.subr.mxu0 0.0
      %3293 = vmatpush2.xpose.msra.mxu0 0.0
      %3294 = vmatprep.subr.mxu0 0.0
      %3295 = vmatpush2.xpose.msra.mxu0 0.0
      %3296 = vmatprep.subr.mxu0 0.0
      %3297 = vmatpush2.xpose.msra.mxu0 0.0
      %3298 = vmatprep.subr.mxu0 0.0
      %3299 = vmatpush2.xpose.msra.mxu0 0.0
      %3300 = vmatprep.subr.mxu0 0.0
      %3301 = vmatpush2.xpose.msra.mxu0 0.0
      %3302 = vmatprep.subr.mxu0 0.0
      %3303 = vmatpush2.xpose.msra.mxu0 0.0
      %3304 = vmatprep.subr.mxu0 0.0
      %3305 = vmatpush2.xpose.msra.mxu0 0.0
      %3306 = vmatprep.subr.mxu0 0.0
      %3307 = vmatpush2.xpose.msra.mxu0 0.0
      %3308 = vmatprep.mubr.f32.mxu0 0.0
      %3309 = vmatmul.mubr.f32.gmra.mxu0 %v3238
      %v3310 = vpop.f32.mrf.mxu0
      %v3311 = vadd.f32 0.0, %v3310
      %v3312 = vpop.f32.mrf.mxu0
      %3313 = vdwg.mxu0
      %v3314 = vsel %vm1071, %v2857, 0
      %v3316 = vsel %vm1071, %v2875, 0
      %v3318 = vsel %vm1071, %v2877, 0
      %3320 = vmatprep.subr.mxu0 0.0
      %3321 = vmatpush1.xpose.msra.mxu0 0.0
      %3322 = vmatprep.subr.mxu0 0.0
      %3323 = vmatpush1.xpose.msra.mxu0 0.0
      %3324 = vmatprep.subr.mxu0 0.0
      %3325 = vmatpush1.xpose.msra.mxu0 0.0
      %3326 = vmatprep.subr.mxu0 0.0
      %3327 = vmatpush1.xpose.msra.mxu0 0.0
      %3328 = vmatprep.subr.mxu0 0.0
      %3329 = vmatpush1.xpose.msra.mxu0 0.0
      %3330 = vmatprep.subr.mxu0 0.0
      %3331 = vmatpush1.xpose.msra.mxu0 0.0
      %3332 = vmatprep.subr.mxu0 0.0
      %3333 = vmatpush1.xpose.msra.mxu0 0.0
      %3334 = vmatprep.subr.mxu0 0.0
      %3335 = vmatpush1.xpose.msra.mxu0 0.0
      %3336 = vmatprep.subr.mxu0 0.0
      %3337 = vmatpush1.xpose.msra.mxu0 0.0
      %3338 = vmatprep.subr.mxu0 0.0
      %3339 = vmatpush1.xpose.msra.mxu0 0.0
      %3340 = vmatprep.subr.mxu0 0.0
      %3341 = vmatpush1.xpose.msra.mxu0 0.0
      %3342 = vmatprep.subr.mxu0 0.0
      %3343 = vmatpush1.xpose.msra.mxu0 0.0
      %3344 = vmatprep.subr.mxu0 0.0
      %3345 = vmatpush1.xpose.msra.mxu0 0.0
      %3346 = vmatprep.subr.mxu0 0.0
      %3347 = vmatpush1.xpose.msra.mxu0 0.0
      %3348 = vmatprep.subr.mxu0 0.0
      %3349 = vmatpush1.xpose.msra.mxu0 %v3318
      %3350 = vmatprep.subr.mxu0 0.0
      %3351 = vmatpush1.xpose.msra.mxu0 %v3316
      %3352 = vmatprep.subr.mxu0 0.0
      %3353 = vmatpush2.xpose.msra.mxu0 0.0
      %3354 = vmatprep.subr.mxu0 0.0
      %3355 = vmatpush2.xpose.msra.mxu0 0.0
      %3356 = vmatprep.subr.mxu0 0.0
      %3357 = vmatpush2.xpose.msra.mxu0 0.0
      %3358 = vmatprep.subr.mxu0 0.0
      %3359 = vmatpush2.xpose.msra.mxu0 0.0
      %3360 = vmatprep.subr.mxu0 0.0
      %3361 = vmatpush2.xpose.msra.mxu0 0.0
      %3362 = vmatprep.subr.mxu0 0.0
      %3363 = vmatpush2.xpose.msra.mxu0 0.0
      %3364 = vmatprep.subr.mxu0 0.0
      %3365 = vmatpush2.xpose.msra.mxu0 0.0
      %3366 = vmatprep.subr.mxu0 0.0
      %3367 = vmatpush2.xpose.msra.mxu0 0.0
      %3368 = vmatprep.subr.mxu0 0.0
      %3369 = vmatpush2.xpose.msra.mxu0 0.0
      %3370 = vmatprep.subr.mxu0 0.0
      %3371 = vmatpush2.xpose.msra.mxu0 0.0
      %3372 = vmatprep.subr.mxu0 0.0
      %3373 = vmatpush2.xpose.msra.mxu0 0.0
      %3374 = vmatprep.subr.mxu0 0.0
      %3375 = vmatpush2.xpose.msra.mxu0 0.0
      %3376 = vmatprep.subr.mxu0 0.0
      %3377 = vmatpush2.xpose.msra.mxu0 0.0
      %3378 = vmatprep.subr.mxu0 0.0
      %3379 = vmatpush2.xpose.msra.mxu0 0.0
      %3380 = vmatprep.subr.mxu0 0.0
      %3381 = vmatpush2.xpose.msra.mxu0 0.0
      %3382 = vmatprep.subr.mxu0 0.0
      %3383 = vmatpush2.xpose.msra.mxu0 0.0
      %3384 = vmatprep.mubr.f32.mxu0 0.0
      %3385 = vmatmul.mubr.f32.gmra.mxu0 %v3314
      %v3386 = vpop.f32.mrf.mxu0
      %v3387 = vadd.f32 0.0, %v3386
      %v3388 = vpop.f32.mrf.mxu0
      %3389 = vdwg.mxu0
      %v3390 = vsel %vm1071, %v2861, 0
      %v3392 = vsel %vm1071, %v2883, 0
      %v3394 = vsel %vm1071, %v2885, 0
      %3396 = vmatprep.subr.mxu0 0.0
      %3397 = vmatpush1.xpose.msra.mxu0 0.0
      %3398 = vmatprep.subr.mxu0 0.0
      %3399 = vmatpush1.xpose.msra.mxu0 0.0
      %3400 = vmatprep.subr.mxu0 0.0
      %3401 = vmatpush1.xpose.msra.mxu0 0.0
      %3402 = vmatprep.subr.mxu0 0.0
      %3403 = vmatpush1.xpose.msra.mxu0 0.0
      %3404 = vmatprep.subr.mxu0 0.0
      %3405 = vmatpush1.xpose.msra.mxu0 0.0
      %3406 = vmatprep.subr.mxu0 0.0
      %3407 = vmatpush1.xpose.msra.mxu0 0.0
      %3408 = vmatprep.subr.mxu0 0.0
      %3409 = vmatpush1.xpose.msra.mxu0 0.0
      %3410 = vmatprep.subr.mxu0 0.0
      %3411 = vmatpush1.xpose.msra.mxu0 0.0
      %3412 = vmatprep.subr.mxu0 0.0
      %3413 = vmatpush1.xpose.msra.mxu0 0.0
      %3414 = vmatprep.subr.mxu0 0.0
      %3415 = vmatpush1.xpose.msra.mxu0 0.0
      %3416 = vmatprep.subr.mxu0 0.0
      %3417 = vmatpush1.xpose.msra.mxu0 0.0
      %3418 = vmatprep.subr.mxu0 0.0
      %3419 = vmatpush1.xpose.msra.mxu0 0.0
      %3420 = vmatprep.subr.mxu0 0.0
      %3421 = vmatpush1.xpose.msra.mxu0 0.0
      %3422 = vmatprep.subr.mxu0 0.0
      %3423 = vmatpush1.xpose.msra.mxu0 0.0
      %3424 = vmatprep.subr.mxu0 0.0
      %3425 = vmatpush1.xpose.msra.mxu0 %v3394
      %3426 = vmatprep.subr.mxu0 0.0
      %3427 = vmatpush1.xpose.msra.mxu0 %v3392
      %3428 = vmatprep.subr.mxu0 0.0
      %3429 = vmatpush2.xpose.msra.mxu0 0.0
      %3430 = vmatprep.subr.mxu0 0.0
      %3431 = vmatpush2.xpose.msra.mxu0 0.0
      %3432 = vmatprep.subr.mxu0 0.0
      %3433 = vmatpush2.xpose.msra.mxu0 0.0
      %3434 = vmatprep.subr.mxu0 0.0
      %3435 = vmatpush2.xpose.msra.mxu0 0.0
      %3436 = vmatprep.subr.mxu0 0.0
      %3437 = vmatpush2.xpose.msra.mxu0 0.0
      %3438 = vmatprep.subr.mxu0 0.0
      %3439 = vmatpush2.xpose.msra.mxu0 0.0
      %3440 = vmatprep.subr.mxu0 0.0
      %3441 = vmatpush2.xpose.msra.mxu0 0.0
      %3442 = vmatprep.subr.mxu0 0.0
      %3443 = vmatpush2.xpose.msra.mxu0 0.0
      %3444 = vmatprep.subr.mxu0 0.0
      %3445 = vmatpush2.xpose.msra.mxu0 0.0
      %3446 = vmatprep.subr.mxu0 0.0
      %3447 = vmatpush2.xpose.msra.mxu0 0.0
      %3448 = vmatprep.subr.mxu0 0.0
      %3449 = vmatpush2.xpose.msra.mxu0 0.0
      %3450 = vmatprep.subr.mxu0 0.0
      %3451 = vmatpush2.xpose.msra.mxu0 0.0
      %3452 = vmatprep.subr.mxu0 0.0
      %3453 = vmatpush2.xpose.msra.mxu0 0.0
      %3454 = vmatprep.subr.mxu0 0.0
      %3455 = vmatpush2.xpose.msra.mxu0 0.0
      %3456 = vmatprep.subr.mxu0 0.0
      %3457 = vmatpush2.xpose.msra.mxu0 0.0
      %3458 = vmatprep.subr.mxu0 0.0
      %3459 = vmatpush2.xpose.msra.mxu0 0.0
      %3460 = vmatprep.mubr.f32.mxu0 0.0
      %3461 = vmatmul.mubr.f32.gmra.mxu0 %v3390
      %v3462 = vpop.f32.mrf.mxu0
      %v3463 = vadd.f32 0.0, %v3462
      %v3464 = vpop.f32.mrf.mxu0
      %3465 = vdwg.mxu0
      %v3466 = vsel %vm1071, %v2865, 0
      %v3468 = vsel %vm1071, %v2891, 0
      %v3470 = vsel %vm1071, %v2893, 0
      %3472 = vmatprep.subr.mxu0 0.0
      %3473 = vmatpush1.xpose.msra.mxu0 0.0
      %3474 = vmatprep.subr.mxu0 0.0
      %3475 = vmatpush1.xpose.msra.mxu0 0.0
      %3476 = vmatprep.subr.mxu0 0.0
      %3477 = vmatpush1.xpose.msra.mxu0 0.0
      %3478 = vmatprep.subr.mxu0 0.0
      %3479 = vmatpush1.xpose.msra.mxu0 0.0
      %3480 = vmatprep.subr.mxu0 0.0
      %3481 = vmatpush1.xpose.msra.mxu0 0.0
      %3482 = vmatprep.subr.mxu0 0.0
      %3483 = vmatpush1.xpose.msra.mxu0 0.0
      %3484 = vmatprep.subr.mxu0 0.0
      %3485 = vmatpush1.xpose.msra.mxu0 0.0
      %3486 = vmatprep.subr.mxu0 0.0
      %3487 = vmatpush1.xpose.msra.mxu0 0.0
      %3488 = vmatprep.subr.mxu0 0.0
      %3489 = vmatpush1.xpose.msra.mxu0 0.0
      %3490 = vmatprep.subr.mxu0 0.0
      %3491 = vmatpush1.xpose.msra.mxu0 0.0
      %3492 = vmatprep.subr.mxu0 0.0
      %3493 = vmatpush1.xpose.msra.mxu0 0.0
      %3494 = vmatprep.subr.mxu0 0.0
      %3495 = vmatpush1.xpose.msra.mxu0 0.0
      %3496 = vmatprep.subr.mxu0 0.0
      %3497 = vmatpush1.xpose.msra.mxu0 0.0
      %3498 = vmatprep.subr.mxu0 0.0
      %3499 = vmatpush1.xpose.msra.mxu0 0.0
      %3500 = vmatprep.subr.mxu0 0.0
      %3501 = vmatpush1.xpose.msra.mxu0 %v3470
      %3502 = vmatprep.subr.mxu0 0.0
      %3503 = vmatpush1.xpose.msra.mxu0 %v3468
      %3504 = vmatprep.subr.mxu0 0.0
      %3505 = vmatpush2.xpose.msra.mxu0 0.0
      %3506 = vmatprep.subr.mxu0 0.0
      %3507 = vmatpush2.xpose.msra.mxu0 0.0
      %3508 = vmatprep.subr.mxu0 0.0
      %3509 = vmatpush2.xpose.msra.mxu0 0.0
      %3510 = vmatprep.subr.mxu0 0.0
      %3511 = vmatpush2.xpose.msra.mxu0 0.0
      %3512 = vmatprep.subr.mxu0 0.0
      %3513 = vmatpush2.xpose.msra.mxu0 0.0
      %3514 = vmatprep.subr.mxu0 0.0
      %3515 = vmatpush2.xpose.msra.mxu0 0.0
      %3516 = vmatprep.subr.mxu0 0.0
      %3517 = vmatpush2.xpose.msra.mxu0 0.0
      %3518 = vmatprep.subr.mxu0 0.0
      %3519 = vmatpush2.xpose.msra.mxu0 0.0
      %3520 = vmatprep.subr.mxu0 0.0
      %3521 = vmatpush2.xpose.msra.mxu0 0.0
      %3522 = vmatprep.subr.mxu0 0.0
      %3523 = vmatpush2.xpose.msra.mxu0 0.0
      %3524 = vmatprep.subr.mxu0 0.0
      %3525 = vmatpush2.xpose.msra.mxu0 0.0
      %3526 = vmatprep.subr.mxu0 0.0
      %3527 = vmatpush2.xpose.msra.mxu0 0.0
      %3528 = vmatprep.subr.mxu0 0.0
      %3529 = vmatpush2.xpose.msra.mxu0 0.0
      %3530 = vmatprep.subr.mxu0 0.0
      %3531 = vmatpush2.xpose.msra.mxu0 0.0
      %3532 = vmatprep.subr.mxu0 0.0
      %3533 = vmatpush2.xpose.msra.mxu0 0.0
      %3534 = vmatprep.subr.mxu0 0.0
      %3535 = vmatpush2.xpose.msra.mxu0 0.0
      %3536 = vmatprep.mubr.f32.mxu0 0.0
      %3537 = vmatmul.mubr.f32.gmra.mxu0 %v3466
      %v3538 = vpop.f32.mrf.mxu0
      %v3539 = vadd.f32 0.0, %v3538
      %v3540 = vpop.f32.mrf.mxu0
      %3541 = vdwg.mxu0
      %vm3542 = vcmask 130048
      %v3543 = vsel %vm3542, %v3007, -inf
      %3544 = vmax.xlane.f32.xlu0 %v3543
      %v3545 = vpop.xlane.xlu0 %3544
      %v3546 = vsel %vm3542, %v3083, -inf
      %3547 = vmax.xlane.f32.xlu0 %v3546
      %v3548 = vpop.xlane.xlu0 %3547
      %v3549 = vsel %vm3542, %v3159, -inf
      %3550 = vmax.xlane.f32.xlu0 %v3549
      %v3551 = vpop.xlane.xlu0 %3550
      %v3552 = vsel %vm3542, %v3235, -inf
      %3553 = vmax.xlane.f32.xlu0 %v3552
      %v3554 = vpop.xlane.xlu0 %3553
      %v3555 = vsel %vm3542, %v3311, -inf
      %3556 = vmax.xlane.f32.xlu0 %v3555
      %v3557 = vpop.xlane.xlu0 %3556
      %v3558 = vsel %vm3542, %v3387, -inf
      %3559 = vmax.xlane.f32.xlu0 %v3558
      %v3560 = vpop.xlane.xlu0 %3559
      %v3561 = vsel %vm3542, %v3463, -inf
      %3562 = vmax.xlane.f32.xlu0 %v3561
      %v3563 = vpop.xlane.xlu0 %3562
      %v3564 = vsel %vm3542, %v3539, -inf
      %3565 = vmax.xlane.f32.xlu0 %v3564
      %v3566 = vpop.xlane.xlu0 %3565
      %v3567 = vsub.f32 %v3007, %v3545
      %v3568 = vsub.f32 %v3083, %v3548
      %v3569 = vsub.f32 %v3159, %v3551
      %v3570 = vsub.f32 %v3235, %v3554
      %v3571 = vsub.f32 %v3311, %v3557
      %v3572 = vsub.f32 %v3387, %v3560
      %v3573 = vsub.f32 %v3463, %v3563
      %v3574 = vsub.f32 %v3539, %v3566
      %v3575 = vmul.f32 %v3567, 1.442695
      %v3576 = vpow.pop %v3575
      %v3577 = vmul.f32 %v3568, 1.442695
      %v3578 = vpow.pop %v3577
      %v3579 = vmul.f32 %v3569, 1.442695
      %v3580 = vpow.pop %v3579
      %v3581 = vmul.f32 %v3570, 1.442695
      %v3582 = vpow.pop %v3581
      %v3583 = vmul.f32 %v3571, 1.442695
      %v3584 = vpow.pop %v3583
      %v3585 = vmul.f32 %v3572, 1.442695
      %v3586 = vpow.pop %v3585
      %v3587 = vmul.f32 %v3573, 1.442695
      %v3588 = vpow.pop %v3587
      %v3589 = vmul.f32 %v3574, 1.442695
      %v3590 = vpow.pop %v3589
      %v3591 = vsel %vm3542, %v3576, 0.0
      %3592 = vadd.xlane.f32.xlu0 %v3591
      %v3593 = vpop.xlane.xlu0 %3592
      %v3594 = vsel %vm3542, %v3578, 0.0
      %3595 = vadd.xlane.f32.xlu0 %v3594
      %v3596 = vpop.xlane.xlu0 %3595
      %v3597 = vsel %vm3542, %v3580, 0.0
      %3598 = vadd.xlane.f32.xlu0 %v3597
      %v3599 = vpop.xlane.xlu0 %3598
      %v3600 = vsel %vm3542, %v3582, 0.0
      %3601 = vadd.xlane.f32.xlu0 %v3600
      %v3602 = vpop.xlane.xlu0 %3601
      %v3603 = vsel %vm3542, %v3584, 0.0
      %3604 = vadd.xlane.f32.xlu0 %v3603
      %v3605 = vpop.xlane.xlu0 %3604
      %v3606 = vsel %vm3542, %v3586, 0.0
      %3607 = vadd.xlane.f32.xlu0 %v3606
      %v3608 = vpop.xlane.xlu0 %3607
      %v3609 = vsel %vm3542, %v3588, 0.0
      %3610 = vadd.xlane.f32.xlu0 %v3609
      %v3611 = vpop.xlane.xlu0 %3610
      %v3612 = vsel %vm3542, %v3590, 0.0
      %3613 = vadd.xlane.f32.xlu0 %v3612
      %v3614 = vpop.xlane.xlu0 %3613
      %v3615 = vrcp.pop %v3593
      %v3616 = vrcp.pop %v3596
      %v3617 = vrcp.pop %v3599
      %v3618 = vrcp.pop %v3602
      %v3619 = vrcp.pop %v3605
      %v3620 = vrcp.pop %v3608
      %v3621 = vrcp.pop %v3611
      %v3622 = vrcp.pop %v3614
      %v3623 = vmul.f32 %v3576, %v3615
      %v3624 = vmul.f32 %v3578, %v3616
      %v3625 = vmul.f32 %v3580, %v3617
      %v3626 = vmul.f32 %v3582, %v3618
      %v3627 = vmul.f32 %v3584, %v3619
      %v3628 = vmul.f32 %v3586, %v3620
      %v3629 = vmul.f32 %v3588, %v3621
      %v3630 = vmul.f32 %v3590, %v3622
      %v3632 = vsel %vm3542, %v3623, 0
      %3634 = vmatprep.subr.mxu0 0.0
      %3635 = vmatpush1.msra.mxu0 0.0
      %3636 = vmatprep.subr.mxu0 0.0
      %3637 = vmatpush1.msra.mxu0 0.0
      %3638 = vmatprep.subr.mxu0 0.0
      %3639 = vmatpush1.msra.mxu0 0.0
      %3640 = vmatprep.subr.mxu0 0.0
      %3641 = vmatpush1.msra.mxu0 0.0
      %3642 = vmatprep.subr.mxu0 0.0
      %3643 = vmatpush1.msra.mxu0 0.0
      %3644 = vmatprep.subr.mxu0 0.0
      %3645 = vmatpush1.msra.mxu0 0.0
      %3646 = vmatprep.subr.mxu0 0.0
      %3647 = vmatpush1.msra.mxu0 0.0
      %3648 = vmatprep.subr.mxu0 0.0
      %3649 = vmatpush1.msra.mxu0 0.0
      %3650 = vmatprep.subr.mxu0 0.0
      %3651 = vmatpush1.msra.mxu0 0.0
      %3652 = vmatprep.subr.mxu0 0.0
      %3653 = vmatpush1.msra.mxu0 0.0
      %3654 = vmatprep.subr.mxu0 0.0
      %3655 = vmatpush1.msra.mxu0 0.0
      %3656 = vmatprep.subr.mxu0 0.0
      %3657 = vmatpush1.msra.mxu0 0.0
      %3658 = vmatprep.subr.mxu0 0.0
      %3659 = vmatpush1.msra.mxu0 0.0
      %3660 = vmatprep.subr.mxu0 0.0
      %3661 = vmatpush1.msra.mxu0 0.0
      %3662 = vmatprep.subr.mxu0 0.0
      %3663 = vmatpush1.msra.mxu0 %v2834
      %3664 = vmatprep.subr.mxu0 0.0
      %3665 = vmatpush1.msra.mxu0 %v2829
      %3666 = vmatprep.subr.mxu0 0.0
      %3667 = vmatpush2.msra.mxu0 0.0
      %3668 = vmatprep.subr.mxu0 0.0
      %3669 = vmatpush2.msra.mxu0 0.0
      %3670 = vmatprep.subr.mxu0 0.0
      %3671 = vmatpush2.msra.mxu0 0.0
      %3672 = vmatprep.subr.mxu0 0.0
      %3673 = vmatpush2.msra.mxu0 0.0
      %3674 = vmatprep.subr.mxu0 0.0
      %3675 = vmatpush2.msra.mxu0 0.0
      %3676 = vmatprep.subr.mxu0 0.0
      %3677 = vmatpush2.msra.mxu0 0.0
      %3678 = vmatprep.subr.mxu0 0.0
      %3679 = vmatpush2.msra.mxu0 0.0
      %3680 = vmatprep.subr.mxu0 0.0
      %3681 = vmatpush2.msra.mxu0 0.0
      %3682 = vmatprep.subr.mxu0 0.0
      %3683 = vmatpush2.msra.mxu0 0.0
      %3684 = vmatprep.subr.mxu0 0.0
      %3685 = vmatpush2.msra.mxu0 0.0
      %3686 = vmatprep.subr.mxu0 0.0
      %3687 = vmatpush2.msra.mxu0 0.0
      %3688 = vmatprep.subr.mxu0 0.0
      %3689 = vmatpush2.msra.mxu0 0.0
      %3690 = vmatprep.subr.mxu0 0.0
      %3691 = vmatpush2.msra.mxu0 0.0
      %3692 = vmatprep.subr.mxu0 0.0
      %3693 = vmatpush2.msra.mxu0 0.0
      %3694 = vmatprep.subr.mxu0 0.0
      %3695 = vmatpush2.msra.mxu0 0.0
      %3696 = vmatprep.subr.mxu0 0.0
      %3697 = vmatpush2.msra.mxu0 0.0
      %3698 = vmatprep.mubr.f32.mxu0 0.0
      %3699 = vmatmul.mubr.f32.gmra.mxu0 %v3632
      %v3700 = vpop.f32.mrf.mxu0
      %v3701 = vadd.f32 0.0, %v3700
      %v3702 = vpop.f32.mrf.mxu0
      %3703 = vdwg.mxu0
      %v3705 = vsel %vm3542, %v3624, 0
      %3707 = vmatprep.subr.mxu0 0.0
      %3708 = vmatpush1.msra.mxu0 0.0
      %3709 = vmatprep.subr.mxu0 0.0
      %3710 = vmatpush1.msra.mxu0 0.0
      %3711 = vmatprep.subr.mxu0 0.0
      %3712 = vmatpush1.msra.mxu0 0.0
      %3713 = vmatprep.subr.mxu0 0.0
      %3714 = vmatpush1.msra.mxu0 0.0
      %3715 = vmatprep.subr.mxu0 0.0
      %3716 = vmatpush1.msra.mxu0 0.0
      %3717 = vmatprep.subr.mxu0 0.0
      %3718 = vmatpush1.msra.mxu0 0.0
      %3719 = vmatprep.subr.mxu0 0.0
      %3720 = vmatpush1.msra.mxu0 0.0
      %3721 = vmatprep.subr.mxu0 0.0
      %3722 = vmatpush1.msra.mxu0 0.0
      %3723 = vmatprep.subr.mxu0 0.0
      %3724 = vmatpush1.msra.mxu0 0.0
      %3725 = vmatprep.subr.mxu0 0.0
      %3726 = vmatpush1.msra.mxu0 0.0
      %3727 = vmatprep.subr.mxu0 0.0
      %3728 = vmatpush1.msra.mxu0 0.0
      %3729 = vmatprep.subr.mxu0 0.0
      %3730 = vmatpush1.msra.mxu0 0.0
      %3731 = vmatprep.subr.mxu0 0.0
      %3732 = vmatpush1.msra.mxu0 0.0
      %3733 = vmatprep.subr.mxu0 0.0
      %3734 = vmatpush1.msra.mxu0 0.0
      %3735 = vmatprep.subr.mxu0 0.0
      %3736 = vmatpush1.msra.mxu0 %v2901
      %3737 = vmatprep.subr.mxu0 0.0
      %3738 = vmatpush1.msra.mxu0 %v2899
      %3739 = vmatprep.subr.mxu0 0.0
      %3740 = vmatpush2.msra.mxu0 0.0
      %3741 = vmatprep.subr.mxu0 0.0
      %3742 = vmatpush2.msra.mxu0 0.0
      %3743 = vmatprep.subr.mxu0 0.0
      %3744 = vmatpush2.msra.mxu0 0.0
      %3745 = vmatprep.subr.mxu0 0.0
      %3746 = vmatpush2.msra.mxu0 0.0
      %3747 = vmatprep.subr.mxu0 0.0
      %3748 = vmatpush2.msra.mxu0 0.0
      %3749 = vmatprep.subr.mxu0 0.0
      %3750 = vmatpush2.msra.mxu0 0.0
      %3751 = vmatprep.subr.mxu0 0.0
      %3752 = vmatpush2.msra.mxu0 0.0
      %3753 = vmatprep.subr.mxu0 0.0
      %3754 = vmatpush2.msra.mxu0 0.0
      %3755 = vmatprep.subr.mxu0 0.0
      %3756 = vmatpush2.msra.mxu0 0.0
      %3757 = vmatprep.subr.mxu0 0.0
      %3758 = vmatpush2.msra.mxu0 0.0
      %3759 = vmatprep.subr.mxu0 0.0
      %3760 = vmatpush2.msra.mxu0 0.0
      %3761 = vmatprep.subr.mxu0 0.0
      %3762 = vmatpush2.msra.mxu0 0.0
      %3763 = vmatprep.subr.mxu0 0.0
      %3764 = vmatpush2.msra.mxu0 0.0
      %3765 = vmatprep.subr.mxu0 0.0
      %3766 = vmatpush2.msra.mxu0 0.0
      %3767 = vmatprep.subr.mxu0 0.0
      %3768 = vmatpush2.msra.mxu0 0.0
      %3769 = vmatprep.subr.mxu0 0.0
      %3770 = vmatpush2.msra.mxu0 0.0
      %3771 = vmatprep.mubr.f32.mxu0 0.0
      %3772 = vmatmul.mubr.f32.gmra.mxu0 %v3705
      %v3773 = vpop.f32.mrf.mxu0
      %v3774 = vadd.f32 0.0, %v3773
      %v3775 = vpop.f32.mrf.mxu0
      %3776 = vdwg.mxu0
      %v3778 = vsel %vm3542, %v3625, 0
      %3780 = vmatprep.subr.mxu0 0.0
      %3781 = vmatpush1.msra.mxu0 0.0
      %3782 = vmatprep.subr.mxu0 0.0
      %3783 = vmatpush1.msra.mxu0 0.0
      %3784 = vmatprep.subr.mxu0 0.0
      %3785 = vmatpush1.msra.mxu0 0.0
      %3786 = vmatprep.subr.mxu0 0.0
      %3787 = vmatpush1.msra.mxu0 0.0
      %3788 = vmatprep.subr.mxu0 0.0
      %3789 = vmatpush1.msra.mxu0 0.0
      %3790 = vmatprep.subr.mxu0 0.0
      %3791 = vmatpush1.msra.mxu0 0.0
      %3792 = vmatprep.subr.mxu0 0.0
      %3793 = vmatpush1.msra.mxu0 0.0
      %3794 = vmatprep.subr.mxu0 0.0
      %3795 = vmatpush1.msra.mxu0 0.0
      %3796 = vmatprep.subr.mxu0 0.0
      %3797 = vmatpush1.msra.mxu0 0.0
      %3798 = vmatprep.subr.mxu0 0.0
      %3799 = vmatpush1.msra.mxu0 0.0
      %3800 = vmatprep.subr.mxu0 0.0
      %3801 = vmatpush1.msra.mxu0 0.0
      %3802 = vmatprep.subr.mxu0 0.0
      %3803 = vmatpush1.msra.mxu0 0.0
      %3804 = vmatprep.subr.mxu0 0.0
      %3805 = vmatpush1.msra.mxu0 0.0
      %3806 = vmatprep.subr.mxu0 0.0
      %3807 = vmatpush1.msra.mxu0 0.0
      %3808 = vmatprep.subr.mxu0 0.0
      %3809 = vmatpush1.msra.mxu0 %v2913
      %3810 = vmatprep.subr.mxu0 0.0
      %3811 = vmatpush1.msra.mxu0 %v2911
      %3812 = vmatprep.subr.mxu0 0.0
      %3813 = vmatpush2.msra.mxu0 0.0
      %3814 = vmatprep.subr.mxu0 0.0
      %3815 = vmatpush2.msra.mxu0 0.0
      %3816 = vmatprep.subr.mxu0 0.0
      %3817 = vmatpush2.msra.mxu0 0.0
      %3818 = vmatprep.subr.mxu0 0.0
      %3819 = vmatpush2.msra.mxu0 0.0
      %3820 = vmatprep.subr.mxu0 0.0
      %3821 = vmatpush2.msra.mxu0 0.0
      %3822 = vmatprep.subr.mxu0 0.0
      %3823 = vmatpush2.msra.mxu0 0.0
      %3824 = vmatprep.subr.mxu0 0.0
      %3825 = vmatpush2.msra.mxu0 0.0
      %3826 = vmatprep.subr.mxu0 0.0
      %3827 = vmatpush2.msra.mxu0 0.0
      %3828 = vmatprep.subr.mxu0 0.0
      %3829 = vmatpush2.msra.mxu0 0.0
      %3830 = vmatprep.subr.mxu0 0.0
      %3831 = vmatpush2.msra.mxu0 0.0
      %3832 = vmatprep.subr.mxu0 0.0
      %3833 = vmatpush2.msra.mxu0 0.0
      %3834 = vmatprep.subr.mxu0 0.0
      %3835 = vmatpush2.msra.mxu0 0.0
      %3836 = vmatprep.subr.mxu0 0.0
      %3837 = vmatpush2.msra.mxu0 0.0
      %3838 = vmatprep.subr.mxu0 0.0
      %3839 = vmatpush2.msra.mxu0 0.0
      %3840 = vmatprep.subr.mxu0 0.0
      %3841 = vmatpush2.msra.mxu0 0.0
      %3842 = vmatprep.subr.mxu0 0.0
      %3843 = vmatpush2.msra.mxu0 0.0
      %3844 = vmatprep.mubr.f32.mxu0 0.0
      %3845 = vmatmul.mubr.f32.gmra.mxu0 %v3778
      %v3846 = vpop.f32.mrf.mxu0
      %v3847 = vadd.f32 0.0, %v3846
      %v3848 = vpop.f32.mrf.mxu0
      %3849 = vdwg.mxu0
      %v3851 = vsel %vm3542, %v3626, 0
      %3853 = vmatprep.subr.mxu0 0.0
      %3854 = vmatpush1.msra.mxu0 0.0
      %3855 = vmatprep.subr.mxu0 0.0
      %3856 = vmatpush1.msra.mxu0 0.0
      %3857 = vmatprep.subr.mxu0 0.0
      %3858 = vmatpush1.msra.mxu0 0.0
      %3859 = vmatprep.subr.mxu0 0.0
      %3860 = vmatpush1.msra.mxu0 0.0
      %3861 = vmatprep.subr.mxu0 0.0
      %3862 = vmatpush1.msra.mxu0 0.0
      %3863 = vmatprep.subr.mxu0 0.0
      %3864 = vmatpush1.msra.mxu0 0.0
      %3865 = vmatprep.subr.mxu0 0.0
      %3866 = vmatpush1.msra.mxu0 0.0
      %3867 = vmatprep.subr.mxu0 0.0
      %3868 = vmatpush1.msra.mxu0 0.0
      %3869 = vmatprep.subr.mxu0 0.0
      %3870 = vmatpush1.msra.mxu0 0.0
      %3871 = vmatprep.subr.mxu0 0.0
      %3872 = vmatpush1.msra.mxu0 0.0
      %3873 = vmatprep.subr.mxu0 0.0
      %3874 = vmatpush1.msra.mxu0 0.0
      %3875 = vmatprep.subr.mxu0 0.0
      %3876 = vmatpush1.msra.mxu0 0.0
      %3877 = vmatprep.subr.mxu0 0.0
      %3878 = vmatpush1.msra.mxu0 0.0
      %3879 = vmatprep.subr.mxu0 0.0
      %3880 = vmatpush1.msra.mxu0 0.0
      %3881 = vmatprep.subr.mxu0 0.0
      %3882 = vmatpush1.msra.mxu0 %v2925
      %3883 = vmatprep.subr.mxu0 0.0
      %3884 = vmatpush1.msra.mxu0 %v2923
      %3885 = vmatprep.subr.mxu0 0.0
      %3886 = vmatpush2.msra.mxu0 0.0
      %3887 = vmatprep.subr.mxu0 0.0
      %3888 = vmatpush2.msra.mxu0 0.0
      %3889 = vmatprep.subr.mxu0 0.0
      %3890 = vmatpush2.msra.mxu0 0.0
      %3891 = vmatprep.subr.mxu0 0.0
      %3892 = vmatpush2.msra.mxu0 0.0
      %3893 = vmatprep.subr.mxu0 0.0
      %3894 = vmatpush2.msra.mxu0 0.0
      %3895 = vmatprep.subr.mxu0 0.0
      %3896 = vmatpush2.msra.mxu0 0.0
      %3897 = vmatprep.subr.mxu0 0.0
      %3898 = vmatpush2.msra.mxu0 0.0
      %3899 = vmatprep.subr.mxu0 0.0
      %3900 = vmatpush2.msra.mxu0 0.0
      %3901 = vmatprep.subr.mxu0 0.0
      %3902 = vmatpush2.msra.mxu0 0.0
      %3903 = vmatprep.subr.mxu0 0.0
      %3904 = vmatpush2.msra.mxu0 0.0
      %3905 = vmatprep.subr.mxu0 0.0
      %3906 = vmatpush2.msra.mxu0 0.0
      %3907 = vmatprep.subr.mxu0 0.0
      %3908 = vmatpush2.msra.mxu0 0.0
      %3909 = vmatprep.subr.mxu0 0.0
      %3910 = vmatpush2.msra.mxu0 0.0
      %3911 = vmatprep.subr.mxu0 0.0
      %3912 = vmatpush2.msra.mxu0 0.0
      %3913 = vmatprep.subr.mxu0 0.0
      %3914 = vmatpush2.msra.mxu0 0.0
      %3915 = vmatprep.subr.mxu0 0.0
      %3916 = vmatpush2.msra.mxu0 0.0
      %3917 = vmatprep.mubr.f32.mxu0 0.0
      %3918 = vmatmul.mubr.f32.gmra.mxu0 %v3851
      %v3919 = vpop.f32.mrf.mxu0
      %v3920 = vadd.f32 0.0, %v3919
      %v3921 = vpop.f32.mrf.mxu0
      %3922 = vdwg.mxu0
      %v3924 = vsel %vm3542, %v3627, 0
      %3926 = vmatprep.subr.mxu0 0.0
      %3927 = vmatpush1.msra.mxu0 0.0
      %3928 = vmatprep.subr.mxu0 0.0
      %3929 = vmatpush1.msra.mxu0 0.0
      %3930 = vmatprep.subr.mxu0 0.0
      %3931 = vmatpush1.msra.mxu0 0.0
      %3932 = vmatprep.subr.mxu0 0.0
      %3933 = vmatpush1.msra.mxu0 0.0
      %3934 = vmatprep.subr.mxu0 0.0
      %3935 = vmatpush1.msra.mxu0 0.0
      %3936 = vmatprep.subr.mxu0 0.0
      %3937 = vmatpush1.msra.mxu0 0.0
      %3938 = vmatprep.subr.mxu0 0.0
      %3939 = vmatpush1.msra.mxu0 0.0
      %3940 = vmatprep.subr.mxu0 0.0
      %3941 = vmatpush1.msra.mxu0 0.0
      %3942 = vmatprep.subr.mxu0 0.0
      %3943 = vmatpush1.msra.mxu0 0.0
      %3944 = vmatprep.subr.mxu0 0.0
      %3945 = vmatpush1.msra.mxu0 0.0
      %3946 = vmatprep.subr.mxu0 0.0
      %3947 = vmatpush1.msra.mxu0 0.0
      %3948 = vmatprep.subr.mxu0 0.0
      %3949 = vmatpush1.msra.mxu0 0.0
      %3950 = vmatprep.subr.mxu0 0.0
      %3951 = vmatpush1.msra.mxu0 0.0
      %3952 = vmatprep.subr.mxu0 0.0
      %3953 = vmatpush1.msra.mxu0 0.0
      %3954 = vmatprep.subr.mxu0 0.0
      %3955 = vmatpush1.msra.mxu0 %v2844
      %3956 = vmatprep.subr.mxu0 0.0
      %3957 = vmatpush1.msra.mxu0 %v2839
      %3958 = vmatprep.subr.mxu0 0.0
      %3959 = vmatpush2.msra.mxu0 0.0
      %3960 = vmatprep.subr.mxu0 0.0
      %3961 = vmatpush2.msra.mxu0 0.0
      %3962 = vmatprep.subr.mxu0 0.0
      %3963 = vmatpush2.msra.mxu0 0.0
      %3964 = vmatprep.subr.mxu0 0.0
      %3965 = vmatpush2.msra.mxu0 0.0
      %3966 = vmatprep.subr.mxu0 0.0
      %3967 = vmatpush2.msra.mxu0 0.0
      %3968 = vmatprep.subr.mxu0 0.0
      %3969 = vmatpush2.msra.mxu0 0.0
      %3970 = vmatprep.subr.mxu0 0.0
      %3971 = vmatpush2.msra.mxu0 0.0
      %3972 = vmatprep.subr.mxu0 0.0
      %3973 = vmatpush2.msra.mxu0 0.0
      %3974 = vmatprep.subr.mxu0 0.0
      %3975 = vmatpush2.msra.mxu0 0.0
      %3976 = vmatprep.subr.mxu0 0.0
      %3977 = vmatpush2.msra.mxu0 0.0
      %3978 = vmatprep.subr.mxu0 0.0
      %3979 = vmatpush2.msra.mxu0 0.0
      %3980 = vmatprep.subr.mxu0 0.0
      %3981 = vmatpush2.msra.mxu0 0.0
      %3982 = vmatprep.subr.mxu0 0.0
      %3983 = vmatpush2.msra.mxu0 0.0
      %3984 = vmatprep.subr.mxu0 0.0
      %3985 = vmatpush2.msra.mxu0 0.0
      %3986 = vmatprep.subr.mxu0 0.0
      %3987 = vmatpush2.msra.mxu0 0.0
      %3988 = vmatprep.subr.mxu0 0.0
      %3989 = vmatpush2.msra.mxu0 0.0
      %3990 = vmatprep.mubr.f32.mxu0 0.0
      %3991 = vmatmul.mubr.f32.gmra.mxu0 %v3924
      %v3992 = vpop.f32.mrf.mxu0
      %v3993 = vadd.f32 0.0, %v3992
      %v3994 = vpop.f32.mrf.mxu0
      %3995 = vdwg.mxu0
      %v3997 = vsel %vm3542, %v3628, 0
      %3999 = vmatprep.subr.mxu0 0.0
      %4000 = vmatpush1.msra.mxu0 0.0
      %4001 = vmatprep.subr.mxu0 0.0
      %4002 = vmatpush1.msra.mxu0 0.0
      %4003 = vmatprep.subr.mxu0 0.0
      %4004 = vmatpush1.msra.mxu0 0.0
      %4005 = vmatprep.subr.mxu0 0.0
      %4006 = vmatpush1.msra.mxu0 0.0
      %4007 = vmatprep.subr.mxu0 0.0
      %4008 = vmatpush1.msra.mxu0 0.0
      %4009 = vmatprep.subr.mxu0 0.0
      %4010 = vmatpush1.msra.mxu0 0.0
      %4011 = vmatprep.subr.mxu0 0.0
      %4012 = vmatpush1.msra.mxu0 0.0
      %4013 = vmatprep.subr.mxu0 0.0
      %4014 = vmatpush1.msra.mxu0 0.0
      %4015 = vmatprep.subr.mxu0 0.0
      %4016 = vmatpush1.msra.mxu0 0.0
      %4017 = vmatprep.subr.mxu0 0.0
      %4018 = vmatpush1.msra.mxu0 0.0
      %4019 = vmatprep.subr.mxu0 0.0
      %4020 = vmatpush1.msra.mxu0 0.0
      %4021 = vmatprep.subr.mxu0 0.0
      %4022 = vmatpush1.msra.mxu0 0.0
      %4023 = vmatprep.subr.mxu0 0.0
      %4024 = vmatpush1.msra.mxu0 0.0
      %4025 = vmatprep.subr.mxu0 0.0
      %4026 = vmatpush1.msra.mxu0 0.0
      %4027 = vmatprep.subr.mxu0 0.0
      %4028 = vmatpush1.msra.mxu0 %v2905
      %4029 = vmatprep.subr.mxu0 0.0
      %4030 = vmatpush1.msra.mxu0 %v2903
      %4031 = vmatprep.subr.mxu0 0.0
      %4032 = vmatpush2.msra.mxu0 0.0
      %4033 = vmatprep.subr.mxu0 0.0
      %4034 = vmatpush2.msra.mxu0 0.0
      %4035 = vmatprep.subr.mxu0 0.0
      %4036 = vmatpush2.msra.mxu0 0.0
      %4037 = vmatprep.subr.mxu0 0.0
      %4038 = vmatpush2.msra.mxu0 0.0
      %4039 = vmatprep.subr.mxu0 0.0
      %4040 = vmatpush2.msra.mxu0 0.0
      %4041 = vmatprep.subr.mxu0 0.0
      %4042 = vmatpush2.msra.mxu0 0.0
      %4043 = vmatprep.subr.mxu0 0.0
      %4044 = vmatpush2.msra.mxu0 0.0
      %4045 = vmatprep.subr.mxu0 0.0
      %4046 = vmatpush2.msra.mxu0 0.0
      %4047 = vmatprep.subr.mxu0 0.0
      %4048 = vmatpush2.msra.mxu0 0.0
      %4049 = vmatprep.subr.mxu0 0.0
      %4050 = vmatpush2.msra.mxu0 0.0
      %4051 = vmatprep.subr.mxu0 0.0
      %4052 = vmatpush2.msra.mxu0 0.0
      %4053 = vmatprep.subr.mxu0 0.0
      %4054 = vmatpush2.msra.mxu0 0.0
      %4055 = vmatprep.subr.mxu0 0.0
      %4056 = vmatpush2.msra.mxu0 0.0
      %4057 = vmatprep.subr.mxu0 0.0
      %4058 = vmatpush2.msra.mxu0 0.0
      %4059 = vmatprep.subr.mxu0 0.0
      %4060 = vmatpush2.msra.mxu0 0.0
      %4061 = vmatprep.subr.mxu0 0.0
      %4062 = vmatpush2.msra.mxu0 0.0
      %4063 = vmatprep.mubr.f32.mxu0 0.0
      %4064 = vmatmul.mubr.f32.gmra.mxu0 %v3997
      %v4065 = vpop.f32.mrf.mxu0
      %v4066 = vadd.f32 0.0, %v4065
      %v4067 = vpop.f32.mrf.mxu0
      %4068 = vdwg.mxu0
      %v4070 = vsel %vm3542, %v3629, 0
      %4072 = vmatprep.subr.mxu0 0.0
      %4073 = vmatpush1.msra.mxu0 0.0
      %4074 = vmatprep.subr.mxu0 0.0
      %4075 = vmatpush1.msra.mxu0 0.0
      %4076 = vmatprep.subr.mxu0 0.0
      %4077 = vmatpush1.msra.mxu0 0.0
      %4078 = vmatprep.subr.mxu0 0.0
      %4079 = vmatpush1.msra.mxu0 0.0
      %4080 = vmatprep.subr.mxu0 0.0
      %4081 = vmatpush1.msra.mxu0 0.0
      %4082 = vmatprep.subr.mxu0 0.0
      %4083 = vmatpush1.msra.mxu0 0.0
      %4084 = vmatprep.subr.mxu0 0.0
      %4085 = vmatpush1.msra.mxu0 0.0
      %4086 = vmatprep.subr.mxu0 0.0
      %4087 = vmatpush1.msra.mxu0 0.0
      %4088 = vmatprep.subr.mxu0 0.0
      %4089 = vmatpush1.msra.mxu0 0.0
      %4090 = vmatprep.subr.mxu0 0.0
      %4091 = vmatpush1.msra.mxu0 0.0
      %4092 = vmatprep.subr.mxu0 0.0
      %4093 = vmatpush1.msra.mxu0 0.0
      %4094 = vmatprep.subr.mxu0 0.0
      %4095 = vmatpush1.msra.mxu0 0.0
      %4096 = vmatprep.subr.mxu0 0.0
      %4097 = vmatpush1.msra.mxu0 0.0
      %4098 = vmatprep.subr.mxu0 0.0
      %4099 = vmatpush1.msra.mxu0 0.0
      %4100 = vmatprep.subr.mxu0 0.0
      %4101 = vmatpush1.msra.mxu0 %v2917
      %4102 = vmatprep.subr.mxu0 0.0
      %4103 = vmatpush1.msra.mxu0 %v2915
      %4104 = vmatprep.subr.mxu0 0.0
      %4105 = vmatpush2.msra.mxu0 0.0
      %4106 = vmatprep.subr.mxu0 0.0
      %4107 = vmatpush2.msra.mxu0 0.0
      %4108 = vmatprep.subr.mxu0 0.0
      %4109 = vmatpush2.msra.mxu0 0.0
      %4110 = vmatprep.subr.mxu0 0.0
      %4111 = vmatpush2.msra.mxu0 0.0
      %4112 = vmatprep.subr.mxu0 0.0
      %4113 = vmatpush2.msra.mxu0 0.0
      %4114 = vmatprep.subr.mxu0 0.0
      %4115 = vmatpush2.msra.mxu0 0.0
      %4116 = vmatprep.subr.mxu0 0.0
      %4117 = vmatpush2.msra.mxu0 0.0
      %4118 = vmatprep.subr.mxu0 0.0
      %4119 = vmatpush2.msra.mxu0 0.0
      %4120 = vmatprep.subr.mxu0 0.0
      %4121 = vmatpush2.msra.mxu0 0.0
      %4122 = vmatprep.subr.mxu0 0.0
      %4123 = vmatpush2.msra.mxu0 0.0
      %4124 = vmatprep.subr.mxu0 0.0
      %4125 = vmatpush2.msra.mxu0 0.0
      %4126 = vmatprep.subr.mxu0 0.0
      %4127 = vmatpush2.msra.mxu0 0.0
      %4128 = vmatprep.subr.mxu0 0.0
      %4129 = vmatpush2.msra.mxu0 0.0
      %4130 = vmatprep.subr.mxu0 0.0
      %4131 = vmatpush2.msra.mxu0 0.0
      %4132 = vmatprep.subr.mxu0 0.0
      %4133 = vmatpush2.msra.mxu0 0.0
      %4134 = vmatprep.subr.mxu0 0.0
      %4135 = vmatpush2.msra.mxu0 0.0
      %4136 = vmatprep.mubr.f32.mxu0 0.0
      %4137 = vmatmul.mubr.f32.gmra.mxu0 %v4070
      %v4138 = vpop.f32.mrf.mxu0
      %v4139 = vadd.f32 0.0, %v4138
      %v4140 = vpop.f32.mrf.mxu0
      %4141 = vdwg.mxu0
      %v4143 = vsel %vm3542, %v3630, 0
      %4145 = vmatprep.subr.mxu0 0.0
      %4146 = vmatpush1.msra.mxu0 0.0
      %4147 = vmatprep.subr.mxu0 0.0
      %4148 = vmatpush1.msra.mxu0 0.0
      %4149 = vmatprep.subr.mxu0 0.0
      %4150 = vmatpush1.msra.mxu0 0.0
      %4151 = vmatprep.subr.mxu0 0.0
      %4152 = vmatpush1.msra.mxu0 0.0
      %4153 = vmatprep.subr.mxu0 0.0
      %4154 = vmatpush1.msra.mxu0 0.0
      %4155 = vmatprep.subr.mxu0 0.0
      %4156 = vmatpush1.msra.mxu0 0.0
      %4157 = vmatprep.subr.mxu0 0.0
      %4158 = vmatpush1.msra.mxu0 0.0
      %4159 = vmatprep.subr.mxu0 0.0
      %4160 = vmatpush1.msra.mxu0 0.0
      %4161 = vmatprep.subr.mxu0 0.0
      %4162 = vmatpush1.msra.mxu0 0.0
      %4163 = vmatprep.subr.mxu0 0.0
      %4164 = vmatpush1.msra.mxu0 0.0
      %4165 = vmatprep.subr.mxu0 0.0
      %4166 = vmatpush1.msra.mxu0 0.0
      %4167 = vmatprep.subr.mxu0 0.0
      %4168 = vmatpush1.msra.mxu0 0.0
      %4169 = vmatprep.subr.mxu0 0.0
      %4170 = vmatpush1.msra.mxu0 0.0
      %4171 = vmatprep.subr.mxu0 0.0
      %4172 = vmatpush1.msra.mxu0 0.0
      %4173 = vmatprep.subr.mxu0 0.0
      %4174 = vmatpush1.msra.mxu0 %v2929
      %4175 = vmatprep.subr.mxu0 0.0
      %4176 = vmatpush1.msra.mxu0 %v2927
      %4177 = vmatprep.subr.mxu0 0.0
      %4178 = vmatpush2.msra.mxu0 0.0
      %4179 = vmatprep.subr.mxu0 0.0
      %4180 = vmatpush2.msra.mxu0 0.0
      %4181 = vmatprep.subr.mxu0 0.0
      %4182 = vmatpush2.msra.mxu0 0.0
      %4183 = vmatprep.subr.mxu0 0.0
      %4184 = vmatpush2.msra.mxu0 0.0
      %4185 = vmatprep.subr.mxu0 0.0
      %4186 = vmatpush2.msra.mxu0 0.0
      %4187 = vmatprep.subr.mxu0 0.0
      %4188 = vmatpush2.msra.mxu0 0.0
      %4189 = vmatprep.subr.mxu0 0.0
      %4190 = vmatpush2.msra.mxu0 0.0
      %4191 = vmatprep.subr.mxu0 0.0
      %4192 = vmatpush2.msra.mxu0 0.0
      %4193 = vmatprep.subr.mxu0 0.0
      %4194 = vmatpush2.msra.mxu0 0.0
      %4195 = vmatprep.subr.mxu0 0.0
      %4196 = vmatpush2.msra.mxu0 0.0
      %4197 = vmatprep.subr.mxu0 0.0
      %4198 = vmatpush2.msra.mxu0 0.0
      %4199 = vmatprep.subr.mxu0 0.0
      %4200 = vmatpush2.msra.mxu0 0.0
      %4201 = vmatprep.subr.mxu0 0.0
      %4202 = vmatpush2.msra.mxu0 0.0
      %4203 = vmatprep.subr.mxu0 0.0
      %4204 = vmatpush2.msra.mxu0 0.0
      %4205 = vmatprep.subr.mxu0 0.0
      %4206 = vmatpush2.msra.mxu0 0.0
      %4207 = vmatprep.subr.mxu0 0.0
      %4208 = vmatpush2.msra.mxu0 0.0
      %4209 = vmatprep.mubr.f32.mxu0 0.0
      %4210 = vmatmul.mubr.f32.gmra.mxu0 %v4143
      %v4211 = vpop.f32.mrf.mxu0
      %v4212 = vadd.f32 0.0, %v4211
      %v4213 = vpop.f32.mrf.mxu0
      %4214 = vdwg.mxu0
      %4215 = vst.msk [vmem:[#allocation2] sm:$0xff] %vm1071, %v3701
      %4217 = vrot.lane.b32.xlu0 %v3774, 8
      %v4218 = vpop.permute.xlu0 %4217
      %4220 = vst.msk [vmem:[#allocation2] sm:$0xff] %vm2355, %v4218
      %4222 = vrot.lane.b32.xlu0 %v3847, 16
      %v4223 = vpop.permute.xlu0 %4222
      %4225 = vst.msk [vmem:[#allocation2] sm:$0xff] %vm2361, %v4223
      %4227 = vrot.lane.b32.xlu0 %v3920, 24
      %v4228 = vpop.permute.xlu0 %4227
      %4230 = vst.msk [vmem:[#allocation2] sm:$0xff] %vm2367, %v4228
      %4231 = vst.msk [vmem:[#allocation2 + $0x8] sm:$0xff] %vm1071, %v3993
      %4233 = vrot.lane.b32.xlu0 %v4066, 8
      %v4234 = vpop.permute.xlu0 %4233
      %4236 = vst.msk [vmem:[#allocation2 + $0x8] sm:$0xff] %vm2355, %v4234
      %4238 = vrot.lane.b32.xlu0 %v4139, 16
      %v4239 = vpop.permute.xlu0 %4238
      %4241 = vst.msk [vmem:[#allocation2 + $0x8] sm:$0xff] %vm2361, %v4239
      %4243 = vrot.lane.b32.xlu0 %v4212, 24
      %v4244 = vpop.permute.xlu0 %4243
      %4246 = vst.msk [vmem:[#allocation2 + $0x8] sm:$0xff] %vm2367, %v4244
      %v4247 = vld [vmem:[#allocation2] sm:$0xff]
      %v4248 = vld [vmem:[#allocation2 + $0x8] sm:$0xff]
      %v4250 = vlaneseq
      %v4251 = vshrl.u32 %v4250, 7
      %v4252 = vsub.s32 0, %v4251
      %v4253 = vrot.slane %v2851, %v4252
      %v4256 = vsel %vm848, %v4247, 0
      %v4259 = vsel %vm848, %v4248, 0
      %4261 = vmatprep.subr.mxu0 0.0
      %4262 = vmatpush1.msra.mxu0 0.0
      %4263 = vmatprep.subr.mxu0 0.0
      %4264 = vmatpush1.msra.mxu0 0.0
      %4265 = vmatprep.subr.mxu0 0.0
      %4266 = vmatpush1.msra.mxu0 0.0
      %4267 = vmatprep.subr.mxu0 0.0
      %4268 = vmatpush1.msra.mxu0 0.0
      %4269 = vmatprep.subr.mxu0 0.0
      %4270 = vmatpush1.msra.mxu0 0.0
      %4271 = vmatprep.subr.mxu0 0.0
      %4272 = vmatpush1.msra.mxu0 0.0
      %4273 = vmatprep.subr.mxu0 0.0
      %4274 = vmatpush1.msra.mxu0 0.0
      %4275 = vmatprep.subr.mxu0 0.0
      %4276 = vmatpush1.msra.mxu0 0.0
      %4277 = vmatprep.subr.mxu0 0.0
      %4278 = vmatpush1.msra.mxu0 0.0
      %4279 = vmatprep.subr.mxu0 0.0
      %4280 = vmatpush1.msra.mxu0 0.0
      %4281 = vmatprep.subr.mxu0 0.0
      %4282 = vmatpush1.msra.mxu0 0.0
      %4283 = vmatprep.subr.mxu0 0.0
      %4284 = vmatpush1.msra.mxu0 0.0
      %4285 = vmatprep.subr.mxu0 0.0
      %4286 = vmatpush1.msra.mxu0 %v2850
      %4287 = vmatprep.subr.mxu0 0.0
      %4288 = vmatpush1.msra.mxu0 %v2849
      %4289 = vmatprep.subr.mxu0 0.0
      %4290 = vmatpush1.msra.mxu0 %v2848
      %4291 = vmatprep.subr.mxu0 0.0
      %4292 = vmatpush1.msra.mxu0 %v2847
      %4293 = vmatprep.subr.mxu0 0.0
      %4294 = vmatpush2.msra.mxu0 0.0
      %4295 = vmatprep.subr.mxu0 0.0
      %4296 = vmatpush2.msra.mxu0 0.0
      %4297 = vmatprep.subr.mxu0 0.0
      %4298 = vmatpush2.msra.mxu0 0.0
      %4299 = vmatprep.subr.mxu0 0.0
      %4300 = vmatpush2.msra.mxu0 0.0
      %4301 = vmatprep.subr.mxu0 0.0
      %4302 = vmatpush2.msra.mxu0 0.0
      %4303 = vmatprep.subr.mxu0 0.0
      %4304 = vmatpush2.msra.mxu0 0.0
      %4305 = vmatprep.subr.mxu0 0.0
      %4306 = vmatpush2.msra.mxu0 0.0
      %4307 = vmatprep.subr.mxu0 0.0
      %4308 = vmatpush2.msra.mxu0 0.0
      %4309 = vmatprep.subr.mxu0 0.0
      %4310 = vmatpush2.msra.mxu0 0.0
      %4311 = vmatprep.subr.mxu0 0.0
      %4312 = vmatpush2.msra.mxu0 0.0
      %4313 = vmatprep.subr.mxu0 0.0
      %4314 = vmatpush2.msra.mxu0 0.0
      %4315 = vmatprep.subr.mxu0 0.0
      %4316 = vmatpush2.msra.mxu0 0.0
      %4317 = vmatprep.subr.mxu0 0.0
      %4318 = vmatpush2.msra.mxu0 0.0
      %4319 = vmatprep.subr.mxu0 0.0
      %4320 = vmatpush2.msra.mxu0 0.0
      %4321 = vmatprep.subr.mxu0 0.0
      %4322 = vmatpush2.msra.mxu0 0.0
      %4323 = vmatprep.subr.mxu0 0.0
      %4324 = vmatpush2.msra.mxu0 0.0
      %4325 = vmatprep.mubr.f32.mxu0 0.0
      %4326 = vmatmul.mubr.f32.gmra.mxu0 %v4256
      %v4327 = vpop.f32.mrf.mxu0
      %v4328 = vadd.f32 %v4253, %v4327
      %v4329 = vpop.f32.mrf.mxu0
      %4330 = vmatprep.mubr.f32.mxu0 0.0
      %4331 = vmatmul.mubr.f32.gmra.mxu0 %v4259
      %v4332 = vpop.f32.mrf.mxu0
      %v4333 = vadd.f32 %v4253, %v4332
      %v4334 = vpop.f32.mrf.mxu0
      %4335 = vdwg.mxu0
      %v4336 = vadd.f32 %v2519, %v4328
      %v4337 = vadd.f32 %v2520, %v4333
      %v4338 = vsel %vm848, %v4336, 0.0
      %4339 = vadd.xlane.f32.xlu0 %v4338
      %v4340 = vpop.xlane.xlu0 %4339
      %v4341 = vsel %vm848, %v4337, 0.0
      %4342 = vadd.xlane.f32.xlu0 %v4341
      %v4343 = vpop.xlane.xlu0 %4342
      %v4344 = vmul.f32 %v4340, %v2482
      %v4345 = vmul.f32 %v4343, %v2482
      %v4346 = vsub.f32 %v4336, %v4344
      %v4347 = vsub.f32 %v4337, %v4345
      %v4348 = vmul.f32 %v4346, %v4346
      %v4349 = vmul.f32 %v4347, %v4347
      %v4350 = vsel %vm848, %v4348, 0.0
      %4351 = vadd.xlane.f32.xlu0 %v4350
      %v4352 = vpop.xlane.xlu0 %4351
      %v4353 = vsel %vm848, %v4349, 0.0
      %4354 = vadd.xlane.f32.xlu0 %v4353
      %v4355 = vpop.xlane.xlu0 %4354
      %v4356 = vmul.f32 %v4352, %v2482
      %v4357 = vmul.f32 %v4355, %v2482
      %v4358 = vadd.f32 %v4356, 1e-05
      %v4359 = vadd.f32 %v4357, 1e-05
      %v4360 = vrsqrt.pop %v4358
      %v4361 = vrsqrt.pop %v4359
      %v4362 = vmul.f32 %v4346, %v4360
      %v4363 = vmul.f32 %v4347, %v4361
      %v4364 = vld [vmem:[%s14] sm:$0x1]
      %v4366 = vlaneseq
      %v4367 = vshrl.u32 %v4366, 7
      %v4368 = vsub.s32 0, %v4367
      %v4369 = vrot.slane %v4364, %v4368
      %v4371 = vmul.f32 %v4362, %v4369
      %v4372 = vmul.f32 %v4363, %v4369
      %v4373 = vld [vmem:[%s15] sm:$0x1]
      %v4375 = vlaneseq
      %v4376 = vshrl.u32 %v4375, 7
      %v4377 = vsub.s32 0, %v4376
      %v4378 = vrot.slane %v4373, %v4377
      %v4380 = vadd.f32 %v4371, %v4378
      %v4381 = vadd.f32 %v4372, %v4378
      %v4382 = vld [vmem:[%s8] sm:$0xff]
      %v4383 = vld [vmem:[%s8 + $0x8] sm:$0xff]
      %v4384 = vld [vmem:[%s8 + $0x10] sm:$0xff]
      %v4385 = vld [vmem:[%s8 + $0x18] sm:$0xff]
      %v4386 = vld [vmem:[%s9] sm:$0x1]
      %v4388 = vlaneseq
      %v4389 = vshrl.u32 %v4388, 7
      %v4390 = vsub.s32 0, %v4389
      %v4391 = vrot.slane %v4386, %v4390
      %v4394 = vsel %vm848, %v4380, 0
      %v4397 = vsel %vm848, %v4381, 0
      %4399 = vmatprep.subr.mxu0 0.0
      %4400 = vmatpush1.msra.mxu0 0.0
      %4401 = vmatprep.subr.mxu0 0.0
      %4402 = vmatpush1.msra.mxu0 0.0
      %4403 = vmatprep.subr.mxu0 0.0
      %4404 = vmatpush1.msra.mxu0 0.0
      %4405 = vmatprep.subr.mxu0 0.0
      %4406 = vmatpush1.msra.mxu0 0.0
      %4407 = vmatprep.subr.mxu0 0.0
      %4408 = vmatpush1.msra.mxu0 0.0
      %4409 = vmatprep.subr.mxu0 0.0
      %4410 = vmatpush1.msra.mxu0 0.0
      %4411 = vmatprep.subr.mxu0 0.0
      %4412 = vmatpush1.msra.mxu0 0.0
      %4413 = vmatprep.subr.mxu0 0.0
      %4414 = vmatpush1.msra.mxu0 0.0
      %4415 = vmatprep.subr.mxu0 0.0
      %4416 = vmatpush1.msra.mxu0 0.0
      %4417 = vmatprep.subr.mxu0 0.0
      %4418 = vmatpush1.msra.mxu0 0.0
      %4419 = vmatprep.subr.mxu0 0.0
      %4420 = vmatpush1.msra.mxu0 0.0
      %4421 = vmatprep.subr.mxu0 0.0
      %4422 = vmatpush1.msra.mxu0 0.0
      %4423 = vmatprep.subr.mxu0 0.0
      %4424 = vmatpush1.msra.mxu0 %v4385
      %4425 = vmatprep.subr.mxu0 0.0
      %4426 = vmatpush1.msra.mxu0 %v4384
      %4427 = vmatprep.subr.mxu0 0.0
      %4428 = vmatpush1.msra.mxu0 %v4383
      %4429 = vmatprep.subr.mxu0 0.0
      %4430 = vmatpush1.msra.mxu0 %v4382
      %4431 = vmatprep.subr.mxu0 0.0
      %4432 = vmatpush2.msra.mxu0 0.0
      %4433 = vmatprep.subr.mxu0 0.0
      %4434 = vmatpush2.msra.mxu0 0.0
      %4435 = vmatprep.subr.mxu0 0.0
      %4436 = vmatpush2.msra.mxu0 0.0
      %4437 = vmatprep.subr.mxu0 0.0
      %4438 = vmatpush2.msra.mxu0 0.0
      %4439 = vmatprep.subr.mxu0 0.0
      %4440 = vmatpush2.msra.mxu0 0.0
      %4441 = vmatprep.subr.mxu0 0.0
      %4442 = vmatpush2.msra.mxu0 0.0
      %4443 = vmatprep.subr.mxu0 0.0
      %4444 = vmatpush2.msra.mxu0 0.0
      %4445 = vmatprep.subr.mxu0 0.0
      %4446 = vmatpush2.msra.mxu0 0.0
      %4447 = vmatprep.subr.mxu0 0.0
      %4448 = vmatpush2.msra.mxu0 0.0
      %4449 = vmatprep.subr.mxu0 0.0
      %4450 = vmatpush2.msra.mxu0 0.0
      %4451 = vmatprep.subr.mxu0 0.0
      %4452 = vmatpush2.msra.mxu0 0.0
      %4453 = vmatprep.subr.mxu0 0.0
      %4454 = vmatpush2.msra.mxu0 0.0
      %4455 = vmatprep.subr.mxu0 0.0
      %4456 = vmatpush2.msra.mxu0 0.0
      %4457 = vmatprep.subr.mxu0 0.0
      %4458 = vmatpush2.msra.mxu0 0.0
      %4459 = vmatprep.subr.mxu0 0.0
      %4460 = vmatpush2.msra.mxu0 0.0
      %4461 = vmatprep.subr.mxu0 0.0
      %4462 = vmatpush2.msra.mxu0 0.0
      %4463 = vmatprep.mubr.f32.mxu0 0.0
      %4464 = vmatmul.mubr.f32.gmra.mxu0 %v4394
      %v4465 = vpop.f32.mrf.mxu0
      %v4466 = vadd.f32 %v4391, %v4465
      %v4467 = vpop.f32.mrf.mxu0
      %4468 = vmatprep.mubr.f32.mxu0 0.0
      %4469 = vmatmul.mubr.f32.gmra.mxu0 %v4397
      %v4470 = vpop.f32.mrf.mxu0
      %v4471 = vadd.f32 %v4391, %v4470
      %v4472 = vpop.f32.mrf.mxu0
      %4473 = vdwg.mxu0
      %v4474 = vmax.f32 %v4466, 0.0
      %v4475 = vmax.f32 %v4471, 0.0
      %v4476 = vld [vmem:[%s10] sm:$0xff]
      %v4477 = vld [vmem:[%s10 + $0x8] sm:$0xff]
      %v4478 = vld [vmem:[%s10 + $0x10] sm:$0xff]
      %v4479 = vld [vmem:[%s10 + $0x18] sm:$0xff]
      %v4480 = vld [vmem:[%s10 + $0x20] sm:$0xff]
      %v4481 = vld [vmem:[%s10 + $0x28] sm:$0xff]
      %v4482 = vld [vmem:[%s10 + $0x30] sm:$0xff]
      %v4483 = vld [vmem:[%s10 + $0x38] sm:$0xff]
      %v4484 = vld [vmem:[%s11] sm:$0x1]
      %v4486 = vlaneseq
      %v4487 = vshrl.u32 %v4486, 7
      %v4488 = vsub.s32 0, %v4487
      %v4489 = vrot.slane %v4484, %v4488
      %vm4491 = vcmask 523264
      %v4493 = vsel %vm4491, %v4474, 0
      %v4496 = vsel %vm4491, %v4475, 0
      %4498 = vmatprep.subr.mxu0 0.0
      %4499 = vmatpush1.msra.mxu0 0.0
      %4500 = vmatprep.subr.mxu0 0.0
      %4501 = vmatpush1.msra.mxu0 0.0
      %4502 = vmatprep.subr.mxu0 0.0
      %4503 = vmatpush1.msra.mxu0 0.0
      %4504 = vmatprep.subr.mxu0 0.0
      %4505 = vmatpush1.msra.mxu0 0.0
      %4506 = vmatprep.subr.mxu0 0.0
      %4507 = vmatpush1.msra.mxu0 0.0
      %4508 = vmatprep.subr.mxu0 0.0
      %4509 = vmatpush1.msra.mxu0 0.0
      %4510 = vmatprep.subr.mxu0 0.0
      %4511 = vmatpush1.msra.mxu0 0.0
      %4512 = vmatprep.subr.mxu0 0.0
      %4513 = vmatpush1.msra.mxu0 0.0
      %4514 = vmatprep.subr.mxu0 0.0
      %4515 = vmatpush1.msra.mxu0 %v4483
      %4516 = vmatprep.subr.mxu0 0.0
      %4517 = vmatpush1.msra.mxu0 %v4482
      %4518 = vmatprep.subr.mxu0 0.0
      %4519 = vmatpush1.msra.mxu0 %v4481
      %4520 = vmatprep.subr.mxu0 0.0
      %4521 = vmatpush1.msra.mxu0 %v4480
      %4522 = vmatprep.subr.mxu0 0.0
      %4523 = vmatpush1.msra.mxu0 %v4479
      %4524 = vmatprep.subr.mxu0 0.0
      %4525 = vmatpush1.msra.mxu0 %v4478
      %4526 = vmatprep.subr.mxu0 0.0
      %4527 = vmatpush1.msra.mxu0 %v4477
      %4528 = vmatprep.subr.mxu0 0.0
      %4529 = vmatpush1.msra.mxu0 %v4476
      %4530 = vmatprep.subr.mxu0 0.0
      %4531 = vmatpush2.msra.mxu0 0.0
      %4532 = vmatprep.subr.mxu0 0.0
      %4533 = vmatpush2.msra.mxu0 0.0
      %4534 = vmatprep.subr.mxu0 0.0
      %4535 = vmatpush2.msra.mxu0 0.0
      %4536 = vmatprep.subr.mxu0 0.0
      %4537 = vmatpush2.msra.mxu0 0.0
      %4538 = vmatprep.subr.mxu0 0.0
      %4539 = vmatpush2.msra.mxu0 0.0
      %4540 = vmatprep.subr.mxu0 0.0
      %4541 = vmatpush2.msra.mxu0 0.0
      %4542 = vmatprep.subr.mxu0 0.0
      %4543 = vmatpush2.msra.mxu0 0.0
      %4544 = vmatprep.subr.mxu0 0.0
      %4545 = vmatpush2.msra.mxu0 0.0
      %4546 = vmatprep.subr.mxu0 0.0
      %4547 = vmatpush2.msra.mxu0 0.0
      %4548 = vmatprep.subr.mxu0 0.0
      %4549 = vmatpush2.msra.mxu0 0.0
      %4550 = vmatprep.subr.mxu0 0.0
      %4551 = vmatpush2.msra.mxu0 0.0
      %4552 = vmatprep.subr.mxu0 0.0
      %4553 = vmatpush2.msra.mxu0 0.0
      %4554 = vmatprep.subr.mxu0 0.0
      %4555 = vmatpush2.msra.mxu0 0.0
      %4556 = vmatprep.subr.mxu0 0.0
      %4557 = vmatpush2.msra.mxu0 0.0
      %4558 = vmatprep.subr.mxu0 0.0
      %4559 = vmatpush2.msra.mxu0 0.0
      %4560 = vmatprep.subr.mxu0 0.0
      %4561 = vmatpush2.msra.mxu0 0.0
      %4562 = vmatprep.mubr.f32.mxu0 0.0
      %4563 = vmatmul.mubr.f32.gmra.mxu0 %v4493
      %v4564 = vpop.f32.mrf.mxu0
      %v4565 = vadd.f32 %v4489, %v4564
      %v4566 = vpop.f32.mrf.mxu0
      %4567 = vmatprep.mubr.f32.mxu0 0.0
      %4568 = vmatmul.mubr.f32.gmra.mxu0 %v4496
      %v4569 = vpop.f32.mrf.mxu0
      %v4570 = vadd.f32 %v4489, %v4569
      %v4571 = vpop.f32.mrf.mxu0
      %4572 = vdwg.mxu0
      %v4573 = vadd.f32 %v4380, %v4565
      %v4574 = vadd.f32 %v4381, %v4570
      %v4575 = vsel %vm848, %v4573, 0.0
      %4576 = vadd.xlane.f32.xlu0 %v4575
      %v4577 = vpop.xlane.xlu0 %4576
      %v4578 = vsel %vm848, %v4574, 0.0
      %4579 = vadd.xlane.f32.xlu0 %v4578
      %v4580 = vpop.xlane.xlu0 %4579
      %v4581 = vmul.f32 %v4577, %v2482
      %v4582 = vmul.f32 %v4580, %v2482
      %v4583 = vsub.f32 %v4573, %v4581
      %v4584 = vsub.f32 %v4574, %v4582
      %v4585 = vmul.f32 %v4583, %v4583
      %v4586 = vmul.f32 %v4584, %v4584
      %v4587 = vsel %vm848, %v4585, 0.0
      %4588 = vadd.xlane.f32.xlu0 %v4587
      %v4589 = vpop.xlane.xlu0 %4588
      %v4590 = vsel %vm848, %v4586, 0.0
      %4591 = vadd.xlane.f32.xlu0 %v4590
      %v4592 = vpop.xlane.xlu0 %4591
      %v4593 = vmul.f32 %v4589, %v2482
      %v4594 = vmul.f32 %v4592, %v2482
      %v4595 = vadd.f32 %v4593, 1e-05
      %v4596 = vadd.f32 %v4594, 1e-05
      %v4597 = vrsqrt.pop %v4595
      %v4598 = vrsqrt.pop %v4596
      %v4599 = vmul.f32 %v4583, %v4597
      %v4600 = vmul.f32 %v4584, %v4598
      %v4601 = vld [vmem:[%s16] sm:$0x1]
      %v4603 = vlaneseq
      %v4604 = vshrl.u32 %v4603, 7
      %v4605 = vsub.s32 0, %v4604
      %v4606 = vrot.slane %v4601, %v4605
      %v4608 = vmul.f32 %v4599, %v4606
      %v4609 = vmul.f32 %v4600, %v4606
      %v4610 = vld [vmem:[%s17] sm:$0x1]
      %v4612 = vlaneseq
      %v4613 = vshrl.u32 %v4612, 7
      %v4614 = vsub.s32 0, %v4613
      %v4615 = vrot.slane %v4610, %v4614
      %v4617 = vadd.f32 %v4608, %v4615
      %v4618 = vadd.f32 %v4609, %v4615
      %4619 = vst.msk [vmem:[%s757] sm:$0xff] %vm848, %v4617
      %4620 = vst.msk [vmem:[%s757 + $0x8] sm:$0xff] %vm848, %v4618
      %s4621 = smul.u32 2, %s33
      %p4622 = scmp.lt.s32.totalorder %s4621, 3
      %s4623 = scalar_select %p4622, %s4621, 3
      %s4624 = smul.addr %s4623, 8
      %s4625 = scalar_lea.vmem %s22, %s4624
      // Predicated region
      $region109: #{transformer_decoder_layer.2} parent=107 // pred_check
        %p4626 = pneg %p533
      $region110: #{transformer_decoder_layer.2} parent=107 // pred_check_branch
        %4628 = sbr.rel (%p4626) target = $region112
      $region111: #{transformer_decoder_layer.2} parent=107 // pred_region
        %s4629 = smul.u32 2, %s33
      $region112: #{transformer_decoder_layer.2} parent=107 // pred_fallthru
        _
    $region108: #{transformer_decoder_layer.2} parent=5 // pred_fallthru
      _
    %p4630 = scmp.le.s32.totalorder 2, %s28
    // Predicated region
    $region113: #{transformer_decoder_layer.2} parent=5 // pred_check
      %p4631 = pneg %p4630
    $region114: #{transformer_decoder_layer.2} parent=5 // pred_check_branch
      %4633 = sbr.rel (%p4631) target = $region116
    $region115: #{transformer_decoder_layer.2} parent=5 // pred_region
      %s4634 = ssub.s32 %s28, 2
      // Predicated region
      $region117: #{transformer_decoder_layer.2} parent=115 // pred_check
        %p4635 = pneg %p539
      $region118: #{transformer_decoder_layer.2} parent=115 // pred_check_branch
        %4637 = sbr.rel (%p4635) target = $region120
      $region119: #{transformer_decoder_layer.2} parent=115 // pred_region
        %s4638 = smul.u32 2, %s34
        %p4639 = scmp.lt.s32.totalorder %s4638, 3
        %s4640 = scalar_select %p4639, %s4638, 3
        %s4641 = smul.addr %s4640, 8
        %s4642 = scalar_lea.vmem %s22, %s4641
      $region120: #{transformer_decoder_layer.2} parent=115 // pred_fallthru
        _
    $region116: #{transformer_decoder_layer.2} parent=5 // pred_fallthru
      _
  $region6: #{transformer_decoder_layer.2} parent=0 // loop_footer
    %s32 = sadd.s32 1, %s28
  $region7: #{transformer_decoder_layer.2} parent=0 // loop_footer_branch
    %27 = sbr.rel target = $region3
  $region8: #{transformer_decoder_layer.2} parent=0 // loop_exit
    _

</llo_original>
